<compile_context>
chip_gen: v5e
topology: v5e:2x2
jax: 0.10.0
libtpu: 0.0.40
codegen_flags: <defaults>
</compile_context>

<pallas_src>
import functools
import math

import jax
import jax.numpy as jnp
from jax.experimental import pallas as pl
from jax.experimental.pallas import tpu as pltpu

# ---------------- model config (small, synthetic BERT) ----------------
VOCAB = 100
HIDDEN = 128
N_LAYERS = 2
N_HEADS = 2
HEAD_DIM = HIDDEN // N_HEADS
INTERMEDIATE = 256
MAX_POS = 32
TYPE_VOCAB = 2
LN_EPS = 1e-12


def _layer_norm(x, g, b):
    mean = jnp.mean(x, axis=-1, keepdims=True)
    var = jnp.mean((x - mean) ** 2, axis=-1, keepdims=True)
    return (x - mean) * jax.lax.rsqrt(var + LN_EPS) * g + b


def _bf16(x):
    return x.astype(jnp.bfloat16)


# -------- single fused kernel: embeddings + encoder + pooler + classifier --------
def _fused_forward_kernel(
    ids_ref, tt_ref,                          # scalar-prefetch (SMEM): (B, S) int32
    mask_ref,                                 # (TB, 1, S) int32, per batch tile
    wemb_ref, pemb_ref, temb_ref,             # embedding tables, (rows, 1, H) resident
    emb_ln_g_ref, emb_ln_b_ref,               # embedding LayerNorm
    wqkv_ref, bqkv_ref, wo_ref, bo_ref,       # attention weights (stacked over layers)
    wi_ref, bi_ref, wo2_ref, bo2_ref,         # FFN weights (stacked over layers)
    ln1_g_ref, ln1_b_ref, ln2_g_ref, ln2_b_ref,
    wp_ref, bp_ref, wc_ref, bc_ref,           # pooler + classifier
    o_ref,                                    # (1, TB, 1)
    buf_ref,                                  # VMEM scratch (TB*S, H) f32 (reused)
    *, tb, seq,
):
    scale = 1.0 / math.sqrt(HEAD_DIM)
    bt = pl.program_id(0)

    # --- in-kernel embedding gather: word + position + token-type, per token row ---
    for b in range(tb):
        gb = bt * tb + b                      # global sequence index (SMEM lookups)
        for s in range(seq):
            wid = ids_ref[gb, s]
            tid = tt_ref[gb, s]
            r = b * seq + s
            buf_ref[r:r + 1, :] = wemb_ref[wid] + pemb_ref[s] + temb_ref[tid]

    x = _layer_norm(buf_ref[...], emb_ln_g_ref[...], emb_ln_b_ref[...])   # (TB*S, H) f32

    # additive attention mask built in-kernel
    mask_add = (1.0 - mask_ref[...].astype(jnp.float32)) * (-1e9)          # (TB, 1, S)

    # --- transformer layers (static unroll; weights indexed by layer) ---
    for l in range(N_LAYERS):
        x_in = x

        # fused QKV projection: one (TB*S, H) x (H, 3H) matmul (lane-dense N=384)
        qkv = jnp.dot(_bf16(x_in), wqkv_ref[l],
                      preferred_element_type=jnp.float32) + bqkv_ref[l]     # (R, 3H)
        qkv_b = _bf16(qkv)                    # cast once; slice q/k/v heads from this

        # per-sequence (S,S) attention; per-head ctx feeds wo slabs directly (no concat)
        for b in range(tb):
            rows = slice(b * seq, (b + 1) * seq)
            mb = mask_add[b]                                                # (1, S)
            acc_b = None
            for h in range(N_HEADS):
                q_lo = 0 * HIDDEN + h * HEAD_DIM
                k_lo = 1 * HIDDEN + h * HEAD_DIM
                v_lo = 2 * HIDDEN + h * HEAD_DIM
                qh = qkv_b[rows, q_lo:q_lo + HEAD_DIM]                      # (S, D) bf16
                kh = qkv_b[rows, k_lo:k_lo + HEAD_DIM]
                vh = qkv_b[rows, v_lo:v_lo + HEAD_DIM]
                scores = jax.lax.dot_general(
                    qh, kh, (((1,), (1,)), ((), ())),
                    preferred_element_type=jnp.float32) * scale + mb        # (S, S)
                smax = jnp.max(scores, axis=-1, keepdims=True)
                p = jnp.exp(scores - smax)
                denom = jnp.sum(p, axis=-1, keepdims=True)
                # denom >= 1 even for fully-masked rows (row max subtracted), so the
                # approximate reciprocal cannot blow up.
                p = p * pl.reciprocal(denom, approx=True)
                ctx = jnp.dot(_bf16(p), vh,
                              preferred_element_type=jnp.float32)           # (S, D)
                contrib = jnp.dot(
                    _bf16(ctx), wo_ref[l, h * HEAD_DIM:(h + 1) * HEAD_DIM, :],
                    preferred_element_type=jnp.float32)                     # (S, H)
                acc_b = contrib if acc_b is None else acc_b + contrib
            buf_ref[rows, :] = acc_b          # assemble per-sequence attention output

        attn_out = buf_ref[...] + bo_ref[l]                                 # (R, H)
        x = _layer_norm(attn_out + x_in, ln1_g_ref[l], ln1_b_ref[l])

        # FFN: dense -> gelu -> dense, + residual + LayerNorm (fused epilogue)
        inter = jnp.dot(_bf16(x), wi_ref[l],
                        preferred_element_type=jnp.float32) + bi_ref[l]
        inter = jax.nn.gelu(inter, approximate=True)  # TODO(synk): exact erf GELU to match HF BERT exactly
        ffn_out = jnp.dot(_bf16(inter), wo2_ref[l],
                          preferred_element_type=jnp.float32) + bo2_ref[l]
        x = _layer_norm(ffn_out + x, ln2_g_ref[l], ln2_b_ref[l])

    # --- pooler (tanh on [CLS] row of every sequence) + classifier + sigmoid ---
    cls = jnp.concatenate([x[b * seq:b * seq + 1, :] for b in range(tb)], axis=0)  # (TB, H)
    pooled = jnp.tanh(jnp.dot(_bf16(cls), wp_ref[...],
                              preferred_element_type=jnp.float32) + bp_ref[...])
    logit = jnp.dot(_bf16(pooled), wc_ref[...],
                    preferred_element_type=jnp.float32) + bc_ref[...]              # (TB, 1)
    o_ref[0] = jax.nn.sigmoid(logit)


def _rep_spec(shape):
    # full-array block, same block every grid step => weight stays resident in VMEM.
    # (Constant index_map -> single-buffer candidate if VMEM ever becomes tight.)
    zeros = (0,) * len(shape)
    return pl.BlockSpec(tuple(shape), lambda *_: zeros)


def _pick_batch_tile(batch, seq, target_rows=256):
    # Pick TB dividing the batch so TB*seq approaches the MXU row count (<=256).
    tb = max(1, min(batch, target_rows // seq))
    while batch % tb != 0:
        tb -= 1
    return tb


# ---------------- parameter construction (deterministic) ----------------
def init_params(key):
    k = jax.random.split(key, 9)

    def nrm(kk, shape):
        return 0.02 * jax.random.normal(kk, shape, dtype=jnp.float32)

    return {
        # embedding tables stored as (rows, 1, H): dynamic row gather uses the leading
        # (untiled) axis inside the kernel.
        "word_emb": nrm(k[0], (VOCAB, 1, HIDDEN)),
        "pos_emb": nrm(k[1], (MAX_POS, 1, HIDDEN)),
        "type_emb": nrm(k[2], (TYPE_VOCAB, 1, HIDDEN)),
        "emb_ln_g": jnp.ones((1, HIDDEN), jnp.float32),
        "emb_ln_b": jnp.zeros((1, HIDDEN), jnp.float32),
        # fused QKV projection weight: (L, H, 3H) so the MXU sees N=384; stored bf16.
        "wqkv": nrm(k[3], (N_LAYERS, HIDDEN, 3 * HIDDEN)).astype(jnp.bfloat16),
        "bqkv": jnp.zeros((N_LAYERS, 1, 3 * HIDDEN), jnp.float32),
        "wo": nrm(k[4], (N_LAYERS, HIDDEN, HIDDEN)).astype(jnp.bfloat16),
        "bo": jnp.zeros((N_LAYERS, 1, HIDDEN), jnp.float32),
        "wi": nrm(k[5], (N_LAYERS, HIDDEN, INTERMEDIATE)).astype(jnp.bfloat16),
        "bi": jnp.zeros((N_LAYERS, 1, INTERMEDIATE), jnp.float32),
        "wo2": nrm(k[6], (N_LAYERS, INTERMEDIATE, HIDDEN)).astype(jnp.bfloat16),
        "bo2": jnp.zeros((N_LAYERS, 1, HIDDEN), jnp.float32),
        "ln1_g": jnp.ones((N_LAYERS, 1, HIDDEN), jnp.float32),
        "ln1_b": jnp.zeros((N_LAYERS, 1, HIDDEN), jnp.float32),
        "ln2_g": jnp.ones((N_LAYERS, 1, HIDDEN), jnp.float32),
        "ln2_b": jnp.zeros((N_LAYERS, 1, HIDDEN), jnp.float32),
        "wp": nrm(k[7], (HIDDEN, HIDDEN)).astype(jnp.bfloat16),
        "bp": jnp.zeros((1, HIDDEN), jnp.float32),
        "wc": nrm(k[8], (HIDDEN, 1)).astype(jnp.bfloat16),
        "bc": jnp.zeros((1, 1), jnp.float32),
    }


# ---------------- forward pass: Sentiment_cla.forward ----------------
def sentiment_cla_forward(params, input_ids, token_type_ids, attention_mask):
    B, S = input_ids.shape
    TB = _pick_batch_tile(B, S)
    num_bt = B // TB

    # mask passed as raw int32 (B,1,S); additive mask is built inside the kernel.
    mask3 = attention_mask.astype(jnp.int32).reshape(B, 1, S)

    weight_args = [
        params["word_emb"], params["pos_emb"], params["type_emb"],
        params["emb_ln_g"], params["emb_ln_b"],
        params["wqkv"], params["bqkv"], params["wo"], params["bo"],
        params["wi"], params["bi"], params["wo2"], params["bo2"],
        params["ln1_g"], params["ln1_b"], params["ln2_g"], params["ln2_b"],
        params["wp"], params["bp"], params["wc"], params["bc"],
    ]

    in_specs = (
        [pl.BlockSpec((TB, 1, S), lambda g, *_: (g, 0, 0))]   # attention mask, per tile
        + [_rep_spec(w.shape) for w in weight_args]           # tables/weights resident
    )

    grid_spec = pltpu.PrefetchScalarGridSpec(
        num_scalar_prefetch=2,                                # input_ids, token_type_ids
        grid=(num_bt,),
        in_specs=in_specs,
        out_specs=pl.BlockSpec((1, TB, 1), lambda g, *_: (g, 0, 0)),
        scratch_shapes=[pltpu.VMEM((TB * S, HIDDEN), jnp.float32)],
    )

    probs = pl.pallas_call(
        functools.partial(_fused_forward_kernel, tb=TB, seq=S),
        out_shape=jax.ShapeDtypeStruct((num_bt, TB, 1), jnp.float32),
        grid_spec=grid_spec,
        compiler_params=pltpu.CompilerParams(
            dimension_semantics=("parallel",)),   # batch-tile axis (megacore on v7x when num_bt > 1)
    )(input_ids.astype(jnp.int32), token_type_ids.astype(jnp.int32),
      mask3, *weight_args)

    return probs.reshape(B, 1)


if __name__ == "__main__":
    B, S = 2, 16
    key = jax.random.PRNGKey(0)
    k_par, k_ids, k_typ = jax.random.split(key, 3)

    params = init_params(k_par)
    input_ids = jax.random.randint(k_ids, (B, S), 0, VOCAB, dtype=jnp.int32)
    token_type_ids = jax.random.randint(k_typ, (B, S), 0, TYPE_VOCAB, dtype=jnp.int32)
    # second sequence has 4 padding positions to exercise the attention mask
    attention_mask = jnp.array([[1] * S, [1] * (S - 4) + [0] * 4], dtype=jnp.int32)

    fwd = jax.jit(sentiment_cla_forward)
    probs = fwd(params, input_ids, token_type_ids, attention_mask)
    jax.block_until_ready(probs)
    assert probs.shape == (B, 1)
    assert bool(jnp.all((probs >= 0.0) & (probs <= 1.0)))
    print("KERNEL_OK")
</pallas_src>

<mosaic_0001>
module attributes {stable_mosaic.version = 11 : i64} {
  func.func @_fused_forward_kernel(%arg0: i32, %arg1: memref<2x16xi32, #tpu.memory_space<smem>>, %arg2: memref<2x16xi32, #tpu.memory_space<smem>>, %arg3: memref<2x1x16xi32, #tpu.memory_space<vmem>>, %arg4: memref<100x1x128xf32, #tpu.memory_space<vmem>>, %arg5: memref<32x1x128xf32, #tpu.memory_space<vmem>>, %arg6: memref<2x1x128xf32, #tpu.memory_space<vmem>>, %arg7: memref<1x128xf32, #tpu.memory_space<vmem>>, %arg8: memref<1x128xf32, #tpu.memory_space<vmem>>, %arg9: memref<2x128x384xbf16, #tpu.memory_space<vmem>>, %arg10: memref<2x1x384xf32, #tpu.memory_space<vmem>>, %arg11: memref<2x128x128xbf16, #tpu.memory_space<vmem>>, %arg12: memref<2x1x128xf32, #tpu.memory_space<vmem>>, %arg13: memref<2x128x256xbf16, #tpu.memory_space<vmem>>, %arg14: memref<2x1x256xf32, #tpu.memory_space<vmem>>, %arg15: memref<2x256x128xbf16, #tpu.memory_space<vmem>>, %arg16: memref<2x1x128xf32, #tpu.memory_space<vmem>>, %arg17: memref<2x1x128xf32, #tpu.memory_space<vmem>>, %arg18: memref<2x1x128xf32, #tpu.memory_space<vmem>>, %arg19: memref<2x1x128xf32, #tpu.memory_space<vmem>>, %arg20: memref<2x1x128xf32, #tpu.memory_space<vmem>>, %arg21: memref<128x128xbf16, #tpu.memory_space<vmem>>, %arg22: memref<1x128xf32, #tpu.memory_space<vmem>>, %arg23: memref<128x1xbf16, #tpu.memory_space<vmem>>, %arg24: memref<1x1xf32, #tpu.memory_space<vmem>>, %arg25: memref<1x2x1xf32, #tpu.memory_space<vmem>>, %arg26: memref<32x128xf32, #tpu.memory_space<vmem>>) attributes {dimension_semantics = [#tpu.dimension_semantics<parallel>], iteration_bounds = array<i64: 1>, scalar_prefetch = 2 : i64, scratch_operands = 1 : i64, tpu.core_type = #tpu.core_type<tc>, window_params = [{transform_indices = @transform_0, window_bounds = array<i64: 2, 1, 16>}, {pipeline_mode = #tpu.pipeline_mode<synchronous>, transform_indices = @transform_1, window_bounds = array<i64: 100, 1, 128>}, {pipeline_mode = #tpu.pipeline_mode<synchronous>, transform_indices = @transform_2, window_bounds = array<i64: 32, 1, 128>}, {pipeline_mode = #tpu.pipeline_mode<synchronous>, transform_indices = @transform_3, window_bounds = array<i64: 2, 1, 128>}, {pipeline_mode = #tpu.pipeline_mode<synchronous>, transform_indices = @transform_4, window_bounds = array<i64: 1, 128>}, {pipeline_mode = #tpu.pipeline_mode<synchronous>, transform_indices = @transform_5, window_bounds = array<i64: 1, 128>}, {pipeline_mode = #tpu.pipeline_mode<synchronous>, transform_indices = @transform_6, window_bounds = array<i64: 2, 128, 384>}, {pipeline_mode = #tpu.pipeline_mode<synchronous>, transform_indices = @transform_7, window_bounds = array<i64: 2, 1, 384>}, {pipeline_mode = #tpu.pipeline_mode<synchronous>, transform_indices = @transform_8, window_bounds = array<i64: 2, 128, 128>}, {pipeline_mode = #tpu.pipeline_mode<synchronous>, transform_indices = @transform_9, window_bounds = array<i64: 2, 1, 128>}, {pipeline_mode = #tpu.pipeline_mode<synchronous>, transform_indices = @transform_10, window_bounds = array<i64: 2, 128, 256>}, {pipeline_mode = #tpu.pipeline_mode<synchronous>, transform_indices = @transform_11, window_bounds = array<i64: 2, 1, 256>}, {pipeline_mode = #tpu.pipeline_mode<synchronous>, transform_indices = @transform_12, window_bounds = array<i64: 2, 256, 128>}, {pipeline_mode = #tpu.pipeline_mode<synchronous>, transform_indices = @transform_13, window_bounds = array<i64: 2, 1, 128>}, {pipeline_mode = #tpu.pipeline_mode<synchronous>, transform_indices = @transform_14, window_bounds = array<i64: 2, 1, 128>}, {pipeline_mode = #tpu.pipeline_mode<synchronous>, transform_indices = @transform_15, window_bounds = array<i64: 2, 1, 128>}, {pipeline_mode = #tpu.pipeline_mode<synchronous>, transform_indices = @transform_16, window_bounds = array<i64: 2, 1, 128>}, {pipeline_mode = #tpu.pipeline_mode<synchronous>, transform_indices = @transform_17, window_bounds = array<i64: 2, 1, 128>}, {pipeline_mode = #tpu.pipeline_mode<synchronous>, transform_indices = @transform_18, window_bounds = array<i64: 128, 128>}, {pipeline_mode = #tpu.pipeline_mode<synchronous>, transform_indices = @transform_19, window_bounds = array<i64: 1, 128>}, {pipeline_mode = #tpu.pipeline_mode<synchronous>, transform_indices = @transform_20, window_bounds = array<i64: 128, 1>}, {pipeline_mode = #tpu.pipeline_mode<synchronous>, transform_indices = @transform_21, window_bounds = array<i64: 1, 1>}, {transform_indices = @transform_22, window_bounds = array<i64: 1, 2, 1>}]} {
    %c2_i32 = arith.constant 2 : i32
    %0 = arith.muli %arg0, %c2_i32 : i32
    %c0_i32 = arith.constant 0 : i32
    %1 = arith.addi %0, %c0_i32 : i32
    %2 = arith.index_cast %1 : i32 to index
    %c0 = arith.constant 0 : index
    %3 = memref.load %arg1[%2, %c0] : memref<2x16xi32, #tpu.memory_space<smem>>
    %4 = arith.index_cast %1 : i32 to index
    %c0_0 = arith.constant 0 : index
    %5 = memref.load %arg2[%4, %c0_0] : memref<2x16xi32, #tpu.memory_space<smem>>
    %6 = arith.index_cast %3 : i32 to index
    %c0_1 = arith.constant 0 : index
    %c0_2 = arith.constant 0 : index
    %7 = vector.load %arg4[%6, %c0_1, %c0_2] : memref<100x1x128xf32, #tpu.memory_space<vmem>>, vector<1x1x128xf32>
    %8 = vector.shape_cast %7 : vector<1x1x128xf32> to vector<1x128xf32>
    %c0_3 = arith.constant 0 : index
    %c0_4 = arith.constant 0 : index
    %c0_5 = arith.constant 0 : index
    %9 = vector.load %arg5[%c0_3, %c0_4, %c0_5] : memref<32x1x128xf32, #tpu.memory_space<vmem>>, vector<1x1x128xf32>
    %10 = vector.shape_cast %9 : vector<1x1x128xf32> to vector<1x128xf32>
    %11 = arith.addf %8, %10 : vector<1x128xf32>
    %12 = arith.index_cast %5 : i32 to index
    %c0_6 = arith.constant 0 : index
    %c0_7 = arith.constant 0 : index
    %13 = vector.load %arg6[%12, %c0_6, %c0_7] : memref<2x1x128xf32, #tpu.memory_space<vmem>>, vector<1x1x128xf32>
    %14 = vector.shape_cast %13 : vector<1x1x128xf32> to vector<1x128xf32>
    %15 = arith.addf %11, %14 : vector<1x128xf32>
    %c0_8 = arith.constant 0 : index
    %c0_9 = arith.constant 0 : index
    %16 = vector.load %arg26[%c0_8, %c0_9] : memref<32x128xf32, #tpu.memory_space<vmem>>, vector<1x128xf32>
    tpu.vector_store %arg26[%c0_8, %c0_9], %15 {strides = array<i32>} : memref<32x128xf32, #tpu.memory_space<vmem>>, vector<1x128xf32>,
    %17 = arith.index_cast %1 : i32 to index
    %c1 = arith.constant 1 : index
    %18 = memref.load %arg1[%17, %c1] : memref<2x16xi32, #tpu.memory_space<smem>>
    %19 = arith.index_cast %1 : i32 to index
    %c1_10 = arith.constant 1 : index
    %20 = memref.load %arg2[%19, %c1_10] : memref<2x16xi32, #tpu.memory_space<smem>>
    %21 = arith.index_cast %18 : i32 to index
    %c0_11 = arith.constant 0 : index
    %c0_12 = arith.constant 0 : index
    %22 = vector.load %arg4[%21, %c0_11, %c0_12] : memref<100x1x128xf32, #tpu.memory_space<vmem>>, vector<1x1x128xf32>
    %23 = vector.shape_cast %22 : vector<1x1x128xf32> to vector<1x128xf32>
    %c1_13 = arith.constant 1 : index
    %c0_14 = arith.constant 0 : index
    %c0_15 = arith.constant 0 : index
    %24 = vector.load %arg5[%c1_13, %c0_14, %c0_15] : memref<32x1x128xf32, #tpu.memory_space<vmem>>, vector<1x1x128xf32>
    %25 = vector.shape_cast %24 : vector<1x1x128xf32> to vector<1x128xf32>
    %26 = arith.addf %23, %25 : vector<1x128xf32>
    %27 = arith.index_cast %20 : i32 to index
    %c0_16 = arith.constant 0 : index
    %c0_17 = arith.constant 0 : index
    %28 = vector.load %arg6[%27, %c0_16, %c0_17] : memref<2x1x128xf32, #tpu.memory_space<vmem>>, vector<1x1x128xf32>
    %29 = vector.shape_cast %28 : vector<1x1x128xf32> to vector<1x128xf32>
    %30 = arith.addf %26, %29 : vector<1x128xf32>
    %c1_18 = arith.constant 1 : index
    %c0_19 = arith.constant 0 : index
    %31 = vector.load %arg26[%c1_18, %c0_19] : memref<32x128xf32, #tpu.memory_space<vmem>>, vector<1x128xf32>
    tpu.vector_store %arg26[%c1_18, %c0_19], %30 {strides = array<i32>} : memref<32x128xf32, #tpu.memory_space<vmem>>, vector<1x128xf32>,
    %32 = arith.index_cast %1 : i32 to index
    %c2 = arith.constant 2 : index
    %33 = memref.load %arg1[%32, %c2] : memref<2x16xi32, #tpu.memory_space<smem>>
    %34 = arith.index_cast %1 : i32 to index
    %c2_20 = arith.constant 2 : index
    %35 = memref.load %arg2[%34, %c2_20] : memref<2x16xi32, #tpu.memory_space<smem>>
    %36 = arith.index_cast %33 : i32 to index
    %c0_21 = arith.constant 0 : index
    %c0_22 = arith.constant 0 : index
    %37 = vector.load %arg4[%36, %c0_21, %c0_22] : memref<100x1x128xf32, #tpu.memory_space<vmem>>, vector<1x1x128xf32>
    %38 = vector.shape_cast %37 : vector<1x1x128xf32> to vector<1x128xf32>
    %c2_23 = arith.constant 2 : index
    %c0_24 = arith.constant 0 : index
    %c0_25 = arith.constant 0 : index
    %39 = vector.load %arg5[%c2_23, %c0_24, %c0_25] : memref<32x1x128xf32, #tpu.memory_space<vmem>>, vector<1x1x128xf32>
    %40 = vector.shape_cast %39 : vector<1x1x128xf32> to vector<1x128xf32>
    %41 = arith.addf %38, %40 : vector<1x128xf32>
    %42 = arith.index_cast %35 : i32 to index
    %c0_26 = arith.constant 0 : index
    %c0_27 = arith.constant 0 : index
    %43 = vector.load %arg6[%42, %c0_26, %c0_27] : memref<2x1x128xf32, #tpu.memory_space<vmem>>, vector<1x1x128xf32>
    %44 = vector.shape_cast %43 : vector<1x1x128xf32> to vector<1x128xf32>
    %45 = arith.addf %41, %44 : vector<1x128xf32>
    %c2_28 = arith.constant 2 : index
    %c0_29 = arith.constant 0 : index
    %46 = vector.load %arg26[%c2_28, %c0_29] : memref<32x128xf32, #tpu.memory_space<vmem>>, vector<1x128xf32>
    tpu.vector_store %arg26[%c2_28, %c0_29], %45 {strides = array<i32>} : memref<32x128xf32, #tpu.memory_space<vmem>>, vector<1x128xf32>,
    %47 = arith.index_cast %1 : i32 to index
    %c3 = arith.constant 3 : index
    %48 = memref.load %arg1[%47, %c3] : memref<2x16xi32, #tpu.memory_space<smem>>
    %49 = arith.index_cast %1 : i32 to index
    %c3_30 = arith.constant 3 : index
    %50 = memref.load %arg2[%49, %c3_30] : memref<2x16xi32, #tpu.memory_space<smem>>
    %51 = arith.index_cast %48 : i32 to index
    %c0_31 = arith.constant 0 : index
    %c0_32 = arith.constant 0 : index
    %52 = vector.load %arg4[%51, %c0_31, %c0_32] : memref<100x1x128xf32, #tpu.memory_space<vmem>>, vector<1x1x128xf32>
    %53 = vector.shape_cast %52 : vector<1x1x128xf32> to vector<1x128xf32>
    %c3_33 = arith.constant 3 : index
    %c0_34 = arith.constant 0 : index
    %c0_35 = arith.constant 0 : index
    %54 = vector.load %arg5[%c3_33, %c0_34, %c0_35] : memref<32x1x128xf32, #tpu.memory_space<vmem>>, vector<1x1x128xf32>
    %55 = vector.shape_cast %54 : vector<1x1x128xf32> to vector<1x128xf32>
    %56 = arith.addf %53, %55 : vector<1x128xf32>
    %57 = arith.index_cast %50 : i32 to index
    %c0_36 = arith.constant 0 : index
    %c0_37 = arith.constant 0 : index
    %58 = vector.load %arg6[%57, %c0_36, %c0_37] : memref<2x1x128xf32, #tpu.memory_space<vmem>>, vector<1x1x128xf32>
    %59 = vector.shape_cast %58 : vector<1x1x128xf32> to vector<1x128xf32>
    %60 = arith.addf %56, %59 : vector<1x128xf32>
    %c3_38 = arith.constant 3 : index
    %c0_39 = arith.constant 0 : index
    %61 = vector.load %arg26[%c3_38, %c0_39] : memref<32x128xf32, #tpu.memory_space<vmem>>, vector<1x128xf32>
    tpu.vector_store %arg26[%c3_38, %c0_39], %60 {strides = array<i32>} : memref<32x128xf32, #tpu.memory_space<vmem>>, vector<1x128xf32>,
    %62 = arith.index_cast %1 : i32 to index
    %c4 = arith.constant 4 : index
    %63 = memref.load %arg1[%62, %c4] : memref<2x16xi32, #tpu.memory_space<smem>>
    %64 = arith.index_cast %1 : i32 to index
    %c4_40 = arith.constant 4 : index
    %65 = memref.load %arg2[%64, %c4_40] : memref<2x16xi32, #tpu.memory_space<smem>>
    %66 = arith.index_cast %63 : i32 to index
    %c0_41 = arith.constant 0 : index
    %c0_42 = arith.constant 0 : index
    %67 = vector.load %arg4[%66, %c0_41, %c0_42] : memref<100x1x128xf32, #tpu.memory_space<vmem>>, vector<1x1x128xf32>
    %68 = vector.shape_cast %67 : vector<1x1x128xf32> to vector<1x128xf32>
    %c4_43 = arith.constant 4 : index
    %c0_44 = arith.constant 0 : index
    %c0_45 = arith.constant 0 : index
    %69 = vector.load %arg5[%c4_43, %c0_44, %c0_45] : memref<32x1x128xf32, #tpu.memory_space<vmem>>, vector<1x1x128xf32>
    %70 = vector.shape_cast %69 : vector<1x1x128xf32> to vector<1x128xf32>
    %71 = arith.addf %68, %70 : vector<1x128xf32>
    %72 = arith.index_cast %65 : i32 to index
    %c0_46 = arith.constant 0 : index
    %c0_47 = arith.constant 0 : index
    %73 = vector.load %arg6[%72, %c0_46, %c0_47] : memref<2x1x128xf32, #tpu.memory_space<vmem>>, vector<1x1x128xf32>
    %74 = vector.shape_cast %73 : vector<1x1x128xf32> to vector<1x128xf32>
    %75 = arith.addf %71, %74 : vector<1x128xf32>
    %c4_48 = arith.constant 4 : index
    %c0_49 = arith.constant 0 : index
    %76 = vector.load %arg26[%c4_48, %c0_49] : memref<32x128xf32, #tpu.memory_space<vmem>>, vector<1x128xf32>
    tpu.vector_store %arg26[%c4_48, %c0_49], %75 {strides = array<i32>} : memref<32x128xf32, #tpu.memory_space<vmem>>, vector<1x128xf32>,
    %77 = arith.index_cast %1 : i32 to index
    %c5 = arith.constant 5 : index
    %78 = memref.load %arg1[%77, %c5] : memref<2x16xi32, #tpu.memory_space<smem>>
    %79 = arith.index_cast %1 : i32 to index
    %c5_50 = arith.constant 5 : index
    %80 = memref.load %arg2[%79, %c5_50] : memref<2x16xi32, #tpu.memory_space<smem>>
    %81 = arith.index_cast %78 : i32 to index
    %c0_51 = arith.constant 0 : index
    %c0_52 = arith.constant 0 : index
    %82 = vector.load %arg4[%81, %c0_51, %c0_52] : memref<100x1x128xf32, #tpu.memory_space<vmem>>, vector<1x1x128xf32>
    %83 = vector.shape_cast %82 : vector<1x1x128xf32> to vector<1x128xf32>
    %c5_53 = arith.constant 5 : index
    %c0_54 = arith.constant 0 : index
    %c0_55 = arith.constant 0 : index
    %84 = vector.load %arg5[%c5_53, %c0_54, %c0_55] : memref<32x1x128xf32, #tpu.memory_space<vmem>>, vector<1x1x128xf32>
    %85 = vector.shape_cast %84 : vector<1x1x128xf32> to vector<1x128xf32>
    %86 = arith.addf %83, %85 : vector<1x128xf32>
    %87 = arith.index_cast %80 : i32 to index
    %c0_56 = arith.constant 0 : index
    %c0_57 = arith.constant 0 : index
    %88 = vector.load %arg6[%87, %c0_56, %c0_57] : memref<2x1x128xf32, #tpu.memory_space<vmem>>, vector<1x1x128xf32>
    %89 = vector.shape_cast %88 : vector<1x1x128xf32> to vector<1x128xf32>
    %90 = arith.addf %86, %89 : vector<1x128xf32>
    %c5_58 = arith.constant 5 : index
    %c0_59 = arith.constant 0 : index
    %91 = vector.load %arg26[%c5_58, %c0_59] : memref<32x128xf32, #tpu.memory_space<vmem>>, vector<1x128xf32>
    tpu.vector_store %arg26[%c5_58, %c0_59], %90 {strides = array<i32>} : memref<32x128xf32, #tpu.memory_space<vmem>>, vector<1x128xf32>,
    %92 = arith.index_cast %1 : i32 to index
    %c6 = arith.constant 6 : index
    %93 = memref.load %arg1[%92, %c6] : memref<2x16xi32, #tpu.memory_space<smem>>
    %94 = arith.index_cast %1 : i32 to index
    %c6_60 = arith.constant 6 : index
    %95 = memref.load %arg2[%94, %c6_60] : memref<2x16xi32, #tpu.memory_space<smem>>
    %96 = arith.index_cast %93 : i32 to index
    %c0_61 = arith.constant 0 : index
    %c0_62 = arith.constant 0 : index
    %97 = vector.load %arg4[%96, %c0_61, %c0_62] : memref<100x1x128xf32, #tpu.memory_space<vmem>>, vector<1x1x128xf32>
    %98 = vector.shape_cast %97 : vector<1x1x128xf32> to vector<1x128xf32>
    %c6_63 = arith.constant 6 : index
    %c0_64 = arith.constant 0 : index
    %c0_65 = arith.constant 0 : index
    %99 = vector.load %arg5[%c6_63, %c0_64, %c0_65] : memref<32x1x128xf32, #tpu.memory_space<vmem>>, vector<1x1x128xf32>
    %100 = vector.shape_cast %99 : vector<1x1x128xf32> to vector<1x128xf32>
    %101 = arith.addf %98, %100 : vector<1x128xf32>
    %102 = arith.index_cast %95 : i32 to index
    %c0_66 = arith.constant 0 : index
    %c0_67 = arith.constant 0 : index
    %103 = vector.load %arg6[%102, %c0_66, %c0_67] : memref<2x1x128xf32, #tpu.memory_space<vmem>>, vector<1x1x128xf32>
    %104 = vector.shape_cast %103 : vector<1x1x128xf32> to vector<1x128xf32>
    %105 = arith.addf %101, %104 : vector<1x128xf32>
    %c6_68 = arith.constant 6 : index
    %c0_69 = arith.constant 0 : index
    %106 = vector.load %arg26[%c6_68, %c0_69] : memref<32x128xf32, #tpu.memory_space<vmem>>, vector<1x128xf32>
    tpu.vector_store %arg26[%c6_68, %c0_69], %105 {strides = array<i32>} : memref<32x128xf32, #tpu.memory_space<vmem>>, vector<1x128xf32>,
    %107 = arith.index_cast %1 : i32 to index
    %c7 = arith.constant 7 : index
    %108 = memref.load %arg1[%107, %c7] : memref<2x16xi32, #tpu.memory_space<smem>>
    %109 = arith.index_cast %1 : i32 to index
    %c7_70 = arith.constant 7 : index
    %110 = memref.load %arg2[%109, %c7_70] : memref<2x16xi32, #tpu.memory_space<smem>>
    %111 = arith.index_cast %108 : i32 to index
    %c0_71 = arith.constant 0 : index
    %c0_72 = arith.constant 0 : index
    %112 = vector.load %arg4[%111, %c0_71, %c0_72] : memref<100x1x128xf32, #tpu.memory_space<vmem>>, vector<1x1x128xf32>
    %113 = vector.shape_cast %112 : vector<1x1x128xf32> to vector<1x128xf32>
    %c7_73 = arith.constant 7 : index
    %c0_74 = arith.constant 0 : index
    %c0_75 = arith.constant 0 : index
    %114 = vector.load %arg5[%c7_73, %c0_74, %c0_75] : memref<32x1x128xf32, #tpu.memory_space<vmem>>, vector<1x1x128xf32>
    %115 = vector.shape_cast %114 : vector<1x1x128xf32> to vector<1x128xf32>
    %116 = arith.addf %113, %115 : vector<1x128xf32>
    %117 = arith.index_cast %110 : i32 to index
    %c0_76 = arith.constant 0 : index
    %c0_77 = arith.constant 0 : index
    %118 = vector.load %arg6[%117, %c0_76, %c0_77] : memref<2x1x128xf32, #tpu.memory_space<vmem>>, vector<1x1x128xf32>
    %119 = vector.shape_cast %118 : vector<1x1x128xf32> to vector<1x128xf32>
    %120 = arith.addf %116, %119 : vector<1x128xf32>
    %c7_78 = arith.constant 7 : index
    %c0_79 = arith.constant 0 : index
    %121 = vector.load %arg26[%c7_78, %c0_79] : memref<32x128xf32, #tpu.memory_space<vmem>>, vector<1x128xf32>
    tpu.vector_store %arg26[%c7_78, %c0_79], %120 {strides = array<i32>} : memref<32x128xf32, #tpu.memory_space<vmem>>, vector<1x128xf32>,
    %122 = arith.index_cast %1 : i32 to index
    %c8 = arith.constant 8 : index
    %123 = memref.load %arg1[%122, %c8] : memref<2x16xi32, #tpu.memory_space<smem>>
    %124 = arith.index_cast %1 : i32 to index
    %c8_80 = arith.constant 8 : index
    %125 = memref.load %arg2[%124, %c8_80] : memref<2x16xi32, #tpu.memory_space<smem>>
    %126 = arith.index_cast %123 : i32 to index
    %c0_81 = arith.constant 0 : index
    %c0_82 = arith.constant 0 : index
    %127 = vector.load %arg4[%126, %c0_81, %c0_82] : memref<100x1x128xf32, #tpu.memory_space<vmem>>, vector<1x1x128xf32>
    %128 = vector.shape_cast %127 : vector<1x1x128xf32> to vector<1x128xf32>
    %c8_83 = arith.constant 8 : index
    %c0_84 = arith.constant 0 : index
    %c0_85 = arith.constant 0 : index
    %129 = vector.load %arg5[%c8_83, %c0_84, %c0_85] : memref<32x1x128xf32, #tpu.memory_space<vmem>>, vector<1x1x128xf32>
    %130 = vector.shape_cast %129 : vector<1x1x128xf32> to vector<1x128xf32>
    %131 = arith.addf %128, %130 : vector<1x128xf32>
    %132 = arith.index_cast %125 : i32 to index
    %c0_86 = arith.constant 0 : index
    %c0_87 = arith.constant 0 : index
    %133 = vector.load %arg6[%132, %c0_86, %c0_87] : memref<2x1x128xf32, #tpu.memory_space<vmem>>, vector<1x1x128xf32>
    %134 = vector.shape_cast %133 : vector<1x1x128xf32> to vector<1x128xf32>
    %135 = arith.addf %131, %134 : vector<1x128xf32>
    %c8_88 = arith.constant 8 : index
    %c0_89 = arith.constant 0 : index
    %136 = vector.load %arg26[%c8_88, %c0_89] : memref<32x128xf32, #tpu.memory_space<vmem>>, vector<1x128xf32>
    tpu.vector_store %arg26[%c8_88, %c0_89], %135 {strides = array<i32>} : memref<32x128xf32, #tpu.memory_space<vmem>>, vector<1x128xf32>,
    %137 = arith.index_cast %1 : i32 to index
    %c9 = arith.constant 9 : index
    %138 = memref.load %arg1[%137, %c9] : memref<2x16xi32, #tpu.memory_space<smem>>
    %139 = arith.index_cast %1 : i32 to index
    %c9_90 = arith.constant 9 : index
    %140 = memref.load %arg2[%139, %c9_90] : memref<2x16xi32, #tpu.memory_space<smem>>
    %141 = arith.index_cast %138 : i32 to index
    %c0_91 = arith.constant 0 : index
    %c0_92 = arith.constant 0 : index
    %142 = vector.load %arg4[%141, %c0_91, %c0_92] : memref<100x1x128xf32, #tpu.memory_space<vmem>>, vector<1x1x128xf32>
    %143 = vector.shape_cast %142 : vector<1x1x128xf32> to vector<1x128xf32>
    %c9_93 = arith.constant 9 : index
    %c0_94 = arith.constant 0 : index
    %c0_95 = arith.constant 0 : index
    %144 = vector.load %arg5[%c9_93, %c0_94, %c0_95] : memref<32x1x128xf32, #tpu.memory_space<vmem>>, vector<1x1x128xf32>
    %145 = vector.shape_cast %144 : vector<1x1x128xf32> to vector<1x128xf32>
    %146 = arith.addf %143, %145 : vector<1x128xf32>
    %147 = arith.index_cast %140 : i32 to index
    %c0_96 = arith.constant 0 : index
    %c0_97 = arith.constant 0 : index
    %148 = vector.load %arg6[%147, %c0_96, %c0_97] : memref<2x1x128xf32, #tpu.memory_space<vmem>>, vector<1x1x128xf32>
    %149 = vector.shape_cast %148 : vector<1x1x128xf32> to vector<1x128xf32>
    %150 = arith.addf %146, %149 : vector<1x128xf32>
    %c9_98 = arith.constant 9 : index
    %c0_99 = arith.constant 0 : index
    %151 = vector.load %arg26[%c9_98, %c0_99] : memref<32x128xf32, #tpu.memory_space<vmem>>, vector<1x128xf32>
    tpu.vector_store %arg26[%c9_98, %c0_99], %150 {strides = array<i32>} : memref<32x128xf32, #tpu.memory_space<vmem>>, vector<1x128xf32>,
    %152 = arith.index_cast %1 : i32 to index
    %c10 = arith.constant 10 : index
    %153 = memref.load %arg1[%152, %c10] : memref<2x16xi32, #tpu.memory_space<smem>>
    %154 = arith.index_cast %1 : i32 to index
    %c10_100 = arith.constant 10 : index
    %155 = memref.load %arg2[%154, %c10_100] : memref<2x16xi32, #tpu.memory_space<smem>>
    %156 = arith.index_cast %153 : i32 to index
    %c0_101 = arith.constant 0 : index
    %c0_102 = arith.constant 0 : index
    %157 = vector.load %arg4[%156, %c0_101, %c0_102] : memref<100x1x128xf32, #tpu.memory_space<vmem>>, vector<1x1x128xf32>
    %158 = vector.shape_cast %157 : vector<1x1x128xf32> to vector<1x128xf32>
    %c10_103 = arith.constant 10 : index
    %c0_104 = arith.constant 0 : index
    %c0_105 = arith.constant 0 : index
    %159 = vector.load %arg5[%c10_103, %c0_104, %c0_105] : memref<32x1x128xf32, #tpu.memory_space<vmem>>, vector<1x1x128xf32>
    %160 = vector.shape_cast %159 : vector<1x1x128xf32> to vector<1x128xf32>
    %161 = arith.addf %158, %160 : vector<1x128xf32>
    %162 = arith.index_cast %155 : i32 to index
    %c0_106 = arith.constant 0 : index
    %c0_107 = arith.constant 0 : index
    %163 = vector.load %arg6[%162, %c0_106, %c0_107] : memref<2x1x128xf32, #tpu.memory_space<vmem>>, vector<1x1x128xf32>
    %164 = vector.shape_cast %163 : vector<1x1x128xf32> to vector<1x128xf32>
    %165 = arith.addf %161, %164 : vector<1x128xf32>
    %c10_108 = arith.constant 10 : index
    %c0_109 = arith.constant 0 : index
    %166 = vector.load %arg26[%c10_108, %c0_109] : memref<32x128xf32, #tpu.memory_space<vmem>>, vector<1x128xf32>
    tpu.vector_store %arg26[%c10_108, %c0_109], %165 {strides = array<i32>} : memref<32x128xf32, #tpu.memory_space<vmem>>, vector<1x128xf32>,
    %167 = arith.index_cast %1 : i32 to index
    %c11 = arith.constant 11 : index
    %168 = memref.load %arg1[%167, %c11] : memref<2x16xi32, #tpu.memory_space<smem>>
    %169 = arith.index_cast %1 : i32 to index
    %c11_110 = arith.constant 11 : index
    %170 = memref.load %arg2[%169, %c11_110] : memref<2x16xi32, #tpu.memory_space<smem>>
    %171 = arith.index_cast %168 : i32 to index
    %c0_111 = arith.constant 0 : index
    %c0_112 = arith.constant 0 : index
    %172 = vector.load %arg4[%171, %c0_111, %c0_112] : memref<100x1x128xf32, #tpu.memory_space<vmem>>, vector<1x1x128xf32>
    %173 = vector.shape_cast %172 : vector<1x1x128xf32> to vector<1x128xf32>
    %c11_113 = arith.constant 11 : index
    %c0_114 = arith.constant 0 : index
    %c0_115 = arith.constant 0 : index
    %174 = vector.load %arg5[%c11_113, %c0_114, %c0_115] : memref<32x1x128xf32, #tpu.memory_space<vmem>>, vector<1x1x128xf32>
    %175 = vector.shape_cast %174 : vector<1x1x128xf32> to vector<1x128xf32>
    %176 = arith.addf %173, %175 : vector<1x128xf32>
    %177 = arith.index_cast %170 : i32 to index
    %c0_116 = arith.constant 0 : index
    %c0_117 = arith.constant 0 : index
    %178 = vector.load %arg6[%177, %c0_116, %c0_117] : memref<2x1x128xf32, #tpu.memory_space<vmem>>, vector<1x1x128xf32>
    %179 = vector.shape_cast %178 : vector<1x1x128xf32> to vector<1x128xf32>
    %180 = arith.addf %176, %179 : vector<1x128xf32>
    %c11_118 = arith.constant 11 : index
    %c0_119 = arith.constant 0 : index
    %181 = vector.load %arg26[%c11_118, %c0_119] : memref<32x128xf32, #tpu.memory_space<vmem>>, vector<1x128xf32>
    tpu.vector_store %arg26[%c11_118, %c0_119], %180 {strides = array<i32>} : memref<32x128xf32, #tpu.memory_space<vmem>>, vector<1x128xf32>,
    %182 = arith.index_cast %1 : i32 to index
    %c12 = arith.constant 12 : index
    %183 = memref.load %arg1[%182, %c12] : memref<2x16xi32, #tpu.memory_space<smem>>
    %184 = arith.index_cast %1 : i32 to index
    %c12_120 = arith.constant 12 : index
    %185 = memref.load %arg2[%184, %c12_120] : memref<2x16xi32, #tpu.memory_space<smem>>
    %186 = arith.index_cast %183 : i32 to index
    %c0_121 = arith.constant 0 : index
    %c0_122 = arith.constant 0 : index
    %187 = vector.load %arg4[%186, %c0_121, %c0_122] : memref<100x1x128xf32, #tpu.memory_space<vmem>>, vector<1x1x128xf32>
    %188 = vector.shape_cast %187 : vector<1x1x128xf32> to vector<1x128xf32>
    %c12_123 = arith.constant 12 : index
    %c0_124 = arith.constant 0 : index
    %c0_125 = arith.constant 0 : index
    %189 = vector.load %arg5[%c12_123, %c0_124, %c0_125] : memref<32x1x128xf32, #tpu.memory_space<vmem>>, vector<1x1x128xf32>
    %190 = vector.shape_cast %189 : vector<1x1x128xf32> to vector<1x128xf32>
    %191 = arith.addf %188, %190 : vector<1x128xf32>
    %192 = arith.index_cast %185 : i32 to index
    %c0_126 = arith.constant 0 : index
    %c0_127 = arith.constant 0 : index
    %193 = vector.load %arg6[%192, %c0_126, %c0_127] : memref<2x1x128xf32, #tpu.memory_space<vmem>>, vector<1x1x128xf32>
    %194 = vector.shape_cast %193 : vector<1x1x128xf32> to vector<1x128xf32>
    %195 = arith.addf %191, %194 : vector<1x128xf32>
    %c12_128 = arith.constant 12 : index
    %c0_129 = arith.constant 0 : index
    %196 = vector.load %arg26[%c12_128, %c0_129] : memref<32x128xf32, #tpu.memory_space<vmem>>, vector<1x128xf32>
    tpu.vector_store %arg26[%c12_128, %c0_129], %195 {strides = array<i32>} : memref<32x128xf32, #tpu.memory_space<vmem>>, vector<1x128xf32>,
    %197 = arith.index_cast %1 : i32 to index
    %c13 = arith.constant 13 : index
    %198 = memref.load %arg1[%197, %c13] : memref<2x16xi32, #tpu.memory_space<smem>>
    %199 = arith.index_cast %1 : i32 to index
    %c13_130 = arith.constant 13 : index
    %200 = memref.load %arg2[%199, %c13_130] : memref<2x16xi32, #tpu.memory_space<smem>>
    %201 = arith.index_cast %198 : i32 to index
    %c0_131 = arith.constant 0 : index
    %c0_132 = arith.constant 0 : index
    %202 = vector.load %arg4[%201, %c0_131, %c0_132] : memref<100x1x128xf32, #tpu.memory_space<vmem>>, vector<1x1x128xf32>
    %203 = vector.shape_cast %202 : vector<1x1x128xf32> to vector<1x128xf32>
    %c13_133 = arith.constant 13 : index
    %c0_134 = arith.constant 0 : index
    %c0_135 = arith.constant 0 : index
    %204 = vector.load %arg5[%c13_133, %c0_134, %c0_135] : memref<32x1x128xf32, #tpu.memory_space<vmem>>, vector<1x1x128xf32>
    %205 = vector.shape_cast %204 : vector<1x1x128xf32> to vector<1x128xf32>
    %206 = arith.addf %203, %205 : vector<1x128xf32>
    %207 = arith.index_cast %200 : i32 to index
    %c0_136 = arith.constant 0 : index
    %c0_137 = arith.constant 0 : index
    %208 = vector.load %arg6[%207, %c0_136, %c0_137] : memref<2x1x128xf32, #tpu.memory_space<vmem>>, vector<1x1x128xf32>
    %209 = vector.shape_cast %208 : vector<1x1x128xf32> to vector<1x128xf32>
    %210 = arith.addf %206, %209 : vector<1x128xf32>
    %c13_138 = arith.constant 13 : index
    %c0_139 = arith.constant 0 : index
    %211 = vector.load %arg26[%c13_138, %c0_139] : memref<32x128xf32, #tpu.memory_space<vmem>>, vector<1x128xf32>
    tpu.vector_store %arg26[%c13_138, %c0_139], %210 {strides = array<i32>} : memref<32x128xf32, #tpu.memory_space<vmem>>, vector<1x128xf32>,
    %212 = arith.index_cast %1 : i32 to index
    %c14 = arith.constant 14 : index
    %213 = memref.load %arg1[%212, %c14] : memref<2x16xi32, #tpu.memory_space<smem>>
    %214 = arith.index_cast %1 : i32 to index
    %c14_140 = arith.constant 14 : index
    %215 = memref.load %arg2[%214, %c14_140] : memref<2x16xi32, #tpu.memory_space<smem>>
    %216 = arith.index_cast %213 : i32 to index
    %c0_141 = arith.constant 0 : index
    %c0_142 = arith.constant 0 : index
    %217 = vector.load %arg4[%216, %c0_141, %c0_142] : memref<100x1x128xf32, #tpu.memory_space<vmem>>, vector<1x1x128xf32>
    %218 = vector.shape_cast %217 : vector<1x1x128xf32> to vector<1x128xf32>
    %c14_143 = arith.constant 14 : index
    %c0_144 = arith.constant 0 : index
    %c0_145 = arith.constant 0 : index
    %219 = vector.load %arg5[%c14_143, %c0_144, %c0_145] : memref<32x1x128xf32, #tpu.memory_space<vmem>>, vector<1x1x128xf32>
    %220 = vector.shape_cast %219 : vector<1x1x128xf32> to vector<1x128xf32>
    %221 = arith.addf %218, %220 : vector<1x128xf32>
    %222 = arith.index_cast %215 : i32 to index
    %c0_146 = arith.constant 0 : index
    %c0_147 = arith.constant 0 : index
    %223 = vector.load %arg6[%222, %c0_146, %c0_147] : memref<2x1x128xf32, #tpu.memory_space<vmem>>, vector<1x1x128xf32>
    %224 = vector.shape_cast %223 : vector<1x1x128xf32> to vector<1x128xf32>
    %225 = arith.addf %221, %224 : vector<1x128xf32>
    %c14_148 = arith.constant 14 : index
    %c0_149 = arith.constant 0 : index
    %226 = vector.load %arg26[%c14_148, %c0_149] : memref<32x128xf32, #tpu.memory_space<vmem>>, vector<1x128xf32>
    tpu.vector_store %arg26[%c14_148, %c0_149], %225 {strides = array<i32>} : memref<32x128xf32, #tpu.memory_space<vmem>>, vector<1x128xf32>,
    %227 = arith.index_cast %1 : i32 to index
    %c15 = arith.constant 15 : index
    %228 = memref.load %arg1[%227, %c15] : memref<2x16xi32, #tpu.memory_space<smem>>
    %229 = arith.index_cast %1 : i32 to index
    %c15_150 = arith.constant 15 : index
    %230 = memref.load %arg2[%229, %c15_150] : memref<2x16xi32, #tpu.memory_space<smem>>
    %231 = arith.index_cast %228 : i32 to index
    %c0_151 = arith.constant 0 : index
    %c0_152 = arith.constant 0 : index
    %232 = vector.load %arg4[%231, %c0_151, %c0_152] : memref<100x1x128xf32, #tpu.memory_space<vmem>>, vector<1x1x128xf32>
    %233 = vector.shape_cast %232 : vector<1x1x128xf32> to vector<1x128xf32>
    %c15_153 = arith.constant 15 : index
    %c0_154 = arith.constant 0 : index
    %c0_155 = arith.constant 0 : index
    %234 = vector.load %arg5[%c15_153, %c0_154, %c0_155] : memref<32x1x128xf32, #tpu.memory_space<vmem>>, vector<1x1x128xf32>
    %235 = vector.shape_cast %234 : vector<1x1x128xf32> to vector<1x128xf32>
    %236 = arith.addf %233, %235 : vector<1x128xf32>
    %237 = arith.index_cast %230 : i32 to index
    %c0_156 = arith.constant 0 : index
    %c0_157 = arith.constant 0 : index
    %238 = vector.load %arg6[%237, %c0_156, %c0_157] : memref<2x1x128xf32, #tpu.memory_space<vmem>>, vector<1x1x128xf32>
    %239 = vector.shape_cast %238 : vector<1x1x128xf32> to vector<1x128xf32>
    %240 = arith.addf %236, %239 : vector<1x128xf32>
    %c15_158 = arith.constant 15 : index
    %c0_159 = arith.constant 0 : index
    %241 = vector.load %arg26[%c15_158, %c0_159] : memref<32x128xf32, #tpu.memory_space<vmem>>, vector<1x128xf32>
    tpu.vector_store %arg26[%c15_158, %c0_159], %240 {strides = array<i32>} : memref<32x128xf32, #tpu.memory_space<vmem>>, vector<1x128xf32>,
    %c2_i32_160 = arith.constant 2 : i32
    %242 = arith.muli %arg0, %c2_i32_160 : i32
    %c1_i32 = arith.constant 1 : i32
    %243 = arith.addi %242, %c1_i32 : i32
    %244 = arith.index_cast %243 : i32 to index
    %c0_161 = arith.constant 0 : index
    %245 = memref.load %arg1[%244, %c0_161] : memref<2x16xi32, #tpu.memory_space<smem>>
    %246 = arith.index_cast %243 : i32 to index
    %c0_162 = arith.constant 0 : index
    %247 = memref.load %arg2[%246, %c0_162] : memref<2x16xi32, #tpu.memory_space<smem>>
    %248 = arith.index_cast %245 : i32 to index
    %c0_163 = arith.constant 0 : index
    %c0_164 = arith.constant 0 : index
    %249 = vector.load %arg4[%248, %c0_163, %c0_164] : memref<100x1x128xf32, #tpu.memory_space<vmem>>, vector<1x1x128xf32>
    %250 = vector.shape_cast %249 : vector<1x1x128xf32> to vector<1x128xf32>
    %c0_165 = arith.constant 0 : index
    %c0_166 = arith.constant 0 : index
    %c0_167 = arith.constant 0 : index
    %251 = vector.load %arg5[%c0_165, %c0_166, %c0_167] : memref<32x1x128xf32, #tpu.memory_space<vmem>>, vector<1x1x128xf32>
    %252 = vector.shape_cast %251 : vector<1x1x128xf32> to vector<1x128xf32>
    %253 = arith.addf %250, %252 : vector<1x128xf32>
    %254 = arith.index_cast %247 : i32 to index
    %c0_168 = arith.constant 0 : index
    %c0_169 = arith.constant 0 : index
    %255 = vector.load %arg6[%254, %c0_168, %c0_169] : memref<2x1x128xf32, #tpu.memory_space<vmem>>, vector<1x1x128xf32>
    %256 = vector.shape_cast %255 : vector<1x1x128xf32> to vector<1x128xf32>
    %257 = arith.addf %253, %256 : vector<1x128xf32>
    %c16 = arith.constant 16 : index
    %c0_170 = arith.constant 0 : index
    %258 = vector.load %arg26[%c16, %c0_170] : memref<32x128xf32, #tpu.memory_space<vmem>>, vector<1x128xf32>
    tpu.vector_store %arg26[%c16, %c0_170], %257 {strides = array<i32>} : memref<32x128xf32, #tpu.memory_space<vmem>>, vector<1x128xf32>,
    %259 = arith.index_cast %243 : i32 to index
    %c1_171 = arith.constant 1 : index
    %260 = memref.load %arg1[%259, %c1_171] : memref<2x16xi32, #tpu.memory_space<smem>>
    %261 = arith.index_cast %243 : i32 to index
    %c1_172 = arith.constant 1 : index
    %262 = memref.load %arg2[%261, %c1_172] : memref<2x16xi32, #tpu.memory_space<smem>>
    %263 = arith.index_cast %260 : i32 to index
    %c0_173 = arith.constant 0 : index
    %c0_174 = arith.constant 0 : index
    %264 = vector.load %arg4[%263, %c0_173, %c0_174] : memref<100x1x128xf32, #tpu.memory_space<vmem>>, vector<1x1x128xf32>
    %265 = vector.shape_cast %264 : vector<1x1x128xf32> to vector<1x128xf32>
    %c1_175 = arith.constant 1 : index
    %c0_176 = arith.constant 0 : index
    %c0_177 = arith.constant 0 : index
    %266 = vector.load %arg5[%c1_175, %c0_176, %c0_177] : memref<32x1x128xf32, #tpu.memory_space<vmem>>, vector<1x1x128xf32>
    %267 = vector.shape_cast %266 : vector<1x1x128xf32> to vector<1x128xf32>
    %268 = arith.addf %265, %267 : vector<1x128xf32>
    %269 = arith.index_cast %262 : i32 to index
    %c0_178 = arith.constant 0 : index
    %c0_179 = arith.constant 0 : index
    %270 = vector.load %arg6[%269, %c0_178, %c0_179] : memref<2x1x128xf32, #tpu.memory_space<vmem>>, vector<1x1x128xf32>
    %271 = vector.shape_cast %270 : vector<1x1x128xf32> to vector<1x128xf32>
    %272 = arith.addf %268, %271 : vector<1x128xf32>
    %c17 = arith.constant 17 : index
    %c0_180 = arith.constant 0 : index
    %273 = vector.load %arg26[%c17, %c0_180] : memref<32x128xf32, #tpu.memory_space<vmem>>, vector<1x128xf32>
    tpu.vector_store %arg26[%c17, %c0_180], %272 {strides = array<i32>} : memref<32x128xf32, #tpu.memory_space<vmem>>, vector<1x128xf32>,
    %274 = arith.index_cast %243 : i32 to index
    %c2_181 = arith.constant 2 : index
    %275 = memref.load %arg1[%274, %c2_181] : memref<2x16xi32, #tpu.memory_space<smem>>
    %276 = arith.index_cast %243 : i32 to index
    %c2_182 = arith.constant 2 : index
    %277 = memref.load %arg2[%276, %c2_182] : memref<2x16xi32, #tpu.memory_space<smem>>
    %278 = arith.index_cast %275 : i32 to index
    %c0_183 = arith.constant 0 : index
    %c0_184 = arith.constant 0 : index
    %279 = vector.load %arg4[%278, %c0_183, %c0_184] : memref<100x1x128xf32, #tpu.memory_space<vmem>>, vector<1x1x128xf32>
    %280 = vector.shape_cast %279 : vector<1x1x128xf32> to vector<1x128xf32>
    %c2_185 = arith.constant 2 : index
    %c0_186 = arith.constant 0 : index
    %c0_187 = arith.constant 0 : index
    %281 = vector.load %arg5[%c2_185, %c0_186, %c0_187] : memref<32x1x128xf32, #tpu.memory_space<vmem>>, vector<1x1x128xf32>
    %282 = vector.shape_cast %281 : vector<1x1x128xf32> to vector<1x128xf32>
    %283 = arith.addf %280, %282 : vector<1x128xf32>
    %284 = arith.index_cast %277 : i32 to index
    %c0_188 = arith.constant 0 : index
    %c0_189 = arith.constant 0 : index
    %285 = vector.load %arg6[%284, %c0_188, %c0_189] : memref<2x1x128xf32, #tpu.memory_space<vmem>>, vector<1x1x128xf32>
    %286 = vector.shape_cast %285 : vector<1x1x128xf32> to vector<1x128xf32>
    %287 = arith.addf %283, %286 : vector<1x128xf32>
    %c18 = arith.constant 18 : index
    %c0_190 = arith.constant 0 : index
    %288 = vector.load %arg26[%c18, %c0_190] : memref<32x128xf32, #tpu.memory_space<vmem>>, vector<1x128xf32>
    tpu.vector_store %arg26[%c18, %c0_190], %287 {strides = array<i32>} : memref<32x128xf32, #tpu.memory_space<vmem>>, vector<1x128xf32>,
    %289 = arith.index_cast %243 : i32 to index
    %c3_191 = arith.constant 3 : index
    %290 = memref.load %arg1[%289, %c3_191] : memref<2x16xi32, #tpu.memory_space<smem>>
    %291 = arith.index_cast %243 : i32 to index
    %c3_192 = arith.constant 3 : index
    %292 = memref.load %arg2[%291, %c3_192] : memref<2x16xi32, #tpu.memory_space<smem>>
    %293 = arith.index_cast %290 : i32 to index
    %c0_193 = arith.constant 0 : index
    %c0_194 = arith.constant 0 : index
    %294 = vector.load %arg4[%293, %c0_193, %c0_194] : memref<100x1x128xf32, #tpu.memory_space<vmem>>, vector<1x1x128xf32>
    %295 = vector.shape_cast %294 : vector<1x1x128xf32> to vector<1x128xf32>
    %c3_195 = arith.constant 3 : index
    %c0_196 = arith.constant 0 : index
    %c0_197 = arith.constant 0 : index
    %296 = vector.load %arg5[%c3_195, %c0_196, %c0_197] : memref<32x1x128xf32, #tpu.memory_space<vmem>>, vector<1x1x128xf32>
    %297 = vector.shape_cast %296 : vector<1x1x128xf32> to vector<1x128xf32>
    %298 = arith.addf %295, %297 : vector<1x128xf32>
    %299 = arith.index_cast %292 : i32 to index
    %c0_198 = arith.constant 0 : index
    %c0_199 = arith.constant 0 : index
    %300 = vector.load %arg6[%299, %c0_198, %c0_199] : memref<2x1x128xf32, #tpu.memory_space<vmem>>, vector<1x1x128xf32>
    %301 = vector.shape_cast %300 : vector<1x1x128xf32> to vector<1x128xf32>
    %302 = arith.addf %298, %301 : vector<1x128xf32>
    %c19 = arith.constant 19 : index
    %c0_200 = arith.constant 0 : index
    %303 = vector.load %arg26[%c19, %c0_200] : memref<32x128xf32, #tpu.memory_space<vmem>>, vector<1x128xf32>
    tpu.vector_store %arg26[%c19, %c0_200], %302 {strides = array<i32>} : memref<32x128xf32, #tpu.memory_space<vmem>>, vector<1x128xf32>,
    %304 = arith.index_cast %243 : i32 to index
    %c4_201 = arith.constant 4 : index
    %305 = memref.load %arg1[%304, %c4_201] : memref<2x16xi32, #tpu.memory_space<smem>>
    %306 = arith.index_cast %243 : i32 to index
    %c4_202 = arith.constant 4 : index
    %307 = memref.load %arg2[%306, %c4_202] : memref<2x16xi32, #tpu.memory_space<smem>>
    %308 = arith.index_cast %305 : i32 to index
    %c0_203 = arith.constant 0 : index
    %c0_204 = arith.constant 0 : index
    %309 = vector.load %arg4[%308, %c0_203, %c0_204] : memref<100x1x128xf32, #tpu.memory_space<vmem>>, vector<1x1x128xf32>
    %310 = vector.shape_cast %309 : vector<1x1x128xf32> to vector<1x128xf32>
    %c4_205 = arith.constant 4 : index
    %c0_206 = arith.constant 0 : index
    %c0_207 = arith.constant 0 : index
    %311 = vector.load %arg5[%c4_205, %c0_206, %c0_207] : memref<32x1x128xf32, #tpu.memory_space<vmem>>, vector<1x1x128xf32>
    %312 = vector.shape_cast %311 : vector<1x1x128xf32> to vector<1x128xf32>
    %313 = arith.addf %310, %312 : vector<1x128xf32>
    %314 = arith.index_cast %307 : i32 to index
    %c0_208 = arith.constant 0 : index
    %c0_209 = arith.constant 0 : index
    %315 = vector.load %arg6[%314, %c0_208, %c0_209] : memref<2x1x128xf32, #tpu.memory_space<vmem>>, vector<1x1x128xf32>
    %316 = vector.shape_cast %315 : vector<1x1x128xf32> to vector<1x128xf32>
    %317 = arith.addf %313, %316 : vector<1x128xf32>
    %c20 = arith.constant 20 : index
    %c0_210 = arith.constant 0 : index
    %318 = vector.load %arg26[%c20, %c0_210] : memref<32x128xf32, #tpu.memory_space<vmem>>, vector<1x128xf32>
    tpu.vector_store %arg26[%c20, %c0_210], %317 {strides = array<i32>} : memref<32x128xf32, #tpu.memory_space<vmem>>, vector<1x128xf32>,
    %319 = arith.index_cast %243 : i32 to index
    %c5_211 = arith.constant 5 : index
    %320 = memref.load %arg1[%319, %c5_211] : memref<2x16xi32, #tpu.memory_space<smem>>
    %321 = arith.index_cast %243 : i32 to index
    %c5_212 = arith.constant 5 : index
    %322 = memref.load %arg2[%321, %c5_212] : memref<2x16xi32, #tpu.memory_space<smem>>
    %323 = arith.index_cast %320 : i32 to index
    %c0_213 = arith.constant 0 : index
    %c0_214 = arith.constant 0 : index
    %324 = vector.load %arg4[%323, %c0_213, %c0_214] : memref<100x1x128xf32, #tpu.memory_space<vmem>>, vector<1x1x128xf32>
    %325 = vector.shape_cast %324 : vector<1x1x128xf32> to vector<1x128xf32>
    %c5_215 = arith.constant 5 : index
    %c0_216 = arith.constant 0 : index
    %c0_217 = arith.constant 0 : index
    %326 = vector.load %arg5[%c5_215, %c0_216, %c0_217] : memref<32x1x128xf32, #tpu.memory_space<vmem>>, vector<1x1x128xf32>
    %327 = vector.shape_cast %326 : vector<1x1x128xf32> to vector<1x128xf32>
    %328 = arith.addf %325, %327 : vector<1x128xf32>
    %329 = arith.index_cast %322 : i32 to index
    %c0_218 = arith.constant 0 : index
    %c0_219 = arith.constant 0 : index
    %330 = vector.load %arg6[%329, %c0_218, %c0_219] : memref<2x1x128xf32, #tpu.memory_space<vmem>>, vector<1x1x128xf32>
    %331 = vector.shape_cast %330 : vector<1x1x128xf32> to vector<1x128xf32>
    %332 = arith.addf %328, %331 : vector<1x128xf32>
    %c21 = arith.constant 21 : index
    %c0_220 = arith.constant 0 : index
    %333 = vector.load %arg26[%c21, %c0_220] : memref<32x128xf32, #tpu.memory_space<vmem>>, vector<1x128xf32>
    tpu.vector_store %arg26[%c21, %c0_220], %332 {strides = array<i32>} : memref<32x128xf32, #tpu.memory_space<vmem>>, vector<1x128xf32>,
    %334 = arith.index_cast %243 : i32 to index
    %c6_221 = arith.constant 6 : index
    %335 = memref.load %arg1[%334, %c6_221] : memref<2x16xi32, #tpu.memory_space<smem>>
    %336 = arith.index_cast %243 : i32 to index
    %c6_222 = arith.constant 6 : index
    %337 = memref.load %arg2[%336, %c6_222] : memref<2x16xi32, #tpu.memory_space<smem>>
    %338 = arith.index_cast %335 : i32 to index
    %c0_223 = arith.constant 0 : index
    %c0_224 = arith.constant 0 : index
    %339 = vector.load %arg4[%338, %c0_223, %c0_224] : memref<100x1x128xf32, #tpu.memory_space<vmem>>, vector<1x1x128xf32>
    %340 = vector.shape_cast %339 : vector<1x1x128xf32> to vector<1x128xf32>
    %c6_225 = arith.constant 6 : index
    %c0_226 = arith.constant 0 : index
    %c0_227 = arith.constant 0 : index
    %341 = vector.load %arg5[%c6_225, %c0_226, %c0_227] : memref<32x1x128xf32, #tpu.memory_space<vmem>>, vector<1x1x128xf32>
    %342 = vector.shape_cast %341 : vector<1x1x128xf32> to vector<1x128xf32>
    %343 = arith.addf %340, %342 : vector<1x128xf32>
    %344 = arith.index_cast %337 : i32 to index
    %c0_228 = arith.constant 0 : index
    %c0_229 = arith.constant 0 : index
    %345 = vector.load %arg6[%344, %c0_228, %c0_229] : memref<2x1x128xf32, #tpu.memory_space<vmem>>, vector<1x1x128xf32>
    %346 = vector.shape_cast %345 : vector<1x1x128xf32> to vector<1x128xf32>
    %347 = arith.addf %343, %346 : vector<1x128xf32>
    %c22 = arith.constant 22 : index
    %c0_230 = arith.constant 0 : index
    %348 = vector.load %arg26[%c22, %c0_230] : memref<32x128xf32, #tpu.memory_space<vmem>>, vector<1x128xf32>
    tpu.vector_store %arg26[%c22, %c0_230], %347 {strides = array<i32>} : memref<32x128xf32, #tpu.memory_space<vmem>>, vector<1x128xf32>,
    %349 = arith.index_cast %243 : i32 to index
    %c7_231 = arith.constant 7 : index
    %350 = memref.load %arg1[%349, %c7_231] : memref<2x16xi32, #tpu.memory_space<smem>>
    %351 = arith.index_cast %243 : i32 to index
    %c7_232 = arith.constant 7 : index
    %352 = memref.load %arg2[%351, %c7_232] : memref<2x16xi32, #tpu.memory_space<smem>>
    %353 = arith.index_cast %350 : i32 to index
    %c0_233 = arith.constant 0 : index
    %c0_234 = arith.constant 0 : index
    %354 = vector.load %arg4[%353, %c0_233, %c0_234] : memref<100x1x128xf32, #tpu.memory_space<vmem>>, vector<1x1x128xf32>
    %355 = vector.shape_cast %354 : vector<1x1x128xf32> to vector<1x128xf32>
    %c7_235 = arith.constant 7 : index
    %c0_236 = arith.constant 0 : index
    %c0_237 = arith.constant 0 : index
    %356 = vector.load %arg5[%c7_235, %c0_236, %c0_237] : memref<32x1x128xf32, #tpu.memory_space<vmem>>, vector<1x1x128xf32>
    %357 = vector.shape_cast %356 : vector<1x1x128xf32> to vector<1x128xf32>
    %358 = arith.addf %355, %357 : vector<1x128xf32>
    %359 = arith.index_cast %352 : i32 to index
    %c0_238 = arith.constant 0 : index
    %c0_239 = arith.constant 0 : index
    %360 = vector.load %arg6[%359, %c0_238, %c0_239] : memref<2x1x128xf32, #tpu.memory_space<vmem>>, vector<1x1x128xf32>
    %361 = vector.shape_cast %360 : vector<1x1x128xf32> to vector<1x128xf32>
    %362 = arith.addf %358, %361 : vector<1x128xf32>
    %c23 = arith.constant 23 : index
    %c0_240 = arith.constant 0 : index
    %363 = vector.load %arg26[%c23, %c0_240] : memref<32x128xf32, #tpu.memory_space<vmem>>, vector<1x128xf32>
    tpu.vector_store %arg26[%c23, %c0_240], %362 {strides = array<i32>} : memref<32x128xf32, #tpu.memory_space<vmem>>, vector<1x128xf32>,
    %364 = arith.index_cast %243 : i32 to index
    %c8_241 = arith.constant 8 : index
    %365 = memref.load %arg1[%364, %c8_241] : memref<2x16xi32, #tpu.memory_space<smem>>
    %366 = arith.index_cast %243 : i32 to index
    %c8_242 = arith.constant 8 : index
    %367 = memref.load %arg2[%366, %c8_242] : memref<2x16xi32, #tpu.memory_space<smem>>
    %368 = arith.index_cast %365 : i32 to index
    %c0_243 = arith.constant 0 : index
    %c0_244 = arith.constant 0 : index
    %369 = vector.load %arg4[%368, %c0_243, %c0_244] : memref<100x1x128xf32, #tpu.memory_space<vmem>>, vector<1x1x128xf32>
    %370 = vector.shape_cast %369 : vector<1x1x128xf32> to vector<1x128xf32>
    %c8_245 = arith.constant 8 : index
    %c0_246 = arith.constant 0 : index
    %c0_247 = arith.constant 0 : index
    %371 = vector.load %arg5[%c8_245, %c0_246, %c0_247] : memref<32x1x128xf32, #tpu.memory_space<vmem>>, vector<1x1x128xf32>
    %372 = vector.shape_cast %371 : vector<1x1x128xf32> to vector<1x128xf32>
    %373 = arith.addf %370, %372 : vector<1x128xf32>
    %374 = arith.index_cast %367 : i32 to index
    %c0_248 = arith.constant 0 : index
    %c0_249 = arith.constant 0 : index
    %375 = vector.load %arg6[%374, %c0_248, %c0_249] : memref<2x1x128xf32, #tpu.memory_space<vmem>>, vector<1x1x128xf32>
    %376 = vector.shape_cast %375 : vector<1x1x128xf32> to vector<1x128xf32>
    %377 = arith.addf %373, %376 : vector<1x128xf32>
    %c24 = arith.constant 24 : index
    %c0_250 = arith.constant 0 : index
    %378 = vector.load %arg26[%c24, %c0_250] : memref<32x128xf32, #tpu.memory_space<vmem>>, vector<1x128xf32>
    tpu.vector_store %arg26[%c24, %c0_250], %377 {strides = array<i32>} : memref<32x128xf32, #tpu.memory_space<vmem>>, vector<1x128xf32>,
    %379 = arith.index_cast %243 : i32 to index
    %c9_251 = arith.constant 9 : index
    %380 = memref.load %arg1[%379, %c9_251] : memref<2x16xi32, #tpu.memory_space<smem>>
    %381 = arith.index_cast %243 : i32 to index
    %c9_252 = arith.constant 9 : index
    %382 = memref.load %arg2[%381, %c9_252] : memref<2x16xi32, #tpu.memory_space<smem>>
    %383 = arith.index_cast %380 : i32 to index
    %c0_253 = arith.constant 0 : index
    %c0_254 = arith.constant 0 : index
    %384 = vector.load %arg4[%383, %c0_253, %c0_254] : memref<100x1x128xf32, #tpu.memory_space<vmem>>, vector<1x1x128xf32>
    %385 = vector.shape_cast %384 : vector<1x1x128xf32> to vector<1x128xf32>
    %c9_255 = arith.constant 9 : index
    %c0_256 = arith.constant 0 : index
    %c0_257 = arith.constant 0 : index
    %386 = vector.load %arg5[%c9_255, %c0_256, %c0_257] : memref<32x1x128xf32, #tpu.memory_space<vmem>>, vector<1x1x128xf32>
    %387 = vector.shape_cast %386 : vector<1x1x128xf32> to vector<1x128xf32>
    %388 = arith.addf %385, %387 : vector<1x128xf32>
    %389 = arith.index_cast %382 : i32 to index
    %c0_258 = arith.constant 0 : index
    %c0_259 = arith.constant 0 : index
    %390 = vector.load %arg6[%389, %c0_258, %c0_259] : memref<2x1x128xf32, #tpu.memory_space<vmem>>, vector<1x1x128xf32>
    %391 = vector.shape_cast %390 : vector<1x1x128xf32> to vector<1x128xf32>
    %392 = arith.addf %388, %391 : vector<1x128xf32>
    %c25 = arith.constant 25 : index
    %c0_260 = arith.constant 0 : index
    %393 = vector.load %arg26[%c25, %c0_260] : memref<32x128xf32, #tpu.memory_space<vmem>>, vector<1x128xf32>
    tpu.vector_store %arg26[%c25, %c0_260], %392 {strides = array<i32>} : memref<32x128xf32, #tpu.memory_space<vmem>>, vector<1x128xf32>,
    %394 = arith.index_cast %243 : i32 to index
    %c10_261 = arith.constant 10 : index
    %395 = memref.load %arg1[%394, %c10_261] : memref<2x16xi32, #tpu.memory_space<smem>>
    %396 = arith.index_cast %243 : i32 to index
    %c10_262 = arith.constant 10 : index
    %397 = memref.load %arg2[%396, %c10_262] : memref<2x16xi32, #tpu.memory_space<smem>>
    %398 = arith.index_cast %395 : i32 to index
    %c0_263 = arith.constant 0 : index
    %c0_264 = arith.constant 0 : index
    %399 = vector.load %arg4[%398, %c0_263, %c0_264] : memref<100x1x128xf32, #tpu.memory_space<vmem>>, vector<1x1x128xf32>
    %400 = vector.shape_cast %399 : vector<1x1x128xf32> to vector<1x128xf32>
    %c10_265 = arith.constant 10 : index
    %c0_266 = arith.constant 0 : index
    %c0_267 = arith.constant 0 : index
    %401 = vector.load %arg5[%c10_265, %c0_266, %c0_267] : memref<32x1x128xf32, #tpu.memory_space<vmem>>, vector<1x1x128xf32>
    %402 = vector.shape_cast %401 : vector<1x1x128xf32> to vector<1x128xf32>
    %403 = arith.addf %400, %402 : vector<1x128xf32>
    %404 = arith.index_cast %397 : i32 to index
    %c0_268 = arith.constant 0 : index
    %c0_269 = arith.constant 0 : index
    %405 = vector.load %arg6[%404, %c0_268, %c0_269] : memref<2x1x128xf32, #tpu.memory_space<vmem>>, vector<1x1x128xf32>
    %406 = vector.shape_cast %405 : vector<1x1x128xf32> to vector<1x128xf32>
    %407 = arith.addf %403, %406 : vector<1x128xf32>
    %c26 = arith.constant 26 : index
    %c0_270 = arith.constant 0 : index
    %408 = vector.load %arg26[%c26, %c0_270] : memref<32x128xf32, #tpu.memory_space<vmem>>, vector<1x128xf32>
    tpu.vector_store %arg26[%c26, %c0_270], %407 {strides = array<i32>} : memref<32x128xf32, #tpu.memory_space<vmem>>, vector<1x128xf32>,
    %409 = arith.index_cast %243 : i32 to index
    %c11_271 = arith.constant 11 : index
    %410 = memref.load %arg1[%409, %c11_271] : memref<2x16xi32, #tpu.memory_space<smem>>
    %411 = arith.index_cast %243 : i32 to index
    %c11_272 = arith.constant 11 : index
    %412 = memref.load %arg2[%411, %c11_272] : memref<2x16xi32, #tpu.memory_space<smem>>
    %413 = arith.index_cast %410 : i32 to index
    %c0_273 = arith.constant 0 : index
    %c0_274 = arith.constant 0 : index
    %414 = vector.load %arg4[%413, %c0_273, %c0_274] : memref<100x1x128xf32, #tpu.memory_space<vmem>>, vector<1x1x128xf32>
    %415 = vector.shape_cast %414 : vector<1x1x128xf32> to vector<1x128xf32>
    %c11_275 = arith.constant 11 : index
    %c0_276 = arith.constant 0 : index
    %c0_277 = arith.constant 0 : index
    %416 = vector.load %arg5[%c11_275, %c0_276, %c0_277] : memref<32x1x128xf32, #tpu.memory_space<vmem>>, vector<1x1x128xf32>
    %417 = vector.shape_cast %416 : vector<1x1x128xf32> to vector<1x128xf32>
    %418 = arith.addf %415, %417 : vector<1x128xf32>
    %419 = arith.index_cast %412 : i32 to index
    %c0_278 = arith.constant 0 : index
    %c0_279 = arith.constant 0 : index
    %420 = vector.load %arg6[%419, %c0_278, %c0_279] : memref<2x1x128xf32, #tpu.memory_space<vmem>>, vector<1x1x128xf32>
    %421 = vector.shape_cast %420 : vector<1x1x128xf32> to vector<1x128xf32>
    %422 = arith.addf %418, %421 : vector<1x128xf32>
    %c27 = arith.constant 27 : index
    %c0_280 = arith.constant 0 : index
    %423 = vector.load %arg26[%c27, %c0_280] : memref<32x128xf32, #tpu.memory_space<vmem>>, vector<1x128xf32>
    tpu.vector_store %arg26[%c27, %c0_280], %422 {strides = array<i32>} : memref<32x128xf32, #tpu.memory_space<vmem>>, vector<1x128xf32>,
    %424 = arith.index_cast %243 : i32 to index
    %c12_281 = arith.constant 12 : index
    %425 = memref.load %arg1[%424, %c12_281] : memref<2x16xi32, #tpu.memory_space<smem>>
    %426 = arith.index_cast %243 : i32 to index
    %c12_282 = arith.constant 12 : index
    %427 = memref.load %arg2[%426, %c12_282] : memref<2x16xi32, #tpu.memory_space<smem>>
    %428 = arith.index_cast %425 : i32 to index
    %c0_283 = arith.constant 0 : index
    %c0_284 = arith.constant 0 : index
    %429 = vector.load %arg4[%428, %c0_283, %c0_284] : memref<100x1x128xf32, #tpu.memory_space<vmem>>, vector<1x1x128xf32>
    %430 = vector.shape_cast %429 : vector<1x1x128xf32> to vector<1x128xf32>
    %c12_285 = arith.constant 12 : index
    %c0_286 = arith.constant 0 : index
    %c0_287 = arith.constant 0 : index
    %431 = vector.load %arg5[%c12_285, %c0_286, %c0_287] : memref<32x1x128xf32, #tpu.memory_space<vmem>>, vector<1x1x128xf32>
    %432 = vector.shape_cast %431 : vector<1x1x128xf32> to vector<1x128xf32>
    %433 = arith.addf %430, %432 : vector<1x128xf32>
    %434 = arith.index_cast %427 : i32 to index
    %c0_288 = arith.constant 0 : index
    %c0_289 = arith.constant 0 : index
    %435 = vector.load %arg6[%434, %c0_288, %c0_289] : memref<2x1x128xf32, #tpu.memory_space<vmem>>, vector<1x1x128xf32>
    %436 = vector.shape_cast %435 : vector<1x1x128xf32> to vector<1x128xf32>
    %437 = arith.addf %433, %436 : vector<1x128xf32>
    %c28 = arith.constant 28 : index
    %c0_290 = arith.constant 0 : index
    %438 = vector.load %arg26[%c28, %c0_290] : memref<32x128xf32, #tpu.memory_space<vmem>>, vector<1x128xf32>
    tpu.vector_store %arg26[%c28, %c0_290], %437 {strides = array<i32>} : memref<32x128xf32, #tpu.memory_space<vmem>>, vector<1x128xf32>,
    %439 = arith.index_cast %243 : i32 to index
    %c13_291 = arith.constant 13 : index
    %440 = memref.load %arg1[%439, %c13_291] : memref<2x16xi32, #tpu.memory_space<smem>>
    %441 = arith.index_cast %243 : i32 to index
    %c13_292 = arith.constant 13 : index
    %442 = memref.load %arg2[%441, %c13_292] : memref<2x16xi32, #tpu.memory_space<smem>>
    %443 = arith.index_cast %440 : i32 to index
    %c0_293 = arith.constant 0 : index
    %c0_294 = arith.constant 0 : index
    %444 = vector.load %arg4[%443, %c0_293, %c0_294] : memref<100x1x128xf32, #tpu.memory_space<vmem>>, vector<1x1x128xf32>
    %445 = vector.shape_cast %444 : vector<1x1x128xf32> to vector<1x128xf32>
    %c13_295 = arith.constant 13 : index
    %c0_296 = arith.constant 0 : index
    %c0_297 = arith.constant 0 : index
    %446 = vector.load %arg5[%c13_295, %c0_296, %c0_297] : memref<32x1x128xf32, #tpu.memory_space<vmem>>, vector<1x1x128xf32>
    %447 = vector.shape_cast %446 : vector<1x1x128xf32> to vector<1x128xf32>
    %448 = arith.addf %445, %447 : vector<1x128xf32>
    %449 = arith.index_cast %442 : i32 to index
    %c0_298 = arith.constant 0 : index
    %c0_299 = arith.constant 0 : index
    %450 = vector.load %arg6[%449, %c0_298, %c0_299] : memref<2x1x128xf32, #tpu.memory_space<vmem>>, vector<1x1x128xf32>
    %451 = vector.shape_cast %450 : vector<1x1x128xf32> to vector<1x128xf32>
    %452 = arith.addf %448, %451 : vector<1x128xf32>
    %c29 = arith.constant 29 : index
    %c0_300 = arith.constant 0 : index
    %453 = vector.load %arg26[%c29, %c0_300] : memref<32x128xf32, #tpu.memory_space<vmem>>, vector<1x128xf32>
    tpu.vector_store %arg26[%c29, %c0_300], %452 {strides = array<i32>} : memref<32x128xf32, #tpu.memory_space<vmem>>, vector<1x128xf32>,
    %454 = arith.index_cast %243 : i32 to index
    %c14_301 = arith.constant 14 : index
    %455 = memref.load %arg1[%454, %c14_301] : memref<2x16xi32, #tpu.memory_space<smem>>
    %456 = arith.index_cast %243 : i32 to index
    %c14_302 = arith.constant 14 : index
    %457 = memref.load %arg2[%456, %c14_302] : memref<2x16xi32, #tpu.memory_space<smem>>
    %458 = arith.index_cast %455 : i32 to index
    %c0_303 = arith.constant 0 : index
    %c0_304 = arith.constant 0 : index
    %459 = vector.load %arg4[%458, %c0_303, %c0_304] : memref<100x1x128xf32, #tpu.memory_space<vmem>>, vector<1x1x128xf32>
    %460 = vector.shape_cast %459 : vector<1x1x128xf32> to vector<1x128xf32>
    %c14_305 = arith.constant 14 : index
    %c0_306 = arith.constant 0 : index
    %c0_307 = arith.constant 0 : index
    %461 = vector.load %arg5[%c14_305, %c0_306, %c0_307] : memref<32x1x128xf32, #tpu.memory_space<vmem>>, vector<1x1x128xf32>
    %462 = vector.shape_cast %461 : vector<1x1x128xf32> to vector<1x128xf32>
    %463 = arith.addf %460, %462 : vector<1x128xf32>
    %464 = arith.index_cast %457 : i32 to index
    %c0_308 = arith.constant 0 : index
    %c0_309 = arith.constant 0 : index
    %465 = vector.load %arg6[%464, %c0_308, %c0_309] : memref<2x1x128xf32, #tpu.memory_space<vmem>>, vector<1x1x128xf32>
    %466 = vector.shape_cast %465 : vector<1x1x128xf32> to vector<1x128xf32>
    %467 = arith.addf %463, %466 : vector<1x128xf32>
    %c30 = arith.constant 30 : index
    %c0_310 = arith.constant 0 : index
    %468 = vector.load %arg26[%c30, %c0_310] : memref<32x128xf32, #tpu.memory_space<vmem>>, vector<1x128xf32>
    tpu.vector_store %arg26[%c30, %c0_310], %467 {strides = array<i32>} : memref<32x128xf32, #tpu.memory_space<vmem>>, vector<1x128xf32>,
    %469 = arith.index_cast %243 : i32 to index
    %c15_311 = arith.constant 15 : index
    %470 = memref.load %arg1[%469, %c15_311] : memref<2x16xi32, #tpu.memory_space<smem>>
    %471 = arith.index_cast %243 : i32 to index
    %c15_312 = arith.constant 15 : index
    %472 = memref.load %arg2[%471, %c15_312] : memref<2x16xi32, #tpu.memory_space<smem>>
    %473 = arith.index_cast %470 : i32 to index
    %c0_313 = arith.constant 0 : index
    %c0_314 = arith.constant 0 : index
    %474 = vector.load %arg4[%473, %c0_313, %c0_314] : memref<100x1x128xf32, #tpu.memory_space<vmem>>, vector<1x1x128xf32>
    %475 = vector.shape_cast %474 : vector<1x1x128xf32> to vector<1x128xf32>
    %c15_315 = arith.constant 15 : index
    %c0_316 = arith.constant 0 : index
    %c0_317 = arith.constant 0 : index
    %476 = vector.load %arg5[%c15_315, %c0_316, %c0_317] : memref<32x1x128xf32, #tpu.memory_space<vmem>>, vector<1x1x128xf32>
    %477 = vector.shape_cast %476 : vector<1x1x128xf32> to vector<1x128xf32>
    %478 = arith.addf %475, %477 : vector<1x128xf32>
    %479 = arith.index_cast %472 : i32 to index
    %c0_318 = arith.constant 0 : index
    %c0_319 = arith.constant 0 : index
    %480 = vector.load %arg6[%479, %c0_318, %c0_319] : memref<2x1x128xf32, #tpu.memory_space<vmem>>, vector<1x1x128xf32>
    %481 = vector.shape_cast %480 : vector<1x1x128xf32> to vector<1x128xf32>
    %482 = arith.addf %478, %481 : vector<1x128xf32>
    %c31 = arith.constant 31 : index
    %c0_320 = arith.constant 0 : index
    %483 = vector.load %arg26[%c31, %c0_320] : memref<32x128xf32, #tpu.memory_space<vmem>>, vector<1x128xf32>
    tpu.vector_store %arg26[%c31, %c0_320], %482 {strides = array<i32>} : memref<32x128xf32, #tpu.memory_space<vmem>>, vector<1x128xf32>,
    %c0_321 = arith.constant 0 : index
    %c0_322 = arith.constant 0 : index
    %484 = vector.load %arg26[%c0_321, %c0_322] : memref<32x128xf32, #tpu.memory_space<vmem>>, vector<32x128xf32>
    %c0_323 = arith.constant 0 : index
    %c0_324 = arith.constant 0 : index
    %485 = vector.load %arg7[%c0_323, %c0_324] : memref<1x128xf32, #tpu.memory_space<vmem>>, vector<1x128xf32>
    %c0_325 = arith.constant 0 : index
    %c0_326 = arith.constant 0 : index
    %486 = vector.load %arg8[%c0_325, %c0_326] : memref<1x128xf32, #tpu.memory_space<vmem>>, vector<1x128xf32>
    %cst = arith.constant dense<0.000000e+00> : vector<32xf32>
    %487 = vector.multi_reduction <add>, %484, %cst [1] : vector<32x128xf32> to vector<32xf32>
    %488 = vector.shape_cast %487 : vector<32xf32> to vector<32x1xf32>
    %cst_327 = arith.constant 1.280000e+02 : f32
    %489 = vector.broadcast %cst_327 : f32 to vector<32x1xf32>
    %490 = arith.divf %488, %489 : vector<32x1xf32>
    %491 = vector.broadcast %490 : vector<32x1xf32> to vector<32x128xf32>
    %492 = arith.subf %484, %491 : vector<32x128xf32>
    %493 = arith.mulf %492, %492 : vector<32x128xf32>
    %cst_328 = arith.constant dense<0.000000e+00> : vector<32xf32>
    %494 = vector.multi_reduction <add>, %493, %cst_328 [1] : vector<32x128xf32> to vector<32xf32>
    %495 = vector.shape_cast %494 : vector<32xf32> to vector<32x1xf32>
    %cst_329 = arith.constant 1.280000e+02 : f32
    %496 = vector.broadcast %cst_329 : f32 to vector<32x1xf32>
    %497 = arith.divf %495, %496 : vector<32x1xf32>
    %498 = vector.broadcast %490 : vector<32x1xf32> to vector<32x128xf32>
    %499 = arith.subf %484, %498 : vector<32x128xf32>
    %cst_330 = arith.constant 9.99999996E-13 : f32
    %500 = vector.broadcast %cst_330 : f32 to vector<32x1xf32>
    %501 = arith.addf %497, %500 : vector<32x1xf32>
    %502 = math.rsqrt %501 : vector<32x1xf32>
    %503 = vector.broadcast %502 : vector<32x1xf32> to vector<32x128xf32>
    %504 = arith.mulf %499, %503 : vector<32x128xf32>
    %505 = vector.broadcast %485 : vector<1x128xf32> to vector<32x128xf32>
    %506 = arith.mulf %504, %505 : vector<32x128xf32>
    %507 = vector.broadcast %486 : vector<1x128xf32> to vector<32x128xf32>
    %508 = arith.addf %506, %507 : vector<32x128xf32>
    %c0_331 = arith.constant 0 : index
    %c0_332 = arith.constant 0 : index
    %c0_333 = arith.constant 0 : index
    %509 = vector.load %arg3[%c0_331, %c0_332, %c0_333] : memref<2x1x16xi32, #tpu.memory_space<vmem>>, vector<2x1x16xi32>
    %510 = arith.sitofp %509 : vector<2x1x16xi32> to vector<2x1x16xf32>
    %cst_334 = arith.constant 1.000000e+00 : f32
    %511 = vector.broadcast %cst_334 : f32 to vector<2x1x16xf32>
    %512 = arith.subf %511, %510 : vector<2x1x16xf32>
    %cst_335 = arith.constant -1.000000e+09 : f32
    %513 = vector.broadcast %cst_335 : f32 to vector<2x1x16xf32>
    %514 = arith.mulf %512, %513 : vector<2x1x16xf32>
    %515 = arith.truncf %508 : vector<32x128xf32> to vector<32x128xbf16>
    %c0_336 = arith.constant 0 : index
    %c0_337 = arith.constant 0 : index
    %c0_338 = arith.constant 0 : index
    %516 = vector.load %arg9[%c0_336, %c0_337, %c0_338] : memref<2x128x384xbf16, #tpu.memory_space<vmem>>, vector<1x128x384xbf16>
    %517 = vector.shape_cast %516 : vector<1x128x384xbf16> to vector<128x384xbf16>
    %cst_339 = arith.constant dense<0.000000e+00> : vector<32x384xf32>
    %518 = tpu.matmul %515, %517, %cst_339 {dimension_numbers = #tpu.dot_dimension_numbers<[1], [0], [0], [1], [0, 0, 1, 1], [], []>} : vector<32x128xbf16>, vector<128x384xbf16>, vector<32x384xf32> -> vector<32x384xf32>
    %c0_340 = arith.constant 0 : index
    %c0_341 = arith.constant 0 : index
    %c0_342 = arith.constant 0 : index
    %519 = vector.load %arg10[%c0_340, %c0_341, %c0_342] : memref<2x1x384xf32, #tpu.memory_space<vmem>>, vector<1x1x384xf32>
    %520 = vector.shape_cast %519 : vector<1x1x384xf32> to vector<1x384xf32>
    %521 = vector.broadcast %520 : vector<1x384xf32> to vector<32x384xf32>
    %522 = arith.addf %518, %521 : vector<32x384xf32>
    %523 = arith.truncf %522 : vector<32x384xf32> to vector<32x384xbf16>
    %524 = vector.extract_strided_slice %514 {offsets = [0, 0, 0], sizes = [1, 1, 16], strides = [1, 1, 1]} : vector<2x1x16xf32> to vector<1x1x16xf32>
    %525 = vector.shape_cast %524 : vector<1x1x16xf32> to vector<1x16xf32>
    %526 = vector.extract_strided_slice %523 {offsets = [0, 0], sizes = [16, 64], strides = [1, 1]} : vector<32x384xbf16> to vector<16x64xbf16>
    %527 = vector.extract_strided_slice %523 {offsets = [0, 128], sizes = [16, 64], strides = [1, 1]} : vector<32x384xbf16> to vector<16x64xbf16>
    %528 = vector.extract_strided_slice %523 {offsets = [0, 256], sizes = [16, 64], strides = [1, 1]} : vector<32x384xbf16> to vector<16x64xbf16>
    %cst_343 = arith.constant dense<0.000000e+00> : vector<16x16xf32>
    %529 = tpu.matmul %526, %527, %cst_343 {dimension_numbers = #tpu.dot_dimension_numbers<[1], [1], [0], [0], [0, 0, 1, 0], [], []>} : vector<16x64xbf16>, vector<16x64xbf16>, vector<16x16xf32> -> vector<16x16xf32>
    %cst_344 = arith.constant 1.250000e-01 : f32
    %530 = vector.broadcast %cst_344 : f32 to vector<16x16xf32>
    %531 = arith.mulf %529, %530 : vector<16x16xf32>
    %532 = vector.broadcast %525 : vector<1x16xf32> to vector<16x16xf32>
    %533 = arith.addf %531, %532 : vector<16x16xf32>
    %cst_345 = arith.constant dense<0xFF800000> : vector<16xf32>
    %534 = vector.multi_reduction <maximumf>, %533, %cst_345 [1] : vector<16x16xf32> to vector<16xf32>
    %535 = vector.shape_cast %534 : vector<16xf32> to vector<16x1xf32>
    %536 = vector.broadcast %535 : vector<16x1xf32> to vector<16x16xf32>
    %537 = arith.subf %533, %536 : vector<16x16xf32>
    %538 = math.exp %537 : vector<16x16xf32>
    %cst_346 = arith.constant dense<0.000000e+00> : vector<16xf32>
    %539 = vector.multi_reduction <add>, %538, %cst_346 [1] : vector<16x16xf32> to vector<16xf32>
    %540 = vector.shape_cast %539 : vector<16xf32> to vector<16x1xf32>
    %541 = tpu.reciprocal %540 {approx = true} : vector<16x1xf32> -> vector<16x1xf32>
    %542 = vector.broadcast %541 : vector<16x1xf32> to vector<16x16xf32>
    %543 = arith.mulf %538, %542 : vector<16x16xf32>
    %544 = arith.truncf %543 : vector<16x16xf32> to vector<16x16xbf16>
    %cst_347 = arith.constant dense<0.000000e+00> : vector<16x64xf32>
    %545 = tpu.matmul %544, %528, %cst_347 {dimension_numbers = #tpu.dot_dimension_numbers<[1], [0], [0], [1], [0, 0, 1, 1], [], []>} : vector<16x16xbf16>, vector<16x64xbf16>, vector<16x64xf32> -> vector<16x64xf32>
    %546 = arith.truncf %545 : vector<16x64xf32> to vector<16x64xbf16>
    %c0_348 = arith.constant 0 : index
    %c0_349 = arith.constant 0 : index
    %c0_350 = arith.constant 0 : index
    %547 = vector.load %arg11[%c0_348, %c0_349, %c0_350] : memref<2x128x128xbf16, #tpu.memory_space<vmem>>, vector<1x64x128xbf16>
    %548 = vector.shape_cast %547 : vector<1x64x128xbf16> to vector<64x128xbf16>
    %cst_351 = arith.constant dense<0.000000e+00> : vector<16x128xf32>
    %549 = tpu.matmul %546, %548, %cst_351 {dimension_numbers = #tpu.dot_dimension_numbers<[1], [0], [0], [1], [0, 0, 1, 1], [], []>} : vector<16x64xbf16>, vector<64x128xbf16>, vector<16x128xf32> -> vector<16x128xf32>
    %550 = vector.extract_strided_slice %523 {offsets = [0, 64], sizes = [16, 64], strides = [1, 1]} : vector<32x384xbf16> to vector<16x64xbf16>
    %551 = vector.extract_strided_slice %523 {offsets = [0, 192], sizes = [16, 64], strides = [1, 1]} : vector<32x384xbf16> to vector<16x64xbf16>
    %552 = vector.extract_strided_slice %523 {offsets = [0, 320], sizes = [16, 64], strides = [1, 1]} : vector<32x384xbf16> to vector<16x64xbf16>
    %cst_352 = arith.constant dense<0.000000e+00> : vector<16x16xf32>
    %553 = tpu.matmul %550, %551, %cst_352 {dimension_numbers = #tpu.dot_dimension_numbers<[1], [1], [0], [0], [0, 0, 1, 0], [], []>} : vector<16x64xbf16>, vector<16x64xbf16>, vector<16x16xf32> -> vector<16x16xf32>
    %cst_353 = arith.constant 1.250000e-01 : f32
    %554 = vector.broadcast %cst_353 : f32 to vector<16x16xf32>
    %555 = arith.mulf %553, %554 : vector<16x16xf32>
    %556 = vector.broadcast %525 : vector<1x16xf32> to vector<16x16xf32>
    %557 = arith.addf %555, %556 : vector<16x16xf32>
    %cst_354 = arith.constant dense<0xFF800000> : vector<16xf32>
    %558 = vector.multi_reduction <maximumf>, %557, %cst_354 [1] : vector<16x16xf32> to vector<16xf32>
    %559 = vector.shape_cast %558 : vector<16xf32> to vector<16x1xf32>
    %560 = vector.broadcast %559 : vector<16x1xf32> to vector<16x16xf32>
    %561 = arith.subf %557, %560 : vector<16x16xf32>
    %562 = math.exp %561 : vector<16x16xf32>
    %cst_355 = arith.constant dense<0.000000e+00> : vector<16xf32>
    %563 = vector.multi_reduction <add>, %562, %cst_355 [1] : vector<16x16xf32> to vector<16xf32>
    %564 = vector.shape_cast %563 : vector<16xf32> to vector<16x1xf32>
    %565 = tpu.reciprocal %564 {approx = true} : vector<16x1xf32> -> vector<16x1xf32>
    %566 = vector.broadcast %565 : vector<16x1xf32> to vector<16x16xf32>
    %567 = arith.mulf %562, %566 : vector<16x16xf32>
    %568 = arith.truncf %567 : vector<16x16xf32> to vector<16x16xbf16>
    %cst_356 = arith.constant dense<0.000000e+00> : vector<16x64xf32>
    %569 = tpu.matmul %568, %552, %cst_356 {dimension_numbers = #tpu.dot_dimension_numbers<[1], [0], [0], [1], [0, 0, 1, 1], [], []>} : vector<16x16xbf16>, vector<16x64xbf16>, vector<16x64xf32> -> vector<16x64xf32>
    %570 = arith.truncf %569 : vector<16x64xf32> to vector<16x64xbf16>
    %c0_357 = arith.constant 0 : index
    %c64 = arith.constant 64 : index
    %c0_358 = arith.constant 0 : index
    %571 = vector.load %arg11[%c0_357, %c64, %c0_358] : memref<2x128x128xbf16, #tpu.memory_space<vmem>>, vector<1x64x128xbf16>
    %572 = vector.shape_cast %571 : vector<1x64x128xbf16> to vector<64x128xbf16>
    %cst_359 = arith.constant dense<0.000000e+00> : vector<16x128xf32>
    %573 = tpu.matmul %570, %572, %cst_359 {dimension_numbers = #tpu.dot_dimension_numbers<[1], [0], [0], [1], [0, 0, 1, 1], [], []>} : vector<16x64xbf16>, vector<64x128xbf16>, vector<16x128xf32> -> vector<16x128xf32>
    %574 = arith.addf %549, %573 : vector<16x128xf32>
    %c0_360 = arith.constant 0 : index
    %c0_361 = arith.constant 0 : index
    %575 = vector.load %arg26[%c0_360, %c0_361] : memref<32x128xf32, #tpu.memory_space<vmem>>, vector<16x128xf32>
    tpu.vector_store %arg26[%c0_360, %c0_361], %574 {strides = array<i32>} : memref<32x128xf32, #tpu.memory_space<vmem>>, vector<16x128xf32>,
    %576 = vector.extract_strided_slice %514 {offsets = [1, 0, 0], sizes = [1, 1, 16], strides = [1, 1, 1]} : vector<2x1x16xf32> to vector<1x1x16xf32>
    %577 = vector.shape_cast %576 : vector<1x1x16xf32> to vector<1x16xf32>
    %578 = vector.extract_strided_slice %523 {offsets = [16, 0], sizes = [16, 64], strides = [1, 1]} : vector<32x384xbf16> to vector<16x64xbf16>
    %579 = vector.extract_strided_slice %523 {offsets = [16, 128], sizes = [16, 64], strides = [1, 1]} : vector<32x384xbf16> to vector<16x64xbf16>
    %580 = vector.extract_strided_slice %523 {offsets = [16, 256], sizes = [16, 64], strides = [1, 1]} : vector<32x384xbf16> to vector<16x64xbf16>
    %cst_362 = arith.constant dense<0.000000e+00> : vector<16x16xf32>
    %581 = tpu.matmul %578, %579, %cst_362 {dimension_numbers = #tpu.dot_dimension_numbers<[1], [1], [0], [0], [0, 0, 1, 0], [], []>} : vector<16x64xbf16>, vector<16x64xbf16>, vector<16x16xf32> -> vector<16x16xf32>
    %cst_363 = arith.constant 1.250000e-01 : f32
    %582 = vector.broadcast %cst_363 : f32 to vector<16x16xf32>
    %583 = arith.mulf %581, %582 : vector<16x16xf32>
    %584 = vector.broadcast %577 : vector<1x16xf32> to vector<16x16xf32>
    %585 = arith.addf %583, %584 : vector<16x16xf32>
    %cst_364 = arith.constant dense<0xFF800000> : vector<16xf32>
    %586 = vector.multi_reduction <maximumf>, %585, %cst_364 [1] : vector<16x16xf32> to vector<16xf32>
    %587 = vector.shape_cast %586 : vector<16xf32> to vector<16x1xf32>
    %588 = vector.broadcast %587 : vector<16x1xf32> to vector<16x16xf32>
    %589 = arith.subf %585, %588 : vector<16x16xf32>
    %590 = math.exp %589 : vector<16x16xf32>
    %cst_365 = arith.constant dense<0.000000e+00> : vector<16xf32>
    %591 = vector.multi_reduction <add>, %590, %cst_365 [1] : vector<16x16xf32> to vector<16xf32>
    %592 = vector.shape_cast %591 : vector<16xf32> to vector<16x1xf32>
    %593 = tpu.reciprocal %592 {approx = true} : vector<16x1xf32> -> vector<16x1xf32>
    %594 = vector.broadcast %593 : vector<16x1xf32> to vector<16x16xf32>
    %595 = arith.mulf %590, %594 : vector<16x16xf32>
    %596 = arith.truncf %595 : vector<16x16xf32> to vector<16x16xbf16>
    %cst_366 = arith.constant dense<0.000000e+00> : vector<16x64xf32>
    %597 = tpu.matmul %596, %580, %cst_366 {dimension_numbers = #tpu.dot_dimension_numbers<[1], [0], [0], [1], [0, 0, 1, 1], [], []>} : vector<16x16xbf16>, vector<16x64xbf16>, vector<16x64xf32> -> vector<16x64xf32>
    %598 = arith.truncf %597 : vector<16x64xf32> to vector<16x64xbf16>
    %c0_367 = arith.constant 0 : index
    %c0_368 = arith.constant 0 : index
    %c0_369 = arith.constant 0 : index
    %599 = vector.load %arg11[%c0_367, %c0_368, %c0_369] : memref<2x128x128xbf16, #tpu.memory_space<vmem>>, vector<1x64x128xbf16>
    %600 = vector.shape_cast %599 : vector<1x64x128xbf16> to vector<64x128xbf16>
    %cst_370 = arith.constant dense<0.000000e+00> : vector<16x128xf32>
    %601 = tpu.matmul %598, %600, %cst_370 {dimension_numbers = #tpu.dot_dimension_numbers<[1], [0], [0], [1], [0, 0, 1, 1], [], []>} : vector<16x64xbf16>, vector<64x128xbf16>, vector<16x128xf32> -> vector<16x128xf32>
    %602 = vector.extract_strided_slice %523 {offsets = [16, 64], sizes = [16, 64], strides = [1, 1]} : vector<32x384xbf16> to vector<16x64xbf16>
    %603 = vector.extract_strided_slice %523 {offsets = [16, 192], sizes = [16, 64], strides = [1, 1]} : vector<32x384xbf16> to vector<16x64xbf16>
    %604 = vector.extract_strided_slice %523 {offsets = [16, 320], sizes = [16, 64], strides = [1, 1]} : vector<32x384xbf16> to vector<16x64xbf16>
    %cst_371 = arith.constant dense<0.000000e+00> : vector<16x16xf32>
    %605 = tpu.matmul %602, %603, %cst_371 {dimension_numbers = #tpu.dot_dimension_numbers<[1], [1], [0], [0], [0, 0, 1, 0], [], []>} : vector<16x64xbf16>, vector<16x64xbf16>, vector<16x16xf32> -> vector<16x16xf32>
    %cst_372 = arith.constant 1.250000e-01 : f32
    %606 = vector.broadcast %cst_372 : f32 to vector<16x16xf32>
    %607 = arith.mulf %605, %606 : vector<16x16xf32>
    %608 = vector.broadcast %577 : vector<1x16xf32> to vector<16x16xf32>
    %609 = arith.addf %607, %608 : vector<16x16xf32>
    %cst_373 = arith.constant dense<0xFF800000> : vector<16xf32>
    %610 = vector.multi_reduction <maximumf>, %609, %cst_373 [1] : vector<16x16xf32> to vector<16xf32>
    %611 = vector.shape_cast %610 : vector<16xf32> to vector<16x1xf32>
    %612 = vector.broadcast %611 : vector<16x1xf32> to vector<16x16xf32>
    %613 = arith.subf %609, %612 : vector<16x16xf32>
    %614 = math.exp %613 : vector<16x16xf32>
    %cst_374 = arith.constant dense<0.000000e+00> : vector<16xf32>
    %615 = vector.multi_reduction <add>, %614, %cst_374 [1] : vector<16x16xf32> to vector<16xf32>
    %616 = vector.shape_cast %615 : vector<16xf32> to vector<16x1xf32>
    %617 = tpu.reciprocal %616 {approx = true} : vector<16x1xf32> -> vector<16x1xf32>
    %618 = vector.broadcast %617 : vector<16x1xf32> to vector<16x16xf32>
    %619 = arith.mulf %614, %618 : vector<16x16xf32>
    %620 = arith.truncf %619 : vector<16x16xf32> to vector<16x16xbf16>
    %cst_375 = arith.constant dense<0.000000e+00> : vector<16x64xf32>
    %621 = tpu.matmul %620, %604, %cst_375 {dimension_numbers = #tpu.dot_dimension_numbers<[1], [0], [0], [1], [0, 0, 1, 1], [], []>} : vector<16x16xbf16>, vector<16x64xbf16>, vector<16x64xf32> -> vector<16x64xf32>
    %622 = arith.truncf %621 : vector<16x64xf32> to vector<16x64xbf16>
    %c0_376 = arith.constant 0 : index
    %c64_377 = arith.constant 64 : index
    %c0_378 = arith.constant 0 : index
    %623 = vector.load %arg11[%c0_376, %c64_377, %c0_378] : memref<2x128x128xbf16, #tpu.memory_space<vmem>>, vector<1x64x128xbf16>
    %624 = vector.shape_cast %623 : vector<1x64x128xbf16> to vector<64x128xbf16>
    %cst_379 = arith.constant dense<0.000000e+00> : vector<16x128xf32>
    %625 = tpu.matmul %622, %624, %cst_379 {dimension_numbers = #tpu.dot_dimension_numbers<[1], [0], [0], [1], [0, 0, 1, 1], [], []>} : vector<16x64xbf16>, vector<64x128xbf16>, vector<16x128xf32> -> vector<16x128xf32>
    %626 = arith.addf %601, %625 : vector<16x128xf32>
    %c16_380 = arith.constant 16 : index
    %c0_381 = arith.constant 0 : index
    %627 = vector.load %arg26[%c16_380, %c0_381] : memref<32x128xf32, #tpu.memory_space<vmem>>, vector<16x128xf32>
    tpu.vector_store %arg26[%c16_380, %c0_381], %626 {strides = array<i32>} : memref<32x128xf32, #tpu.memory_space<vmem>>, vector<16x128xf32>,
    %c0_382 = arith.constant 0 : index
    %c0_383 = arith.constant 0 : index
    %628 = vector.load %arg26[%c0_382, %c0_383] : memref<32x128xf32, #tpu.memory_space<vmem>>, vector<32x128xf32>
    %c0_384 = arith.constant 0 : index
    %c0_385 = arith.constant 0 : index
    %c0_386 = arith.constant 0 : index
    %629 = vector.load %arg12[%c0_384, %c0_385, %c0_386] : memref<2x1x128xf32, #tpu.memory_space<vmem>>, vector<1x1x128xf32>
    %630 = vector.shape_cast %629 : vector<1x1x128xf32> to vector<1x128xf32>
    %631 = vector.broadcast %630 : vector<1x128xf32> to vector<32x128xf32>
    %632 = arith.addf %628, %631 : vector<32x128xf32>
    %633 = arith.addf %632, %508 : vector<32x128xf32>
    %c0_387 = arith.constant 0 : index
    %c0_388 = arith.constant 0 : index
    %c0_389 = arith.constant 0 : index
    %634 = vector.load %arg17[%c0_387, %c0_388, %c0_389] : memref<2x1x128xf32, #tpu.memory_space<vmem>>, vector<1x1x128xf32>
    %635 = vector.shape_cast %634 : vector<1x1x128xf32> to vector<1x128xf32>
    %c0_390 = arith.constant 0 : index
    %c0_391 = arith.constant 0 : index
    %c0_392 = arith.constant 0 : index
    %636 = vector.load %arg18[%c0_390, %c0_391, %c0_392] : memref<2x1x128xf32, #tpu.memory_space<vmem>>, vector<1x1x128xf32>
    %637 = vector.shape_cast %636 : vector<1x1x128xf32> to vector<1x128xf32>
    %cst_393 = arith.constant dense<0.000000e+00> : vector<32xf32>
    %638 = vector.multi_reduction <add>, %633, %cst_393 [1] : vector<32x128xf32> to vector<32xf32>
    %639 = vector.shape_cast %638 : vector<32xf32> to vector<32x1xf32>
    %cst_394 = arith.constant 1.280000e+02 : f32
    %640 = vector.broadcast %cst_394 : f32 to vector<32x1xf32>
    %641 = arith.divf %639, %640 : vector<32x1xf32>
    %642 = vector.broadcast %641 : vector<32x1xf32> to vector<32x128xf32>
    %643 = arith.subf %633, %642 : vector<32x128xf32>
    %644 = arith.mulf %643, %643 : vector<32x128xf32>
    %cst_395 = arith.constant dense<0.000000e+00> : vector<32xf32>
    %645 = vector.multi_reduction <add>, %644, %cst_395 [1] : vector<32x128xf32> to vector<32xf32>
    %646 = vector.shape_cast %645 : vector<32xf32> to vector<32x1xf32>
    %cst_396 = arith.constant 1.280000e+02 : f32
    %647 = vector.broadcast %cst_396 : f32 to vector<32x1xf32>
    %648 = arith.divf %646, %647 : vector<32x1xf32>
    %649 = vector.broadcast %641 : vector<32x1xf32> to vector<32x128xf32>
    %650 = arith.subf %633, %649 : vector<32x128xf32>
    %cst_397 = arith.constant 9.99999996E-13 : f32
    %651 = vector.broadcast %cst_397 : f32 to vector<32x1xf32>
    %652 = arith.addf %648, %651 : vector<32x1xf32>
    %653 = math.rsqrt %652 : vector<32x1xf32>
    %654 = vector.broadcast %653 : vector<32x1xf32> to vector<32x128xf32>
    %655 = arith.mulf %650, %654 : vector<32x128xf32>
    %656 = vector.broadcast %635 : vector<1x128xf32> to vector<32x128xf32>
    %657 = arith.mulf %655, %656 : vector<32x128xf32>
    %658 = vector.broadcast %637 : vector<1x128xf32> to vector<32x128xf32>
    %659 = arith.addf %657, %658 : vector<32x128xf32>
    %660 = arith.truncf %659 : vector<32x128xf32> to vector<32x128xbf16>
    %c0_398 = arith.constant 0 : index
    %c0_399 = arith.constant 0 : index
    %c0_400 = arith.constant 0 : index
    %661 = vector.load %arg13[%c0_398, %c0_399, %c0_400] : memref<2x128x256xbf16, #tpu.memory_space<vmem>>, vector<1x128x256xbf16>
    %662 = vector.shape_cast %661 : vector<1x128x256xbf16> to vector<128x256xbf16>
    %cst_401 = arith.constant dense<0.000000e+00> : vector<32x256xf32>
    %663 = tpu.matmul %660, %662, %cst_401 {dimension_numbers = #tpu.dot_dimension_numbers<[1], [0], [0], [1], [0, 0, 1, 1], [], []>} : vector<32x128xbf16>, vector<128x256xbf16>, vector<32x256xf32> -> vector<32x256xf32>
    %c0_402 = arith.constant 0 : index
    %c0_403 = arith.constant 0 : index
    %c0_404 = arith.constant 0 : index
    %664 = vector.load %arg14[%c0_402, %c0_403, %c0_404] : memref<2x1x256xf32, #tpu.memory_space<vmem>>, vector<1x1x256xf32>
    %665 = vector.shape_cast %664 : vector<1x1x256xf32> to vector<1x256xf32>
    %666 = vector.broadcast %665 : vector<1x256xf32> to vector<32x256xf32>
    %667 = arith.addf %663, %666 : vector<32x256xf32>
    %668 = arith.mulf %667, %667 : vector<32x256xf32>
    %669 = arith.mulf %667, %668 : vector<32x256xf32>
    %cst_405 = arith.constant 4.471500e-02 : f32
    %670 = vector.broadcast %cst_405 : f32 to vector<32x256xf32>
    %671 = arith.mulf %670, %669 : vector<32x256xf32>
    %672 = arith.addf %667, %671 : vector<32x256xf32>
    %cst_406 = arith.constant 0.797884583 : f32
    %673 = vector.broadcast %cst_406 : f32 to vector<32x256xf32>
    %674 = arith.mulf %673, %672 : vector<32x256xf32>
    %675 = math.tanh %674 : vector<32x256xf32>
    %cst_407 = arith.constant 1.000000e+00 : f32
    %676 = vector.broadcast %cst_407 : f32 to vector<32x256xf32>
    %677 = arith.addf %676, %675 : vector<32x256xf32>
    %cst_408 = arith.constant 5.000000e-01 : f32
    %678 = vector.broadcast %cst_408 : f32 to vector<32x256xf32>
    %679 = arith.mulf %678, %677 : vector<32x256xf32>
    %680 = arith.mulf %667, %679 : vector<32x256xf32>
    %681 = arith.truncf %680 : vector<32x256xf32> to vector<32x256xbf16>
    %c0_409 = arith.constant 0 : index
    %c0_410 = arith.constant 0 : index
    %c0_411 = arith.constant 0 : index
    %682 = vector.load %arg15[%c0_409, %c0_410, %c0_411] : memref<2x256x128xbf16, #tpu.memory_space<vmem>>, vector<1x256x128xbf16>
    %683 = vector.shape_cast %682 : vector<1x256x128xbf16> to vector<256x128xbf16>
    %cst_412 = arith.constant dense<0.000000e+00> : vector<32x128xf32>
    %684 = tpu.matmul %681, %683, %cst_412 {dimension_numbers = #tpu.dot_dimension_numbers<[1], [0], [0], [1], [0, 0, 1, 1], [], []>} : vector<32x256xbf16>, vector<256x128xbf16>, vector<32x128xf32> -> vector<32x128xf32>
    %c0_413 = arith.constant 0 : index
    %c0_414 = arith.constant 0 : index
    %c0_415 = arith.constant 0 : index
    %685 = vector.load %arg16[%c0_413, %c0_414, %c0_415] : memref<2x1x128xf32, #tpu.memory_space<vmem>>, vector<1x1x128xf32>
    %686 = vector.shape_cast %685 : vector<1x1x128xf32> to vector<1x128xf32>
    %687 = vector.broadcast %686 : vector<1x128xf32> to vector<32x128xf32>
    %688 = arith.addf %684, %687 : vector<32x128xf32>
    %689 = arith.addf %688, %659 : vector<32x128xf32>
    %c0_416 = arith.constant 0 : index
    %c0_417 = arith.constant 0 : index
    %c0_418 = arith.constant 0 : index
    %690 = vector.load %arg19[%c0_416, %c0_417, %c0_418] : memref<2x1x128xf32, #tpu.memory_space<vmem>>, vector<1x1x128xf32>
    %691 = vector.shape_cast %690 : vector<1x1x128xf32> to vector<1x128xf32>
    %c0_419 = arith.constant 0 : index
    %c0_420 = arith.constant 0 : index
    %c0_421 = arith.constant 0 : index
    %692 = vector.load %arg20[%c0_419, %c0_420, %c0_421] : memref<2x1x128xf32, #tpu.memory_space<vmem>>, vector<1x1x128xf32>
    %693 = vector.shape_cast %692 : vector<1x1x128xf32> to vector<1x128xf32>
    %cst_422 = arith.constant dense<0.000000e+00> : vector<32xf32>
    %694 = vector.multi_reduction <add>, %689, %cst_422 [1] : vector<32x128xf32> to vector<32xf32>
    %695 = vector.shape_cast %694 : vector<32xf32> to vector<32x1xf32>
    %cst_423 = arith.constant 1.280000e+02 : f32
    %696 = vector.broadcast %cst_423 : f32 to vector<32x1xf32>
    %697 = arith.divf %695, %696 : vector<32x1xf32>
    %698 = vector.broadcast %697 : vector<32x1xf32> to vector<32x128xf32>
    %699 = arith.subf %689, %698 : vector<32x128xf32>
    %700 = arith.mulf %699, %699 : vector<32x128xf32>
    %cst_424 = arith.constant dense<0.000000e+00> : vector<32xf32>
    %701 = vector.multi_reduction <add>, %700, %cst_424 [1] : vector<32x128xf32> to vector<32xf32>
    %702 = vector.shape_cast %701 : vector<32xf32> to vector<32x1xf32>
    %cst_425 = arith.constant 1.280000e+02 : f32
    %703 = vector.broadcast %cst_425 : f32 to vector<32x1xf32>
    %704 = arith.divf %702, %703 : vector<32x1xf32>
    %705 = vector.broadcast %697 : vector<32x1xf32> to vector<32x128xf32>
    %706 = arith.subf %689, %705 : vector<32x128xf32>
    %cst_426 = arith.constant 9.99999996E-13 : f32
    %707 = vector.broadcast %cst_426 : f32 to vector<32x1xf32>
    %708 = arith.addf %704, %707 : vector<32x1xf32>
    %709 = math.rsqrt %708 : vector<32x1xf32>
    %710 = vector.broadcast %709 : vector<32x1xf32> to vector<32x128xf32>
    %711 = arith.mulf %706, %710 : vector<32x128xf32>
    %712 = vector.broadcast %691 : vector<1x128xf32> to vector<32x128xf32>
    %713 = arith.mulf %711, %712 : vector<32x128xf32>
    %714 = vector.broadcast %693 : vector<1x128xf32> to vector<32x128xf32>
    %715 = arith.addf %713, %714 : vector<32x128xf32>
    %716 = arith.truncf %715 : vector<32x128xf32> to vector<32x128xbf16>
    %c1_427 = arith.constant 1 : index
    %c0_428 = arith.constant 0 : index
    %c0_429 = arith.constant 0 : index
    %717 = vector.load %arg9[%c1_427, %c0_428, %c0_429] : memref<2x128x384xbf16, #tpu.memory_space<vmem>>, vector<1x128x384xbf16>
    %718 = vector.shape_cast %717 : vector<1x128x384xbf16> to vector<128x384xbf16>
    %cst_430 = arith.constant dense<0.000000e+00> : vector<32x384xf32>
    %719 = tpu.matmul %716, %718, %cst_430 {dimension_numbers = #tpu.dot_dimension_numbers<[1], [0], [0], [1], [0, 0, 1, 1], [], []>} : vector<32x128xbf16>, vector<128x384xbf16>, vector<32x384xf32> -> vector<32x384xf32>
    %c1_431 = arith.constant 1 : index
    %c0_432 = arith.constant 0 : index
    %c0_433 = arith.constant 0 : index
    %720 = vector.load %arg10[%c1_431, %c0_432, %c0_433] : memref<2x1x384xf32, #tpu.memory_space<vmem>>, vector<1x1x384xf32>
    %721 = vector.shape_cast %720 : vector<1x1x384xf32> to vector<1x384xf32>
    %722 = vector.broadcast %721 : vector<1x384xf32> to vector<32x384xf32>
    %723 = arith.addf %719, %722 : vector<32x384xf32>
    %724 = arith.truncf %723 : vector<32x384xf32> to vector<32x384xbf16>
    %725 = vector.extract_strided_slice %514 {offsets = [0, 0, 0], sizes = [1, 1, 16], strides = [1, 1, 1]} : vector<2x1x16xf32> to vector<1x1x16xf32>
    %726 = vector.shape_cast %725 : vector<1x1x16xf32> to vector<1x16xf32>
    %727 = vector.extract_strided_slice %724 {offsets = [0, 0], sizes = [16, 64], strides = [1, 1]} : vector<32x384xbf16> to vector<16x64xbf16>
    %728 = vector.extract_strided_slice %724 {offsets = [0, 128], sizes = [16, 64], strides = [1, 1]} : vector<32x384xbf16> to vector<16x64xbf16>
    %729 = vector.extract_strided_slice %724 {offsets = [0, 256], sizes = [16, 64], strides = [1, 1]} : vector<32x384xbf16> to vector<16x64xbf16>
    %cst_434 = arith.constant dense<0.000000e+00> : vector<16x16xf32>
    %730 = tpu.matmul %727, %728, %cst_434 {dimension_numbers = #tpu.dot_dimension_numbers<[1], [1], [0], [0], [0, 0, 1, 0], [], []>} : vector<16x64xbf16>, vector<16x64xbf16>, vector<16x16xf32> -> vector<16x16xf32>
    %cst_435 = arith.constant 1.250000e-01 : f32
    %731 = vector.broadcast %cst_435 : f32 to vector<16x16xf32>
    %732 = arith.mulf %730, %731 : vector<16x16xf32>
    %733 = vector.broadcast %726 : vector<1x16xf32> to vector<16x16xf32>
    %734 = arith.addf %732, %733 : vector<16x16xf32>
    %cst_436 = arith.constant dense<0xFF800000> : vector<16xf32>
    %735 = vector.multi_reduction <maximumf>, %734, %cst_436 [1] : vector<16x16xf32> to vector<16xf32>
    %736 = vector.shape_cast %735 : vector<16xf32> to vector<16x1xf32>
    %737 = vector.broadcast %736 : vector<16x1xf32> to vector<16x16xf32>
    %738 = arith.subf %734, %737 : vector<16x16xf32>
    %739 = math.exp %738 : vector<16x16xf32>
    %cst_437 = arith.constant dense<0.000000e+00> : vector<16xf32>
    %740 = vector.multi_reduction <add>, %739, %cst_437 [1] : vector<16x16xf32> to vector<16xf32>
    %741 = vector.shape_cast %740 : vector<16xf32> to vector<16x1xf32>
    %742 = tpu.reciprocal %741 {approx = true} : vector<16x1xf32> -> vector<16x1xf32>
    %743 = vector.broadcast %742 : vector<16x1xf32> to vector<16x16xf32>
    %744 = arith.mulf %739, %743 : vector<16x16xf32>
    %745 = arith.truncf %744 : vector<16x16xf32> to vector<16x16xbf16>
    %cst_438 = arith.constant dense<0.000000e+00> : vector<16x64xf32>
    %746 = tpu.matmul %745, %729, %cst_438 {dimension_numbers = #tpu.dot_dimension_numbers<[1], [0], [0], [1], [0, 0, 1, 1], [], []>} : vector<16x16xbf16>, vector<16x64xbf16>, vector<16x64xf32> -> vector<16x64xf32>
    %747 = arith.truncf %746 : vector<16x64xf32> to vector<16x64xbf16>
    %c1_439 = arith.constant 1 : index
    %c0_440 = arith.constant 0 : index
    %c0_441 = arith.constant 0 : index
    %748 = vector.load %arg11[%c1_439, %c0_440, %c0_441] : memref<2x128x128xbf16, #tpu.memory_space<vmem>>, vector<1x64x128xbf16>
    %749 = vector.shape_cast %748 : vector<1x64x128xbf16> to vector<64x128xbf16>
    %cst_442 = arith.constant dense<0.000000e+00> : vector<16x128xf32>
    %750 = tpu.matmul %747, %749, %cst_442 {dimension_numbers = #tpu.dot_dimension_numbers<[1], [0], [0], [1], [0, 0, 1, 1], [], []>} : vector<16x64xbf16>, vector<64x128xbf16>, vector<16x128xf32> -> vector<16x128xf32>
    %751 = vector.extract_strided_slice %724 {offsets = [0, 64], sizes = [16, 64], strides = [1, 1]} : vector<32x384xbf16> to vector<16x64xbf16>
    %752 = vector.extract_strided_slice %724 {offsets = [0, 192], sizes = [16, 64], strides = [1, 1]} : vector<32x384xbf16> to vector<16x64xbf16>
    %753 = vector.extract_strided_slice %724 {offsets = [0, 320], sizes = [16, 64], strides = [1, 1]} : vector<32x384xbf16> to vector<16x64xbf16>
    %cst_443 = arith.constant dense<0.000000e+00> : vector<16x16xf32>
    %754 = tpu.matmul %751, %752, %cst_443 {dimension_numbers = #tpu.dot_dimension_numbers<[1], [1], [0], [0], [0, 0, 1, 0], [], []>} : vector<16x64xbf16>, vector<16x64xbf16>, vector<16x16xf32> -> vector<16x16xf32>
    %cst_444 = arith.constant 1.250000e-01 : f32
    %755 = vector.broadcast %cst_444 : f32 to vector<16x16xf32>
    %756 = arith.mulf %754, %755 : vector<16x16xf32>
    %757 = vector.broadcast %726 : vector<1x16xf32> to vector<16x16xf32>
    %758 = arith.addf %756, %757 : vector<16x16xf32>
    %cst_445 = arith.constant dense<0xFF800000> : vector<16xf32>
    %759 = vector.multi_reduction <maximumf>, %758, %cst_445 [1] : vector<16x16xf32> to vector<16xf32>
    %760 = vector.shape_cast %759 : vector<16xf32> to vector<16x1xf32>
    %761 = vector.broadcast %760 : vector<16x1xf32> to vector<16x16xf32>
    %762 = arith.subf %758, %761 : vector<16x16xf32>
    %763 = math.exp %762 : vector<16x16xf32>
    %cst_446 = arith.constant dense<0.000000e+00> : vector<16xf32>
    %764 = vector.multi_reduction <add>, %763, %cst_446 [1] : vector<16x16xf32> to vector<16xf32>
    %765 = vector.shape_cast %764 : vector<16xf32> to vector<16x1xf32>
    %766 = tpu.reciprocal %765 {approx = true} : vector<16x1xf32> -> vector<16x1xf32>
    %767 = vector.broadcast %766 : vector<16x1xf32> to vector<16x16xf32>
    %768 = arith.mulf %763, %767 : vector<16x16xf32>
    %769 = arith.truncf %768 : vector<16x16xf32> to vector<16x16xbf16>
    %cst_447 = arith.constant dense<0.000000e+00> : vector<16x64xf32>
    %770 = tpu.matmul %769, %753, %cst_447 {dimension_numbers = #tpu.dot_dimension_numbers<[1], [0], [0], [1], [0, 0, 1, 1], [], []>} : vector<16x16xbf16>, vector<16x64xbf16>, vector<16x64xf32> -> vector<16x64xf32>
    %771 = arith.truncf %770 : vector<16x64xf32> to vector<16x64xbf16>
    %c1_448 = arith.constant 1 : index
    %c64_449 = arith.constant 64 : index
    %c0_450 = arith.constant 0 : index
    %772 = vector.load %arg11[%c1_448, %c64_449, %c0_450] : memref<2x128x128xbf16, #tpu.memory_space<vmem>>, vector<1x64x128xbf16>
    %773 = vector.shape_cast %772 : vector<1x64x128xbf16> to vector<64x128xbf16>
    %cst_451 = arith.constant dense<0.000000e+00> : vector<16x128xf32>
    %774 = tpu.matmul %771, %773, %cst_451 {dimension_numbers = #tpu.dot_dimension_numbers<[1], [0], [0], [1], [0, 0, 1, 1], [], []>} : vector<16x64xbf16>, vector<64x128xbf16>, vector<16x128xf32> -> vector<16x128xf32>
    %775 = arith.addf %750, %774 : vector<16x128xf32>
    %c0_452 = arith.constant 0 : index
    %c0_453 = arith.constant 0 : index
    %776 = vector.load %arg26[%c0_452, %c0_453] : memref<32x128xf32, #tpu.memory_space<vmem>>, vector<16x128xf32>
    tpu.vector_store %arg26[%c0_452, %c0_453], %775 {strides = array<i32>} : memref<32x128xf32, #tpu.memory_space<vmem>>, vector<16x128xf32>,
    %777 = vector.extract_strided_slice %514 {offsets = [1, 0, 0], sizes = [1, 1, 16], strides = [1, 1, 1]} : vector<2x1x16xf32> to vector<1x1x16xf32>
    %778 = vector.shape_cast %777 : vector<1x1x16xf32> to vector<1x16xf32>
    %779 = vector.extract_strided_slice %724 {offsets = [16, 0], sizes = [16, 64], strides = [1, 1]} : vector<32x384xbf16> to vector<16x64xbf16>
    %780 = vector.extract_strided_slice %724 {offsets = [16, 128], sizes = [16, 64], strides = [1, 1]} : vector<32x384xbf16> to vector<16x64xbf16>
    %781 = vector.extract_strided_slice %724 {offsets = [16, 256], sizes = [16, 64], strides = [1, 1]} : vector<32x384xbf16> to vector<16x64xbf16>
    %cst_454 = arith.constant dense<0.000000e+00> : vector<16x16xf32>
    %782 = tpu.matmul %779, %780, %cst_454 {dimension_numbers = #tpu.dot_dimension_numbers<[1], [1], [0], [0], [0, 0, 1, 0], [], []>} : vector<16x64xbf16>, vector<16x64xbf16>, vector<16x16xf32> -> vector<16x16xf32>
    %cst_455 = arith.constant 1.250000e-01 : f32
    %783 = vector.broadcast %cst_455 : f32 to vector<16x16xf32>
    %784 = arith.mulf %782, %783 : vector<16x16xf32>
    %785 = vector.broadcast %778 : vector<1x16xf32> to vector<16x16xf32>
    %786 = arith.addf %784, %785 : vector<16x16xf32>
    %cst_456 = arith.constant dense<0xFF800000> : vector<16xf32>
    %787 = vector.multi_reduction <maximumf>, %786, %cst_456 [1] : vector<16x16xf32> to vector<16xf32>
    %788 = vector.shape_cast %787 : vector<16xf32> to vector<16x1xf32>
    %789 = vector.broadcast %788 : vector<16x1xf32> to vector<16x16xf32>
    %790 = arith.subf %786, %789 : vector<16x16xf32>
    %791 = math.exp %790 : vector<16x16xf32>
    %cst_457 = arith.constant dense<0.000000e+00> : vector<16xf32>
    %792 = vector.multi_reduction <add>, %791, %cst_457 [1] : vector<16x16xf32> to vector<16xf32>
    %793 = vector.shape_cast %792 : vector<16xf32> to vector<16x1xf32>
    %794 = tpu.reciprocal %793 {approx = true} : vector<16x1xf32> -> vector<16x1xf32>
    %795 = vector.broadcast %794 : vector<16x1xf32> to vector<16x16xf32>
    %796 = arith.mulf %791, %795 : vector<16x16xf32>
    %797 = arith.truncf %796 : vector<16x16xf32> to vector<16x16xbf16>
    %cst_458 = arith.constant dense<0.000000e+00> : vector<16x64xf32>
    %798 = tpu.matmul %797, %781, %cst_458 {dimension_numbers = #tpu.dot_dimension_numbers<[1], [0], [0], [1], [0, 0, 1, 1], [], []>} : vector<16x16xbf16>, vector<16x64xbf16>, vector<16x64xf32> -> vector<16x64xf32>
    %799 = arith.truncf %798 : vector<16x64xf32> to vector<16x64xbf16>
    %c1_459 = arith.constant 1 : index
    %c0_460 = arith.constant 0 : index
    %c0_461 = arith.constant 0 : index
    %800 = vector.load %arg11[%c1_459, %c0_460, %c0_461] : memref<2x128x128xbf16, #tpu.memory_space<vmem>>, vector<1x64x128xbf16>
    %801 = vector.shape_cast %800 : vector<1x64x128xbf16> to vector<64x128xbf16>
    %cst_462 = arith.constant dense<0.000000e+00> : vector<16x128xf32>
    %802 = tpu.matmul %799, %801, %cst_462 {dimension_numbers = #tpu.dot_dimension_numbers<[1], [0], [0], [1], [0, 0, 1, 1], [], []>} : vector<16x64xbf16>, vector<64x128xbf16>, vector<16x128xf32> -> vector<16x128xf32>
    %803 = vector.extract_strided_slice %724 {offsets = [16, 64], sizes = [16, 64], strides = [1, 1]} : vector<32x384xbf16> to vector<16x64xbf16>
    %804 = vector.extract_strided_slice %724 {offsets = [16, 192], sizes = [16, 64], strides = [1, 1]} : vector<32x384xbf16> to vector<16x64xbf16>
    %805 = vector.extract_strided_slice %724 {offsets = [16, 320], sizes = [16, 64], strides = [1, 1]} : vector<32x384xbf16> to vector<16x64xbf16>
    %cst_463 = arith.constant dense<0.000000e+00> : vector<16x16xf32>
    %806 = tpu.matmul %803, %804, %cst_463 {dimension_numbers = #tpu.dot_dimension_numbers<[1], [1], [0], [0], [0, 0, 1, 0], [], []>} : vector<16x64xbf16>, vector<16x64xbf16>, vector<16x16xf32> -> vector<16x16xf32>
    %cst_464 = arith.constant 1.250000e-01 : f32
    %807 = vector.broadcast %cst_464 : f32 to vector<16x16xf32>
    %808 = arith.mulf %806, %807 : vector<16x16xf32>
    %809 = vector.broadcast %778 : vector<1x16xf32> to vector<16x16xf32>
    %810 = arith.addf %808, %809 : vector<16x16xf32>
    %cst_465 = arith.constant dense<0xFF800000> : vector<16xf32>
    %811 = vector.multi_reduction <maximumf>, %810, %cst_465 [1] : vector<16x16xf32> to vector<16xf32>
    %812 = vector.shape_cast %811 : vector<16xf32> to vector<16x1xf32>
    %813 = vector.broadcast %812 : vector<16x1xf32> to vector<16x16xf32>
    %814 = arith.subf %810, %813 : vector<16x16xf32>
    %815 = math.exp %814 : vector<16x16xf32>
    %cst_466 = arith.constant dense<0.000000e+00> : vector<16xf32>
    %816 = vector.multi_reduction <add>, %815, %cst_466 [1] : vector<16x16xf32> to vector<16xf32>
    %817 = vector.shape_cast %816 : vector<16xf32> to vector<16x1xf32>
    %818 = tpu.reciprocal %817 {approx = true} : vector<16x1xf32> -> vector<16x1xf32>
    %819 = vector.broadcast %818 : vector<16x1xf32> to vector<16x16xf32>
    %820 = arith.mulf %815, %819 : vector<16x16xf32>
    %821 = arith.truncf %820 : vector<16x16xf32> to vector<16x16xbf16>
    %cst_467 = arith.constant dense<0.000000e+00> : vector<16x64xf32>
    %822 = tpu.matmul %821, %805, %cst_467 {dimension_numbers = #tpu.dot_dimension_numbers<[1], [0], [0], [1], [0, 0, 1, 1], [], []>} : vector<16x16xbf16>, vector<16x64xbf16>, vector<16x64xf32> -> vector<16x64xf32>
    %823 = arith.truncf %822 : vector<16x64xf32> to vector<16x64xbf16>
    %c1_468 = arith.constant 1 : index
    %c64_469 = arith.constant 64 : index
    %c0_470 = arith.constant 0 : index
    %824 = vector.load %arg11[%c1_468, %c64_469, %c0_470] : memref<2x128x128xbf16, #tpu.memory_space<vmem>>, vector<1x64x128xbf16>
    %825 = vector.shape_cast %824 : vector<1x64x128xbf16> to vector<64x128xbf16>
    %cst_471 = arith.constant dense<0.000000e+00> : vector<16x128xf32>
    %826 = tpu.matmul %823, %825, %cst_471 {dimension_numbers = #tpu.dot_dimension_numbers<[1], [0], [0], [1], [0, 0, 1, 1], [], []>} : vector<16x64xbf16>, vector<64x128xbf16>, vector<16x128xf32> -> vector<16x128xf32>
    %827 = arith.addf %802, %826 : vector<16x128xf32>
    %c16_472 = arith.constant 16 : index
    %c0_473 = arith.constant 0 : index
    %828 = vector.load %arg26[%c16_472, %c0_473] : memref<32x128xf32, #tpu.memory_space<vmem>>, vector<16x128xf32>
    tpu.vector_store %arg26[%c16_472, %c0_473], %827 {strides = array<i32>} : memref<32x128xf32, #tpu.memory_space<vmem>>, vector<16x128xf32>,
    %c0_474 = arith.constant 0 : index
    %c0_475 = arith.constant 0 : index
    %829 = vector.load %arg26[%c0_474, %c0_475] : memref<32x128xf32, #tpu.memory_space<vmem>>, vector<32x128xf32>
    %c1_476 = arith.constant 1 : index
    %c0_477 = arith.constant 0 : index
    %c0_478 = arith.constant 0 : index
    %830 = vector.load %arg12[%c1_476, %c0_477, %c0_478] : memref<2x1x128xf32, #tpu.memory_space<vmem>>, vector<1x1x128xf32>
    %831 = vector.shape_cast %830 : vector<1x1x128xf32> to vector<1x128xf32>
    %832 = vector.broadcast %831 : vector<1x128xf32> to vector<32x128xf32>
    %833 = arith.addf %829, %832 : vector<32x128xf32>
    %834 = arith.addf %833, %715 : vector<32x128xf32>
    %c1_479 = arith.constant 1 : index
    %c0_480 = arith.constant 0 : index
    %c0_481 = arith.constant 0 : index
    %835 = vector.load %arg17[%c1_479, %c0_480, %c0_481] : memref<2x1x128xf32, #tpu.memory_space<vmem>>, vector<1x1x128xf32>
    %836 = vector.shape_cast %835 : vector<1x1x128xf32> to vector<1x128xf32>
    %c1_482 = arith.constant 1 : index
    %c0_483 = arith.constant 0 : index
    %c0_484 = arith.constant 0 : index
    %837 = vector.load %arg18[%c1_482, %c0_483, %c0_484] : memref<2x1x128xf32, #tpu.memory_space<vmem>>, vector<1x1x128xf32>
    %838 = vector.shape_cast %837 : vector<1x1x128xf32> to vector<1x128xf32>
    %cst_485 = arith.constant dense<0.000000e+00> : vector<32xf32>
    %839 = vector.multi_reduction <add>, %834, %cst_485 [1] : vector<32x128xf32> to vector<32xf32>
    %840 = vector.shape_cast %839 : vector<32xf32> to vector<32x1xf32>
    %cst_486 = arith.constant 1.280000e+02 : f32
    %841 = vector.broadcast %cst_486 : f32 to vector<32x1xf32>
    %842 = arith.divf %840, %841 : vector<32x1xf32>
    %843 = vector.broadcast %842 : vector<32x1xf32> to vector<32x128xf32>
    %844 = arith.subf %834, %843 : vector<32x128xf32>
    %845 = arith.mulf %844, %844 : vector<32x128xf32>
    %cst_487 = arith.constant dense<0.000000e+00> : vector<32xf32>
    %846 = vector.multi_reduction <add>, %845, %cst_487 [1] : vector<32x128xf32> to vector<32xf32>
    %847 = vector.shape_cast %846 : vector<32xf32> to vector<32x1xf32>
    %cst_488 = arith.constant 1.280000e+02 : f32
    %848 = vector.broadcast %cst_488 : f32 to vector<32x1xf32>
    %849 = arith.divf %847, %848 : vector<32x1xf32>
    %850 = vector.broadcast %842 : vector<32x1xf32> to vector<32x128xf32>
    %851 = arith.subf %834, %850 : vector<32x128xf32>
    %cst_489 = arith.constant 9.99999996E-13 : f32
    %852 = vector.broadcast %cst_489 : f32 to vector<32x1xf32>
    %853 = arith.addf %849, %852 : vector<32x1xf32>
    %854 = math.rsqrt %853 : vector<32x1xf32>
    %855 = vector.broadcast %854 : vector<32x1xf32> to vector<32x128xf32>
    %856 = arith.mulf %851, %855 : vector<32x128xf32>
    %857 = vector.broadcast %836 : vector<1x128xf32> to vector<32x128xf32>
    %858 = arith.mulf %856, %857 : vector<32x128xf32>
    %859 = vector.broadcast %838 : vector<1x128xf32> to vector<32x128xf32>
    %860 = arith.addf %858, %859 : vector<32x128xf32>
    %861 = arith.truncf %860 : vector<32x128xf32> to vector<32x128xbf16>
    %c1_490 = arith.constant 1 : index
    %c0_491 = arith.constant 0 : index
    %c0_492 = arith.constant 0 : index
    %862 = vector.load %arg13[%c1_490, %c0_491, %c0_492] : memref<2x128x256xbf16, #tpu.memory_space<vmem>>, vector<1x128x256xbf16>
    %863 = vector.shape_cast %862 : vector<1x128x256xbf16> to vector<128x256xbf16>
    %cst_493 = arith.constant dense<0.000000e+00> : vector<32x256xf32>
    %864 = tpu.matmul %861, %863, %cst_493 {dimension_numbers = #tpu.dot_dimension_numbers<[1], [0], [0], [1], [0, 0, 1, 1], [], []>} : vector<32x128xbf16>, vector<128x256xbf16>, vector<32x256xf32> -> vector<32x256xf32>
    %c1_494 = arith.constant 1 : index
    %c0_495 = arith.constant 0 : index
    %c0_496 = arith.constant 0 : index
    %865 = vector.load %arg14[%c1_494, %c0_495, %c0_496] : memref<2x1x256xf32, #tpu.memory_space<vmem>>, vector<1x1x256xf32>
    %866 = vector.shape_cast %865 : vector<1x1x256xf32> to vector<1x256xf32>
    %867 = vector.broadcast %866 : vector<1x256xf32> to vector<32x256xf32>
    %868 = arith.addf %864, %867 : vector<32x256xf32>
    %869 = arith.mulf %868, %868 : vector<32x256xf32>
    %870 = arith.mulf %868, %869 : vector<32x256xf32>
    %cst_497 = arith.constant 4.471500e-02 : f32
    %871 = vector.broadcast %cst_497 : f32 to vector<32x256xf32>
    %872 = arith.mulf %871, %870 : vector<32x256xf32>
    %873 = arith.addf %868, %872 : vector<32x256xf32>
    %cst_498 = arith.constant 0.797884583 : f32
    %874 = vector.broadcast %cst_498 : f32 to vector<32x256xf32>
    %875 = arith.mulf %874, %873 : vector<32x256xf32>
    %876 = math.tanh %875 : vector<32x256xf32>
    %cst_499 = arith.constant 1.000000e+00 : f32
    %877 = vector.broadcast %cst_499 : f32 to vector<32x256xf32>
    %878 = arith.addf %877, %876 : vector<32x256xf32>
    %cst_500 = arith.constant 5.000000e-01 : f32
    %879 = vector.broadcast %cst_500 : f32 to vector<32x256xf32>
    %880 = arith.mulf %879, %878 : vector<32x256xf32>
    %881 = arith.mulf %868, %880 : vector<32x256xf32>
    %882 = arith.truncf %881 : vector<32x256xf32> to vector<32x256xbf16>
    %c1_501 = arith.constant 1 : index
    %c0_502 = arith.constant 0 : index
    %c0_503 = arith.constant 0 : index
    %883 = vector.load %arg15[%c1_501, %c0_502, %c0_503] : memref<2x256x128xbf16, #tpu.memory_space<vmem>>, vector<1x256x128xbf16>
    %884 = vector.shape_cast %883 : vector<1x256x128xbf16> to vector<256x128xbf16>
    %cst_504 = arith.constant dense<0.000000e+00> : vector<32x128xf32>
    %885 = tpu.matmul %882, %884, %cst_504 {dimension_numbers = #tpu.dot_dimension_numbers<[1], [0], [0], [1], [0, 0, 1, 1], [], []>} : vector<32x256xbf16>, vector<256x128xbf16>, vector<32x128xf32> -> vector<32x128xf32>
    %c1_505 = arith.constant 1 : index
    %c0_506 = arith.constant 0 : index
    %c0_507 = arith.constant 0 : index
    %886 = vector.load %arg16[%c1_505, %c0_506, %c0_507] : memref<2x1x128xf32, #tpu.memory_space<vmem>>, vector<1x1x128xf32>
    %887 = vector.shape_cast %886 : vector<1x1x128xf32> to vector<1x128xf32>
    %888 = vector.broadcast %887 : vector<1x128xf32> to vector<32x128xf32>
    %889 = arith.addf %885, %888 : vector<32x128xf32>
    %890 = arith.addf %889, %860 : vector<32x128xf32>
    %c1_508 = arith.constant 1 : index
    %c0_509 = arith.constant 0 : index
    %c0_510 = arith.constant 0 : index
    %891 = vector.load %arg19[%c1_508, %c0_509, %c0_510] : memref<2x1x128xf32, #tpu.memory_space<vmem>>, vector<1x1x128xf32>
    %892 = vector.shape_cast %891 : vector<1x1x128xf32> to vector<1x128xf32>
    %c1_511 = arith.constant 1 : index
    %c0_512 = arith.constant 0 : index
    %c0_513 = arith.constant 0 : index
    %893 = vector.load %arg20[%c1_511, %c0_512, %c0_513] : memref<2x1x128xf32, #tpu.memory_space<vmem>>, vector<1x1x128xf32>
    %894 = vector.shape_cast %893 : vector<1x1x128xf32> to vector<1x128xf32>
    %cst_514 = arith.constant dense<0.000000e+00> : vector<32xf32>
    %895 = vector.multi_reduction <add>, %890, %cst_514 [1] : vector<32x128xf32> to vector<32xf32>
    %896 = vector.shape_cast %895 : vector<32xf32> to vector<32x1xf32>
    %cst_515 = arith.constant 1.280000e+02 : f32
    %897 = vector.broadcast %cst_515 : f32 to vector<32x1xf32>
    %898 = arith.divf %896, %897 : vector<32x1xf32>
    %899 = vector.broadcast %898 : vector<32x1xf32> to vector<32x128xf32>
    %900 = arith.subf %890, %899 : vector<32x128xf32>
    %901 = arith.mulf %900, %900 : vector<32x128xf32>
    %cst_516 = arith.constant dense<0.000000e+00> : vector<32xf32>
    %902 = vector.multi_reduction <add>, %901, %cst_516 [1] : vector<32x128xf32> to vector<32xf32>
    %903 = vector.shape_cast %902 : vector<32xf32> to vector<32x1xf32>
    %cst_517 = arith.constant 1.280000e+02 : f32
    %904 = vector.broadcast %cst_517 : f32 to vector<32x1xf32>
    %905 = arith.divf %903, %904 : vector<32x1xf32>
    %906 = vector.broadcast %898 : vector<32x1xf32> to vector<32x128xf32>
    %907 = arith.subf %890, %906 : vector<32x128xf32>
    %cst_518 = arith.constant 9.99999996E-13 : f32
    %908 = vector.broadcast %cst_518 : f32 to vector<32x1xf32>
    %909 = arith.addf %905, %908 : vector<32x1xf32>
    %910 = math.rsqrt %909 : vector<32x1xf32>
    %911 = vector.broadcast %910 : vector<32x1xf32> to vector<32x128xf32>
    %912 = arith.mulf %907, %911 : vector<32x128xf32>
    %913 = vector.broadcast %892 : vector<1x128xf32> to vector<32x128xf32>
    %914 = arith.mulf %912, %913 : vector<32x128xf32>
    %915 = vector.broadcast %894 : vector<1x128xf32> to vector<32x128xf32>
    %916 = arith.addf %914, %915 : vector<32x128xf32>
    %917 = vector.extract_strided_slice %916 {offsets = [0, 0], sizes = [1, 128], strides = [1, 1]} : vector<32x128xf32> to vector<1x128xf32>
    %918 = vector.extract_strided_slice %916 {offsets = [16, 0], sizes = [1, 128], strides = [1, 1]} : vector<32x128xf32> to vector<1x128xf32>
    %919 = tpu.concatenate %917, %918 in 0 : vector<1x128xf32>, vector<1x128xf32> -> vector<2x128xf32>
    %920 = arith.truncf %919 : vector<2x128xf32> to vector<2x128xbf16>
    %c0_519 = arith.constant 0 : index
    %c0_520 = arith.constant 0 : index
    %921 = vector.load %arg21[%c0_519, %c0_520] : memref<128x128xbf16, #tpu.memory_space<vmem>>, vector<128x128xbf16>
    %cst_521 = arith.constant dense<0.000000e+00> : vector<2x128xf32>
    %922 = tpu.matmul %920, %921, %cst_521 {dimension_numbers = #tpu.dot_dimension_numbers<[1], [0], [0], [1], [0, 0, 1, 1], [], []>} : vector<2x128xbf16>, vector<128x128xbf16>, vector<2x128xf32> -> vector<2x128xf32>
    %c0_522 = arith.constant 0 : index
    %c0_523 = arith.constant 0 : index
    %923 = vector.load %arg22[%c0_522, %c0_523] : memref<1x128xf32, #tpu.memory_space<vmem>>, vector<1x128xf32>
    %924 = vector.broadcast %923 : vector<1x128xf32> to vector<2x128xf32>
    %925 = arith.addf %922, %924 : vector<2x128xf32>
    %926 = math.tanh %925 : vector<2x128xf32>
    %927 = arith.truncf %926 : vector<2x128xf32> to vector<2x128xbf16>
    %c0_524 = arith.constant 0 : index
    %c0_525 = arith.constant 0 : index
    %928 = vector.load %arg23[%c0_524, %c0_525] : memref<128x1xbf16, #tpu.memory_space<vmem>>, vector<128x1xbf16>
    %cst_526 = arith.constant dense<0.000000e+00> : vector<2x1xf32>
    %929 = tpu.matmul %927, %928, %cst_526 {dimension_numbers = #tpu.dot_dimension_numbers<[1], [0], [0], [1], [0, 0, 1, 1], [], []>} : vector<2x128xbf16>, vector<128x1xbf16>, vector<2x1xf32> -> vector<2x1xf32>
    %c0_527 = arith.constant 0 : index
    %c0_528 = arith.constant 0 : index
    %930 = vector.load %arg24[%c0_527, %c0_528] : memref<1x1xf32, #tpu.memory_space<vmem>>, vector<1x1xf32>
    %931 = vector.broadcast %930 : vector<1x1xf32> to vector<2x1xf32>
    %932 = arith.addf %929, %931 : vector<2x1xf32>
    %933 = arith.negf %932 : vector<2x1xf32>
    %934 = math.exp %933 : vector<2x1xf32>
    %cst_529 = arith.constant 1.000000e+00 : f32
    %935 = vector.broadcast %cst_529 : f32 to vector<2x1xf32>
    %936 = arith.addf %935, %934 : vector<2x1xf32>
    %937 = arith.divf %935, %936 : vector<2x1xf32>
    %c0_530 = arith.constant 0 : index
    %c0_531 = arith.constant 0 : index
    %c0_532 = arith.constant 0 : index
    %938 = vector.load %arg25[%c0_530, %c0_531, %c0_532] : memref<1x2x1xf32, #tpu.memory_space<vmem>>, vector<1x2x1xf32>
    %939 = vector.shape_cast %938 : vector<1x2x1xf32> to vector<2x1xf32>
    %940 = vector.shape_cast %937 : vector<2x1xf32> to vector<1x2x1xf32>
    tpu.vector_store %arg25[%c0_530, %c0_531, %c0_532], %940 {strides = array<i32>} : memref<1x2x1xf32, #tpu.memory_space<vmem>>, vector<1x2x1xf32>,
    return
  }
  func.func @transform_0(%arg0: i32, %arg1: memref<2x16xi32, #tpu.memory_space<smem>>, %arg2: memref<2x16xi32, #tpu.memory_space<smem>>) -> (i32, i32, i32) {
    %c0_i32 = arith.constant 0 : i32
    %c0_i32_0 = arith.constant 0 : i32
    %c0_i32_1 = arith.constant 0 : i32
    return %arg0, %c0_i32, %c0_i32_0 : i32, i32, i32
  }
  func.func @transform_1(%arg0: i32, %arg1: memref<2x16xi32, #tpu.memory_space<smem>>, %arg2: memref<2x16xi32, #tpu.memory_space<smem>>) -> (i32, i32, i32) {
    %c0_i32 = arith.constant 0 : i32
    %c0_i32_0 = arith.constant 0 : i32
    %c0_i32_1 = arith.constant 0 : i32
    %c0_i32_2 = arith.constant 0 : i32
    return %c0_i32, %c0_i32_0, %c0_i32_1 : i32, i32, i32
  }
  func.func @transform_2(%arg0: i32, %arg1: memref<2x16xi32, #tpu.memory_space<smem>>, %arg2: memref<2x16xi32, #tpu.memory_space<smem>>) -> (i32, i32, i32) {
    %c0_i32 = arith.constant 0 : i32
    %c0_i32_0 = arith.constant 0 : i32
    %c0_i32_1 = arith.constant 0 : i32
    %c0_i32_2 = arith.constant 0 : i32
    return %c0_i32, %c0_i32_0, %c0_i32_1 : i32, i32, i32
  }
  func.func @transform_3(%arg0: i32, %arg1: memref<2x16xi32, #tpu.memory_space<smem>>, %arg2: memref<2x16xi32, #tpu.memory_space<smem>>) -> (i32, i32, i32) {
    %c0_i32 = arith.constant 0 : i32
    %c0_i32_0 = arith.constant 0 : i32
    %c0_i32_1 = arith.constant 0 : i32
    %c0_i32_2 = arith.constant 0 : i32
    return %c0_i32, %c0_i32_0, %c0_i32_1 : i32, i32, i32
  }
  func.func @transform_4(%arg0: i32, %arg1: memref<2x16xi32, #tpu.memory_space<smem>>, %arg2: memref<2x16xi32, #tpu.memory_space<smem>>) -> (i32, i32) {
    %c0_i32 = arith.constant 0 : i32
    %c0_i32_0 = arith.constant 0 : i32
    %c0_i32_1 = arith.constant 0 : i32
    return %c0_i32, %c0_i32_0 : i32, i32
  }
  func.func @transform_5(%arg0: i32, %arg1: memref<2x16xi32, #tpu.memory_space<smem>>, %arg2: memref<2x16xi32, #tpu.memory_space<smem>>) -> (i32, i32) {
    %c0_i32 = arith.constant 0 : i32
    %c0_i32_0 = arith.constant 0 : i32
    %c0_i32_1 = arith.constant 0 : i32
    return %c0_i32, %c0_i32_0 : i32, i32
  }
  func.func @transform_6(%arg0: i32, %arg1: memref<2x16xi32, #tpu.memory_space<smem>>, %arg2: memref<2x16xi32, #tpu.memory_space<smem>>) -> (i32, i32, i32) {
    %c0_i32 = arith.constant 0 : i32
    %c0_i32_0 = arith.constant 0 : i32
    %c0_i32_1 = arith.constant 0 : i32
    %c0_i32_2 = arith.constant 0 : i32
    return %c0_i32, %c0_i32_0, %c0_i32_1 : i32, i32, i32
  }
  func.func @transform_7(%arg0: i32, %arg1: memref<2x16xi32, #tpu.memory_space<smem>>, %arg2: memref<2x16xi32, #tpu.memory_space<smem>>) -> (i32, i32, i32) {
    %c0_i32 = arith.constant 0 : i32
    %c0_i32_0 = arith.constant 0 : i32
    %c0_i32_1 = arith.constant 0 : i32
    %c0_i32_2 = arith.constant 0 : i32
    return %c0_i32, %c0_i32_0, %c0_i32_1 : i32, i32, i32
  }
  func.func @transform_8(%arg0: i32, %arg1: memref<2x16xi32, #tpu.memory_space<smem>>, %arg2: memref<2x16xi32, #tpu.memory_space<smem>>) -> (i32, i32, i32) {
    %c0_i32 = arith.constant 0 : i32
    %c0_i32_0 = arith.constant 0 : i32
    %c0_i32_1 = arith.constant 0 : i32
    %c0_i32_2 = arith.constant 0 : i32
    return %c0_i32, %c0_i32_0, %c0_i32_1 : i32, i32, i32
  }
  func.func @transform_9(%arg0: i32, %arg1: memref<2x16xi32, #tpu.memory_space<smem>>, %arg2: memref<2x16xi32, #tpu.memory_space<smem>>) -> (i32, i32, i32) {
    %c0_i32 = arith.constant 0 : i32
    %c0_i32_0 = arith.constant 0 : i32
    %c0_i32_1 = arith.constant 0 : i32
    %c0_i32_2 = arith.constant 0 : i32
    return %c0_i32, %c0_i32_0, %c0_i32_1 : i32, i32, i32
  }
  func.func @transform_10(%arg0: i32, %arg1: memref<2x16xi32, #tpu.memory_space<smem>>, %arg2: memref<2x16xi32, #tpu.memory_space<smem>>) -> (i32, i32, i32) {
    %c0_i32 = arith.constant 0 : i32
    %c0_i32_0 = arith.constant 0 : i32
    %c0_i32_1 = arith.constant 0 : i32
    %c0_i32_2 = arith.constant 0 : i32
    return %c0_i32, %c0_i32_0, %c0_i32_1 : i32, i32, i32
  }
  func.func @transform_11(%arg0: i32, %arg1: memref<2x16xi32, #tpu.memory_space<smem>>, %arg2: memref<2x16xi32, #tpu.memory_space<smem>>) -> (i32, i32, i32) {
    %c0_i32 = arith.constant 0 : i32
    %c0_i32_0 = arith.constant 0 : i32
    %c0_i32_1 = arith.constant 0 : i32
    %c0_i32_2 = arith.constant 0 : i32
    return %c0_i32, %c0_i32_0, %c0_i32_1 : i32, i32, i32
  }
  func.func @transform_12(%arg0: i32, %arg1: memref<2x16xi32, #tpu.memory_space<smem>>, %arg2: memref<2x16xi32, #tpu.memory_space<smem>>) -> (i32, i32, i32) {
    %c0_i32 = arith.constant 0 : i32
    %c0_i32_0 = arith.constant 0 : i32
    %c0_i32_1 = arith.constant 0 : i32
    %c0_i32_2 = arith.constant 0 : i32
    return %c0_i32, %c0_i32_0, %c0_i32_1 : i32, i32, i32
  }
  func.func @transform_13(%arg0: i32, %arg1: memref<2x16xi32, #tpu.memory_space<smem>>, %arg2: memref<2x16xi32, #tpu.memory_space<smem>>) -> (i32, i32, i32) {
    %c0_i32 = arith.constant 0 : i32
    %c0_i32_0 = arith.constant 0 : i32
    %c0_i32_1 = arith.constant 0 : i32
    %c0_i32_2 = arith.constant 0 : i32
    return %c0_i32, %c0_i32_0, %c0_i32_1 : i32, i32, i32
  }
  func.func @transform_14(%arg0: i32, %arg1: memref<2x16xi32, #tpu.memory_space<smem>>, %arg2: memref<2x16xi32, #tpu.memory_space<smem>>) -> (i32, i32, i32) {
    %c0_i32 = arith.constant 0 : i32
    %c0_i32_0 = arith.constant 0 : i32
    %c0_i32_1 = arith.constant 0 : i32
    %c0_i32_2 = arith.constant 0 : i32
    return %c0_i32, %c0_i32_0, %c0_i32_1 : i32, i32, i32
  }
  func.func @transform_15(%arg0: i32, %arg1: memref<2x16xi32, #tpu.memory_space<smem>>, %arg2: memref<2x16xi32, #tpu.memory_space<smem>>) -> (i32, i32, i32) {
    %c0_i32 = arith.constant 0 : i32
    %c0_i32_0 = arith.constant 0 : i32
    %c0_i32_1 = arith.constant 0 : i32
    %c0_i32_2 = arith.constant 0 : i32
    return %c0_i32, %c0_i32_0, %c0_i32_1 : i32, i32, i32
  }
  func.func @transform_16(%arg0: i32, %arg1: memref<2x16xi32, #tpu.memory_space<smem>>, %arg2: memref<2x16xi32, #tpu.memory_space<smem>>) -> (i32, i32, i32) {
    %c0_i32 = arith.constant 0 : i32
    %c0_i32_0 = arith.constant 0 : i32
    %c0_i32_1 = arith.constant 0 : i32
    %c0_i32_2 = arith.constant 0 : i32
    return %c0_i32, %c0_i32_0, %c0_i32_1 : i32, i32, i32
  }
  func.func @transform_17(%arg0: i32, %arg1: memref<2x16xi32, #tpu.memory_space<smem>>, %arg2: memref<2x16xi32, #tpu.memory_space<smem>>) -> (i32, i32, i32) {
    %c0_i32 = arith.constant 0 : i32
    %c0_i32_0 = arith.constant 0 : i32
    %c0_i32_1 = arith.constant 0 : i32
    %c0_i32_2 = arith.constant 0 : i32
    return %c0_i32, %c0_i32_0, %c0_i32_1 : i32, i32, i32
  }
  func.func @transform_18(%arg0: i32, %arg1: memref<2x16xi32, #tpu.memory_space<smem>>, %arg2: memref<2x16xi32, #tpu.memory_space<smem>>) -> (i32, i32) {
    %c0_i32 = arith.constant 0 : i32
    %c0_i32_0 = arith.constant 0 : i32
    %c0_i32_1 = arith.constant 0 : i32
    return %c0_i32, %c0_i32_0 : i32, i32
  }
  func.func @transform_19(%arg0: i32, %arg1: memref<2x16xi32, #tpu.memory_space<smem>>, %arg2: memref<2x16xi32, #tpu.memory_space<smem>>) -> (i32, i32) {
    %c0_i32 = arith.constant 0 : i32
    %c0_i32_0 = arith.constant 0 : i32
    %c0_i32_1 = arith.constant 0 : i32
    return %c0_i32, %c0_i32_0 : i32, i32
  }
  func.func @transform_20(%arg0: i32, %arg1: memref<2x16xi32, #tpu.memory_space<smem>>, %arg2: memref<2x16xi32, #tpu.memory_space<smem>>) -> (i32, i32) {
    %c0_i32 = arith.constant 0 : i32
    %c0_i32_0 = arith.constant 0 : i32
    %c0_i32_1 = arith.constant 0 : i32
    return %c0_i32, %c0_i32_0 : i32, i32
  }
  func.func @transform_21(%arg0: i32, %arg1: memref<2x16xi32, #tpu.memory_space<smem>>, %arg2: memref<2x16xi32, #tpu.memory_space<smem>>) -> (i32, i32) {
    %c0_i32 = arith.constant 0 : i32
    %c0_i32_0 = arith.constant 0 : i32
    %c0_i32_1 = arith.constant 0 : i32
    return %c0_i32, %c0_i32_0 : i32, i32
  }
  func.func @transform_22(%arg0: i32, %arg1: memref<2x16xi32, #tpu.memory_space<smem>>, %arg2: memref<2x16xi32, #tpu.memory_space<smem>>) -> (i32, i32, i32) {
    %c0_i32 = arith.constant 0 : i32
    %c0_i32_0 = arith.constant 0 : i32
    %c0_i32_1 = arith.constant 0 : i32
    return %arg0, %c0_i32, %c0_i32_0 : i32, i32, i32
  }
}

</mosaic_0001>

<llo_original>
// kernel: sentiment_cla_forward.1
$region0: #{sentiment_cla_forward.1}
  #allocation0 [shape = 'u32[]', space=smem, size = 0x4, offset = 0x4, fixed_abs, tag = 'smem constant byte address 0x4 - core index']
  #allocation1 [shape = 'u32[72,128]{1,0:T(1,128)}', space=vmem, size = 0x9000, scoped, tag = 'internal scratch']
  #allocation2 [shape = 'f32[32,128]{1,0:T(8,128)}', space=vmem, size = 0x4000, scoped, tag = 'scratch operand']
  #allocation3 [shape = 's32[1]{0}', space=sflag, size = 0x4, scoped, tag = 'scoped memory for sentiment_cla_forward.1']
  #allocation4 [shape = 'u8[1024]{0}', space=smem, size = 0x400, scoped, tag = 'prefetched SMEM operand 0']
  #allocation5 [shape = 'u8[1024]{0}', space=smem, size = 0x400, scoped, tag = 'prefetched SMEM operand 1']
  #allocation6 [shape = 'f32[1,1]{1,0:T(1,128)S(1)}', space=vmem, size = 0x200, scoped, tag = 'scoped memory for sentiment_cla_forward.1']
  %s0 = inlined_call_operand.vmem [shape: s32[2,16], index: 0, kind: input, shape index: {}]
  %s1 = inlined_call_operand.vmem [shape: s32[2,16], index: 1, kind: input, shape index: {}]
  %s2 = inlined_call_operand.vmem [shape: s32[2,1,16], index: 2, kind: input, shape index: {}]
  %s3 = inlined_call_operand.hbm [shape: f32[100,1,128], index: 3, kind: input, shape index: {}]
  %s4 = inlined_call_operand.hbm [shape: f32[32,1,128], index: 4, kind: input, shape index: {}]
  %s5 = inlined_call_operand.vmem [shape: f32[2,1,128], index: 5, kind: input, shape index: {}]
  %s6 = inlined_call_operand.hbm [shape: f32[1,128], index: 6, kind: input, shape index: {}]
  %s7 = inlined_call_operand.hbm [shape: f32[1,128], index: 7, kind: input, shape index: {}]
  %s8 = inlined_call_operand.hbm [shape: bf16[2,128,384], index: 8, kind: input, shape index: {}]
  %s9 = inlined_call_operand.hbm [shape: f32[2,1,384], index: 9, kind: input, shape index: {}]
  %s10 = inlined_call_operand.hbm [shape: bf16[2,128,128], index: 10, kind: input, shape index: {}]
  %s11 = inlined_call_operand.hbm [shape: f32[2,1,128], index: 11, kind: input, shape index: {}]
  %s12 = inlined_call_operand.hbm [shape: bf16[2,128,256], index: 12, kind: input, shape index: {}]
  %s13 = inlined_call_operand.hbm [shape: f32[2,1,256], index: 13, kind: input, shape index: {}]
  %s14 = inlined_call_operand.hbm [shape: bf16[2,256,128], index: 14, kind: input, shape index: {}]
  %s15 = inlined_call_operand.hbm [shape: f32[2,1,128], index: 15, kind: input, shape index: {}]
  %s16 = inlined_call_operand.vmem [shape: f32[2,1,128], index: 16, kind: input, shape index: {}]
  %s17 = inlined_call_operand.hbm [shape: f32[2,1,128], index: 17, kind: input, shape index: {}]
  %s18 = inlined_call_operand.vmem [shape: f32[2,1,128], index: 18, kind: input, shape index: {}]
  %s19 = inlined_call_operand.hbm [shape: f32[2,1,128], index: 19, kind: input, shape index: {}]
  %s20 = inlined_call_operand.vmem [shape: bf16[128,128], index: 20, kind: input, shape index: {}]
  %s21 = inlined_call_operand.hbm [shape: f32[1,128], index: 21, kind: input, shape index: {}]
  %s22 = inlined_call_operand.vmem [shape: bf16[128,1], index: 22, kind: input, shape index: {}]
  %s23 = inlined_call_operand.<no memory space> [shape: f32[1,1], index: 23, kind: input, shape index: {}]
  %s24 = inlined_call_operand.vmem [shape: f32[1,2,1], index: 24, kind: output, shape index: {}]
  %s25 = sld [smem:[#allocation0]]
  $region158: #{sentiment_cla_forward.1} parent=0
    _
  %s27 = ssub.s32 1, %s25
  %s28 = scalar_select 0, %s27, %s25
  %s30 = sshll.u32 %s0, 4
  %s31 = int_to_ptr.vmem [resolvable:$true] %s30
  %33 = dma.vmem_to_smem %s31, 32, [#allocation4], [#allocation3]
  %s35 = sshll.u32 %s1, 4
  %s36 = int_to_ptr.vmem [resolvable:$true] %s35
  %38 = dma.vmem_to_smem %s36, 32, [#allocation5], [#allocation3]
  %v39 = vstv %s23
  %40 = vst [vmem:[#allocation6] sm:$0x1] %v39
  %42 = dma.done [#allocation3], 64
  %43 = sfence
  $region1: #{sentiment_cla_forward.1} parent=0
    #allocation7 [shape = 'u8[51200]{0}', space=vmem, size = 0xc800, scoped, tag = 'input window, operand 3, single buffered']
    #allocation8 [shape = 's32[1]{0}', space=sflag, size = 0x4, scoped, tag = 'scoped memory for sentiment_cla_forward.1']
    #allocation9 [shape = 'u8[16384]{0}', space=vmem, size = 0x4000, scoped, tag = 'input window, operand 4, single buffered']
    #allocation10 [shape = 's32[1]{0}', space=sflag, size = 0x4, scoped, tag = 'scoped memory for sentiment_cla_forward.1']
    #allocation11 [shape = 'u8[512]{0}', space=vmem, size = 0x400, scoped, tag = 'input window, operand 6, single buffered']
    #allocation12 [shape = 'u8[512]{0}', space=vmem, size = 0x400, scoped, tag = 'input window, operand 7, single buffered']
    #allocation13 [shape = 's32[1]{0}', space=sflag, size = 0x4, scoped, tag = 'scoped memory for sentiment_cla_forward.1']
    #allocation14 [shape = 'u8[196608]{0}', space=vmem, size = 0x30000, scoped, tag = 'input window, operand 8, single buffered']
    #allocation15 [shape = 'u8[3072]{0}', space=vmem, size = 0xc00, scoped, tag = 'input window, operand 9, single buffered']
    #allocation16 [shape = 's32[1]{0}', space=sflag, size = 0x4, scoped, tag = 'scoped memory for sentiment_cla_forward.1']
    #allocation17 [shape = 'u8[65536]{0}', space=vmem, size = 0x10000, scoped, tag = 'input window, operand 10, single buffered']
    #allocation18 [shape = 'u8[1024]{0}', space=vmem, size = 0x400, scoped, tag = 'input window, operand 11, single buffered']
    #allocation19 [shape = 's32[1]{0}', space=sflag, size = 0x4, scoped, tag = 'scoped memory for sentiment_cla_forward.1']
    #allocation20 [shape = 'u8[131072]{0}', space=vmem, size = 0x20000, scoped, tag = 'input window, operand 12, single buffered']
    #allocation21 [shape = 'u8[2048]{0}', space=vmem, size = 0x800, scoped, tag = 'input window, operand 13, single buffered']
    #allocation22 [shape = 's32[1]{0}', space=sflag, size = 0x4, scoped, tag = 'scoped memory for sentiment_cla_forward.1']
    #allocation23 [shape = 'u8[131072]{0}', space=vmem, size = 0x20000, scoped, tag = 'input window, operand 14, single buffered']
    #allocation24 [shape = 'u8[1024]{0}', space=vmem, size = 0x400, scoped, tag = 'input window, operand 15, single buffered']
    #allocation25 [shape = 's32[1]{0}', space=sflag, size = 0x4, scoped, tag = 'scoped memory for sentiment_cla_forward.1']
    #allocation26 [shape = 'u8[1024]{0}', space=vmem, size = 0x400, scoped, tag = 'input window, operand 17, single buffered']
    #allocation27 [shape = 'u8[1024]{0}', space=vmem, size = 0x400, scoped, tag = 'input window, operand 19, single buffered']
    #allocation28 [shape = 's32[1]{0}', space=sflag, size = 0x4, scoped, tag = 'scoped memory for sentiment_cla_forward.1']
    #allocation29 [shape = 'u8[512]{0}', space=vmem, size = 0x400, scoped, tag = 'input window, operand 21, single buffered']
    %44 = vsyncpa [#allocation8], 0
    %45 = vsyncpa [#allocation10], 0
    %46 = vsyncpa [#allocation13], 0
    %47 = vsyncpa [#allocation16], 0
    %48 = vsyncpa [#allocation19], 0
    %49 = vsyncpa [#allocation22], 0
    %50 = vsyncpa [#allocation25], 0
    %51 = vsyncpa [#allocation28], 0
    // Predicated region
    $region2: #{sentiment_cla_forward.1} parent=1 // pred_check
      _
    $region3: #{sentiment_cla_forward.1} parent=1 // pred_check_branch
      %53 = sbr.rel (0) target = $region5
    $region4: #{sentiment_cla_forward.1} parent=1 // pred_region
      _
    $region5: #{sentiment_cla_forward.1} parent=1 // pred_fallthru
      _
    // Predicated region
    $region6: #{sentiment_cla_forward.1} parent=1 // pred_check
      _
    $region7: #{sentiment_cla_forward.1} parent=1 // pred_check_branch
      %55 = sbr.rel (0) target = $region9
    $region8: #{sentiment_cla_forward.1} parent=1 // pred_region
      %57 = vsyncadd [#allocation8], 0
      %s58 = sshll.u32 %s3, 4
      %s59 = int_to_ptr.hbm [resolvable:$true] %s58
      %s60 = sshll.u32 [#allocation7], 4
      %s61 = int_to_ptr.vmem [resolvable:$true] %s60
      %66 = dma.hbm_to_vmem [thread:$0]  %s59, 1600, %s61, [#allocation8], 16, 16, 1
    $region9: #{sentiment_cla_forward.1} parent=1 // pred_fallthru
      _
    // Predicated region
    $region10: #{sentiment_cla_forward.1} parent=1 // pred_check
      _
    $region11: #{sentiment_cla_forward.1} parent=1 // pred_check_branch
      %68 = sbr.rel (0) target = $region13
    $region12: #{sentiment_cla_forward.1} parent=1 // pred_region
      %70 = vsyncadd [#allocation10], 0
      %s71 = sshll.u32 %s4, 4
      %s72 = int_to_ptr.hbm [resolvable:$true] %s71
      %s73 = sshll.u32 [#allocation9], 4
      %s74 = int_to_ptr.vmem [resolvable:$true] %s73
      %79 = dma.hbm_to_vmem [thread:$0]  %s72, 512, %s74, [#allocation10], 16, 16, 1
    $region13: #{sentiment_cla_forward.1} parent=1 // pred_fallthru
      _
    // Predicated region
    $region14: #{sentiment_cla_forward.1} parent=1 // pred_check
      _
    $region15: #{sentiment_cla_forward.1} parent=1 // pred_check_branch
      %81 = sbr.rel (0) target = $region17
    $region16: #{sentiment_cla_forward.1} parent=1 // pred_region
      _
    $region17: #{sentiment_cla_forward.1} parent=1 // pred_fallthru
      _
    // Predicated region
    $region18: #{sentiment_cla_forward.1} parent=1 // pred_check
      _
    $region19: #{sentiment_cla_forward.1} parent=1 // pred_check_branch
      %83 = sbr.rel (0) target = $region21
    $region20: #{sentiment_cla_forward.1} parent=1 // pred_region
      %85 = vsyncadd [#allocation10], 0
      %s87 = sshll.u32 %s6, 4
      %s88 = int_to_ptr.hbm [resolvable:$true] %s87
      %s89 = sshll.u32 [#allocation11], 4
      %s90 = int_to_ptr.vmem [resolvable:$true] %s89
      %92 = dma.hbm_to_vmem [thread:$0]  %s88, 16, %s90, [#allocation10]
    $region21: #{sentiment_cla_forward.1} parent=1 // pred_fallthru
      _
    // Predicated region
    $region22: #{sentiment_cla_forward.1} parent=1 // pred_check
      _
    $region23: #{sentiment_cla_forward.1} parent=1 // pred_check_branch
      %94 = sbr.rel (0) target = $region25
    $region24: #{sentiment_cla_forward.1} parent=1 // pred_region
      %96 = vsyncadd [#allocation13], 0
      %s98 = sshll.u32 %s7, 4
      %s99 = int_to_ptr.hbm [resolvable:$true] %s98
      %s100 = sshll.u32 [#allocation12], 4
      %s101 = int_to_ptr.vmem [resolvable:$true] %s100
      %103 = dma.hbm_to_vmem [thread:$0]  %s99, 16, %s101, [#allocation13]
    $region25: #{sentiment_cla_forward.1} parent=1 // pred_fallthru
      _
    // Predicated region
    $region26: #{sentiment_cla_forward.1} parent=1 // pred_check
      _
    $region27: #{sentiment_cla_forward.1} parent=1 // pred_check_branch
      %105 = sbr.rel (0) target = $region29
    $region28: #{sentiment_cla_forward.1} parent=1 // pred_region
      %107 = vsyncadd [#allocation13], 0
      %s108 = sshll.u32 %s8, 4
      %s109 = int_to_ptr.hbm [resolvable:$true] %s108
      %s110 = sshll.u32 [#allocation14], 4
      %s111 = int_to_ptr.vmem [resolvable:$true] %s110
      %116 = dma.hbm_to_vmem [thread:$0]  %s109, 6144, %s111, [#allocation13], 192, 192, 12
    $region29: #{sentiment_cla_forward.1} parent=1 // pred_fallthru
      _
    // Predicated region
    $region30: #{sentiment_cla_forward.1} parent=1 // pred_check
      _
    $region31: #{sentiment_cla_forward.1} parent=1 // pred_check_branch
      %118 = sbr.rel (0) target = $region33
    $region32: #{sentiment_cla_forward.1} parent=1 // pred_region
      %120 = vsyncadd [#allocation16], 0
      %s121 = sshll.u32 %s9, 4
      %s122 = int_to_ptr.hbm [resolvable:$true] %s121
      %s123 = sshll.u32 [#allocation15], 4
      %s124 = int_to_ptr.vmem [resolvable:$true] %s123
      %129 = dma.hbm_to_vmem [thread:$0]  %s122, 96, %s124, [#allocation16], 48, 48, 3
    $region33: #{sentiment_cla_forward.1} parent=1 // pred_fallthru
      _
    // Predicated region
    $region34: #{sentiment_cla_forward.1} parent=1 // pred_check
      _
    $region35: #{sentiment_cla_forward.1} parent=1 // pred_check_branch
      %131 = sbr.rel (0) target = $region37
    $region36: #{sentiment_cla_forward.1} parent=1 // pred_region
      %133 = vsyncadd [#allocation16], 0
      %s134 = sshll.u32 %s10, 4
      %s135 = int_to_ptr.hbm [resolvable:$true] %s134
      %s136 = sshll.u32 [#allocation17], 4
      %s137 = int_to_ptr.vmem [resolvable:$true] %s136
      %142 = dma.hbm_to_vmem [thread:$0]  %s135, 2048, %s137, [#allocation16], 64, 64, 4
    $region37: #{sentiment_cla_forward.1} parent=1 // pred_fallthru
      _
    // Predicated region
    $region38: #{sentiment_cla_forward.1} parent=1 // pred_check
      _
    $region39: #{sentiment_cla_forward.1} parent=1 // pred_check_branch
      %144 = sbr.rel (0) target = $region41
    $region40: #{sentiment_cla_forward.1} parent=1 // pred_region
      %146 = vsyncadd [#allocation19], 0
      %s147 = sshll.u32 %s11, 4
      %s148 = int_to_ptr.hbm [resolvable:$true] %s147
      %s149 = sshll.u32 [#allocation18], 4
      %s150 = int_to_ptr.vmem [resolvable:$true] %s149
      %155 = dma.hbm_to_vmem [thread:$0]  %s148, 32, %s150, [#allocation19], 16, 16, 1
    $region41: #{sentiment_cla_forward.1} parent=1 // pred_fallthru
      _
    // Predicated region
    $region42: #{sentiment_cla_forward.1} parent=1 // pred_check
      _
    $region43: #{sentiment_cla_forward.1} parent=1 // pred_check_branch
      %157 = sbr.rel (0) target = $region45
    $region44: #{sentiment_cla_forward.1} parent=1 // pred_region
      %159 = vsyncadd [#allocation19], 0
      %s160 = sshll.u32 %s12, 4
      %s161 = int_to_ptr.hbm [resolvable:$true] %s160
      %s162 = sshll.u32 [#allocation20], 4
      %s163 = int_to_ptr.vmem [resolvable:$true] %s162
      %168 = dma.hbm_to_vmem [thread:$0]  %s161, 4096, %s163, [#allocation19], 128, 128, 8
    $region45: #{sentiment_cla_forward.1} parent=1 // pred_fallthru
      _
    // Predicated region
    $region46: #{sentiment_cla_forward.1} parent=1 // pred_check
      _
    $region47: #{sentiment_cla_forward.1} parent=1 // pred_check_branch
      %170 = sbr.rel (0) target = $region49
    $region48: #{sentiment_cla_forward.1} parent=1 // pred_region
      %172 = vsyncadd [#allocation22], 0
      %s173 = sshll.u32 %s13, 4
      %s174 = int_to_ptr.hbm [resolvable:$true] %s173
      %s175 = sshll.u32 [#allocation21], 4
      %s176 = int_to_ptr.vmem [resolvable:$true] %s175
      %181 = dma.hbm_to_vmem [thread:$0]  %s174, 64, %s176, [#allocation22], 32, 32, 2
    $region49: #{sentiment_cla_forward.1} parent=1 // pred_fallthru
      _
    // Predicated region
    $region50: #{sentiment_cla_forward.1} parent=1 // pred_check
      _
    $region51: #{sentiment_cla_forward.1} parent=1 // pred_check_branch
      %183 = sbr.rel (0) target = $region53
    $region52: #{sentiment_cla_forward.1} parent=1 // pred_region
      %185 = vsyncadd [#allocation22], 0
      %s186 = sshll.u32 %s14, 4
      %s187 = int_to_ptr.hbm [resolvable:$true] %s186
      %s188 = sshll.u32 [#allocation23], 4
      %s189 = int_to_ptr.vmem [resolvable:$true] %s188
      %194 = dma.hbm_to_vmem [thread:$0]  %s187, 4096, %s189, [#allocation22], 64, 64, 4
    $region53: #{sentiment_cla_forward.1} parent=1 // pred_fallthru
      _
    // Predicated region
    $region54: #{sentiment_cla_forward.1} parent=1 // pred_check
      _
    $region55: #{sentiment_cla_forward.1} parent=1 // pred_check_branch
      %196 = sbr.rel (0) target = $region57
    $region56: #{sentiment_cla_forward.1} parent=1 // pred_region
      %198 = vsyncadd [#allocation25], 0
      %s199 = sshll.u32 %s15, 4
      %s200 = int_to_ptr.hbm [resolvable:$true] %s199
      %s201 = sshll.u32 [#allocation24], 4
      %s202 = int_to_ptr.vmem [resolvable:$true] %s201
      %207 = dma.hbm_to_vmem [thread:$0]  %s200, 32, %s202, [#allocation25], 16, 16, 1
    $region57: #{sentiment_cla_forward.1} parent=1 // pred_fallthru
      _
    // Predicated region
    $region58: #{sentiment_cla_forward.1} parent=1 // pred_check
      _
    $region59: #{sentiment_cla_forward.1} parent=1 // pred_check_branch
      %209 = sbr.rel (0) target = $region61
    $region60: #{sentiment_cla_forward.1} parent=1 // pred_region
      _
    $region61: #{sentiment_cla_forward.1} parent=1 // pred_fallthru
      _
    // Predicated region
    $region62: #{sentiment_cla_forward.1} parent=1 // pred_check
      _
    $region63: #{sentiment_cla_forward.1} parent=1 // pred_check_branch
      %211 = sbr.rel (0) target = $region65
    $region64: #{sentiment_cla_forward.1} parent=1 // pred_region
      %213 = vsyncadd [#allocation25], 0
      %s214 = sshll.u32 %s17, 4
      %s215 = int_to_ptr.hbm [resolvable:$true] %s214
      %s216 = sshll.u32 [#allocation26], 4
      %s217 = int_to_ptr.vmem [resolvable:$true] %s216
      %222 = dma.hbm_to_vmem [thread:$0]  %s215, 32, %s217, [#allocation25], 16, 16, 1
    $region65: #{sentiment_cla_forward.1} parent=1 // pred_fallthru
      _
    // Predicated region
    $region66: #{sentiment_cla_forward.1} parent=1 // pred_check
      _
    $region67: #{sentiment_cla_forward.1} parent=1 // pred_check_branch
      %224 = sbr.rel (0) target = $region69
    $region68: #{sentiment_cla_forward.1} parent=1 // pred_region
      _
    $region69: #{sentiment_cla_forward.1} parent=1 // pred_fallthru
      _
    // Predicated region
    $region70: #{sentiment_cla_forward.1} parent=1 // pred_check
      _
    $region71: #{sentiment_cla_forward.1} parent=1 // pred_check_branch
      %226 = sbr.rel (0) target = $region73
    $region72: #{sentiment_cla_forward.1} parent=1 // pred_region
      %228 = vsyncadd [#allocation28], 0
      %s229 = sshll.u32 %s19, 4
      %s230 = int_to_ptr.hbm [resolvable:$true] %s229
      %s231 = sshll.u32 [#allocation27], 4
      %s232 = int_to_ptr.vmem [resolvable:$true] %s231
      %237 = dma.hbm_to_vmem [thread:$0]  %s230, 32, %s232, [#allocation28], 16, 16, 1
    $region73: #{sentiment_cla_forward.1} parent=1 // pred_fallthru
      _
    // Predicated region
    $region74: #{sentiment_cla_forward.1} parent=1 // pred_check
      _
    $region75: #{sentiment_cla_forward.1} parent=1 // pred_check_branch
      %239 = sbr.rel (0) target = $region77
    $region76: #{sentiment_cla_forward.1} parent=1 // pred_region
      _
    $region77: #{sentiment_cla_forward.1} parent=1 // pred_fallthru
      _
    // Predicated region
    $region78: #{sentiment_cla_forward.1} parent=1 // pred_check
      _
    $region79: #{sentiment_cla_forward.1} parent=1 // pred_check_branch
      %241 = sbr.rel (0) target = $region81
    $region80: #{sentiment_cla_forward.1} parent=1 // pred_region
      %243 = vsyncadd [#allocation28], 0
      %s245 = sshll.u32 %s21, 4
      %s246 = int_to_ptr.hbm [resolvable:$true] %s245
      %s247 = sshll.u32 [#allocation29], 4
      %s248 = int_to_ptr.vmem [resolvable:$true] %s247
      %250 = dma.hbm_to_vmem [thread:$0]  %s246, 16, %s248, [#allocation28]
    $region81: #{sentiment_cla_forward.1} parent=1 // pred_fallthru
      _
    // Predicated region
    $region82: #{sentiment_cla_forward.1} parent=1 // pred_check
      _
    $region83: #{sentiment_cla_forward.1} parent=1 // pred_check_branch
      %252 = sbr.rel (0) target = $region85
    $region84: #{sentiment_cla_forward.1} parent=1 // pred_region
      _
    $region85: #{sentiment_cla_forward.1} parent=1 // pred_fallthru
      _
    // Predicated region
    $region86: #{sentiment_cla_forward.1} parent=1 // pred_check
      _
    $region87: #{sentiment_cla_forward.1} parent=1 // pred_check_branch
      %254 = sbr.rel (0) target = $region89
    $region88: #{sentiment_cla_forward.1} parent=1 // pred_region
      _
    $region89: #{sentiment_cla_forward.1} parent=1 // pred_fallthru
      _
    // Predicated region
    $region90: #{sentiment_cla_forward.1} parent=1 // pred_check
      _
    $region91: #{sentiment_cla_forward.1} parent=1 // pred_check_branch
      %256 = sbr.rel (0) target = $region93
    $region92: #{sentiment_cla_forward.1} parent=1 // pred_region
      %258 = dma.done [#allocation8], 1600
    $region93: #{sentiment_cla_forward.1} parent=1 // pred_fallthru
      _
    // Predicated region
    $region94: #{sentiment_cla_forward.1} parent=1 // pred_check
      _
    $region95: #{sentiment_cla_forward.1} parent=1 // pred_check_branch
      %260 = sbr.rel (0) target = $region97
    $region96: #{sentiment_cla_forward.1} parent=1 // pred_region
      %262 = dma.done [#allocation10], 512
    $region97: #{sentiment_cla_forward.1} parent=1 // pred_fallthru
      _
    // Predicated region
    $region98: #{sentiment_cla_forward.1} parent=1 // pred_check
      _
    $region99: #{sentiment_cla_forward.1} parent=1 // pred_check_branch
      %264 = sbr.rel (0) target = $region101
    $region100: #{sentiment_cla_forward.1} parent=1 // pred_region
      %266 = dma.done [#allocation10], 16
    $region101: #{sentiment_cla_forward.1} parent=1 // pred_fallthru
      _
    // Predicated region
    $region102: #{sentiment_cla_forward.1} parent=1 // pred_check
      _
    $region103: #{sentiment_cla_forward.1} parent=1 // pred_check_branch
      %268 = sbr.rel (0) target = $region105
    $region104: #{sentiment_cla_forward.1} parent=1 // pred_region
      %270 = dma.done [#allocation13], 16
    $region105: #{sentiment_cla_forward.1} parent=1 // pred_fallthru
      _
    // Predicated region
    $region106: #{sentiment_cla_forward.1} parent=1 // pred_check
      _
    $region107: #{sentiment_cla_forward.1} parent=1 // pred_check_branch
      %272 = sbr.rel (0) target = $region109
    $region108: #{sentiment_cla_forward.1} parent=1 // pred_region
      %274 = dma.done [#allocation13], 6144
    $region109: #{sentiment_cla_forward.1} parent=1 // pred_fallthru
      _
    // Predicated region
    $region110: #{sentiment_cla_forward.1} parent=1 // pred_check
      _
    $region111: #{sentiment_cla_forward.1} parent=1 // pred_check_branch
      %276 = sbr.rel (0) target = $region113
    $region112: #{sentiment_cla_forward.1} parent=1 // pred_region
      %278 = dma.done [#allocation16], 96
    $region113: #{sentiment_cla_forward.1} parent=1 // pred_fallthru
      _
    // Predicated region
    $region114: #{sentiment_cla_forward.1} parent=1 // pred_check
      _
    $region115: #{sentiment_cla_forward.1} parent=1 // pred_check_branch
      %280 = sbr.rel (0) target = $region117
    $region116: #{sentiment_cla_forward.1} parent=1 // pred_region
      %282 = dma.done [#allocation16], 2048
    $region117: #{sentiment_cla_forward.1} parent=1 // pred_fallthru
      _
    // Predicated region
    $region118: #{sentiment_cla_forward.1} parent=1 // pred_check
      _
    $region119: #{sentiment_cla_forward.1} parent=1 // pred_check_branch
      %284 = sbr.rel (0) target = $region121
    $region120: #{sentiment_cla_forward.1} parent=1 // pred_region
      %286 = dma.done [#allocation19], 32
    $region121: #{sentiment_cla_forward.1} parent=1 // pred_fallthru
      _
    // Predicated region
    $region122: #{sentiment_cla_forward.1} parent=1 // pred_check
      _
    $region123: #{sentiment_cla_forward.1} parent=1 // pred_check_branch
      %288 = sbr.rel (0) target = $region125
    $region124: #{sentiment_cla_forward.1} parent=1 // pred_region
      %290 = dma.done [#allocation19], 4096
    $region125: #{sentiment_cla_forward.1} parent=1 // pred_fallthru
      _
    // Predicated region
    $region126: #{sentiment_cla_forward.1} parent=1 // pred_check
      _
    $region127: #{sentiment_cla_forward.1} parent=1 // pred_check_branch
      %292 = sbr.rel (0) target = $region129
    $region128: #{sentiment_cla_forward.1} parent=1 // pred_region
      %294 = dma.done [#allocation22], 64
    $region129: #{sentiment_cla_forward.1} parent=1 // pred_fallthru
      _
    // Predicated region
    $region130: #{sentiment_cla_forward.1} parent=1 // pred_check
      _
    $region131: #{sentiment_cla_forward.1} parent=1 // pred_check_branch
      %296 = sbr.rel (0) target = $region133
    $region132: #{sentiment_cla_forward.1} parent=1 // pred_region
      %298 = dma.done [#allocation22], 4096
    $region133: #{sentiment_cla_forward.1} parent=1 // pred_fallthru
      _
    // Predicated region
    $region134: #{sentiment_cla_forward.1} parent=1 // pred_check
      _
    $region135: #{sentiment_cla_forward.1} parent=1 // pred_check_branch
      %300 = sbr.rel (0) target = $region137
    $region136: #{sentiment_cla_forward.1} parent=1 // pred_region
      %302 = dma.done [#allocation25], 32
    $region137: #{sentiment_cla_forward.1} parent=1 // pred_fallthru
      _
    // Predicated region
    $region138: #{sentiment_cla_forward.1} parent=1 // pred_check
      _
    $region139: #{sentiment_cla_forward.1} parent=1 // pred_check_branch
      %304 = sbr.rel (0) target = $region141
    $region140: #{sentiment_cla_forward.1} parent=1 // pred_region
      %306 = dma.done [#allocation25], 32
    $region141: #{sentiment_cla_forward.1} parent=1 // pred_fallthru
      _
    // Predicated region
    $region142: #{sentiment_cla_forward.1} parent=1 // pred_check
      _
    $region143: #{sentiment_cla_forward.1} parent=1 // pred_check_branch
      %308 = sbr.rel (0) target = $region145
    $region144: #{sentiment_cla_forward.1} parent=1 // pred_region
      %310 = dma.done [#allocation28], 32
    $region145: #{sentiment_cla_forward.1} parent=1 // pred_fallthru
      _
    // Predicated region
    $region146: #{sentiment_cla_forward.1} parent=1 // pred_check
      _
    $region147: #{sentiment_cla_forward.1} parent=1 // pred_check_branch
      %312 = sbr.rel (0) target = $region149
    $region148: #{sentiment_cla_forward.1} parent=1 // pred_region
      %314 = dma.done [#allocation28], 16
    $region149: #{sentiment_cla_forward.1} parent=1 // pred_fallthru
      _
    %s316 = smul.u32 0, 2
    %s317 = smul.u32 %s316, 128
    %s318 = sld [smem:[#allocation4 + %s317]]
    %s319 = sld [smem:[#allocation5 + %s317]]
    %s320 = scalar_lea.vmem [#allocation7], %s318
    %v321 = vld [vmem:[%s320] sm:$0x1]
    %v322 = vld [vmem:[#allocation9] sm:$0x1]
    %v323 = vadd.f32 %v321, %v322
    %s324 = scalar_lea.vmem %s5, %s319
    %v325 = vld [vmem:[%s324] sm:$0x1]
    %v326 = vadd.f32 %v323, %v325
    %327 = vst [vmem:[#allocation2] sm:$0x1] %v326
    %s328 = sadd.s32 %s317, 1
    %s329 = sld [smem:[#allocation4 + %s328]]
    %s330 = sld [smem:[#allocation5 + %s328]]
    %s331 = scalar_lea.vmem [#allocation7], %s329
    %v332 = vld [vmem:[%s331] sm:$0x1]
    %s333 = scalar_lea.vmem [#allocation9], 1
    %v334 = vld [vmem:[%s333] sm:$0x1]
    %v335 = vadd.f32 %v332, %v334
    %s336 = scalar_lea.vmem %s5, %s330
    %v337 = vld [vmem:[%s336] sm:$0x1]
    %v338 = vadd.f32 %v335, %v337
    %339 = vst [vmem:[#allocation2 + $0x1] sm:$0x1] %v338
    %s340 = sadd.s32 %s317, 2
    %s341 = sld [smem:[#allocation4 + %s340]]
    %s342 = sld [smem:[#allocation5 + %s340]]
    %s343 = scalar_lea.vmem [#allocation7], %s341
    %v344 = vld [vmem:[%s343] sm:$0x1]
    %s345 = scalar_lea.vmem [#allocation9], 2
    %v346 = vld [vmem:[%s345] sm:$0x1]
    %v347 = vadd.f32 %v344, %v346
    %s348 = scalar_lea.vmem %s5, %s342
    %v349 = vld [vmem:[%s348] sm:$0x1]
    %v350 = vadd.f32 %v347, %v349
    %351 = vst [vmem:[#allocation2 + $0x2] sm:$0x1] %v350
    %s352 = sadd.s32 %s317, 3
    %s353 = sld [smem:[#allocation4 + %s352]]
    %s354 = sld [smem:[#allocation5 + %s352]]
    %s355 = scalar_lea.vmem [#allocation7], %s353
    %v356 = vld [vmem:[%s355] sm:$0x1]
    %s357 = scalar_lea.vmem [#allocation9], 3
    %v358 = vld [vmem:[%s357] sm:$0x1]
    %v359 = vadd.f32 %v356, %v358
    %s360 = scalar_lea.vmem %s5, %s354
    %v361 = vld [vmem:[%s360] sm:$0x1]
    %v362 = vadd.f32 %v359, %v361
    %363 = vst [vmem:[#allocation2 + $0x3] sm:$0x1] %v362
    %s364 = sadd.s32 %s317, 4
    %s365 = sld [smem:[#allocation4 + %s364]]
    %s366 = sld [smem:[#allocation5 + %s364]]
    %s367 = scalar_lea.vmem [#allocation7], %s365
    %v368 = vld [vmem:[%s367] sm:$0x1]
    %s369 = scalar_lea.vmem [#allocation9], 4
    %v370 = vld [vmem:[%s369] sm:$0x1]
    %v371 = vadd.f32 %v368, %v370
    %s372 = scalar_lea.vmem %s5, %s366
    %v373 = vld [vmem:[%s372] sm:$0x1]
    %v374 = vadd.f32 %v371, %v373
    %375 = vst [vmem:[#allocation2 + $0x4] sm:$0x1] %v374
    %s376 = sadd.s32 %s317, 5
    %s377 = sld [smem:[#allocation4 + %s376]]
    %s378 = sld [smem:[#allocation5 + %s376]]
    %s379 = scalar_lea.vmem [#allocation7], %s377
    %v380 = vld [vmem:[%s379] sm:$0x1]
    %s381 = scalar_lea.vmem [#allocation9], 5
    %v382 = vld [vmem:[%s381] sm:$0x1]
    %v383 = vadd.f32 %v380, %v382
    %s384 = scalar_lea.vmem %s5, %s378
    %v385 = vld [vmem:[%s384] sm:$0x1]
    %v386 = vadd.f32 %v383, %v385
    %387 = vst [vmem:[#allocation2 + $0x5] sm:$0x1] %v386
    %s388 = sadd.s32 %s317, 6
    %s389 = sld [smem:[#allocation4 + %s388]]
    %s390 = sld [smem:[#allocation5 + %s388]]
    %s391 = scalar_lea.vmem [#allocation7], %s389
    %v392 = vld [vmem:[%s391] sm:$0x1]
    %s393 = scalar_lea.vmem [#allocation9], 6
    %v394 = vld [vmem:[%s393] sm:$0x1]
    %v395 = vadd.f32 %v392, %v394
    %s396 = scalar_lea.vmem %s5, %s390
    %v397 = vld [vmem:[%s396] sm:$0x1]
    %v398 = vadd.f32 %v395, %v397
    %399 = vst [vmem:[#allocation2 + $0x6] sm:$0x1] %v398
    %s400 = sadd.s32 %s317, 7
    %s401 = sld [smem:[#allocation4 + %s400]]
    %s402 = sld [smem:[#allocation5 + %s400]]
    %s403 = scalar_lea.vmem [#allocation7], %s401
    %v404 = vld [vmem:[%s403] sm:$0x1]
    %s405 = scalar_lea.vmem [#allocation9], 7
    %v406 = vld [vmem:[%s405] sm:$0x1]
    %v407 = vadd.f32 %v404, %v406
    %s408 = scalar_lea.vmem %s5, %s402
    %v409 = vld [vmem:[%s408] sm:$0x1]
    %v410 = vadd.f32 %v407, %v409
    %411 = vst [vmem:[#allocation2 + $0x7] sm:$0x1] %v410
    %s412 = sadd.s32 %s317, 8
    %s413 = sld [smem:[#allocation4 + %s412]]
    %s414 = sld [smem:[#allocation5 + %s412]]
    %s415 = scalar_lea.vmem [#allocation7], %s413
    %v416 = vld [vmem:[%s415] sm:$0x1]
    %s417 = scalar_lea.vmem [#allocation9], 8
    %v418 = vld [vmem:[%s417] sm:$0x1]
    %v419 = vadd.f32 %v416, %v418
    %s420 = scalar_lea.vmem %s5, %s414
    %v421 = vld [vmem:[%s420] sm:$0x1]
    %v422 = vadd.f32 %v419, %v421
    %423 = vst [vmem:[#allocation2 + $0x8] sm:$0x1] %v422
    %s424 = sadd.s32 %s317, 9
    %s425 = sld [smem:[#allocation4 + %s424]]
    %s426 = sld [smem:[#allocation5 + %s424]]
    %s427 = scalar_lea.vmem [#allocation7], %s425
    %v428 = vld [vmem:[%s427] sm:$0x1]
    %s429 = scalar_lea.vmem [#allocation9], 9
    %v430 = vld [vmem:[%s429] sm:$0x1]
    %v431 = vadd.f32 %v428, %v430
    %s432 = scalar_lea.vmem %s5, %s426
    %v433 = vld [vmem:[%s432] sm:$0x1]
    %v434 = vadd.f32 %v431, %v433
    %435 = vst [vmem:[#allocation2 + $0x9] sm:$0x1] %v434
    %s436 = sadd.s32 %s317, 10
    %s437 = sld [smem:[#allocation4 + %s436]]
    %s438 = sld [smem:[#allocation5 + %s436]]
    %s439 = scalar_lea.vmem [#allocation7], %s437
    %v440 = vld [vmem:[%s439] sm:$0x1]
    %s441 = scalar_lea.vmem [#allocation9], 10
    %v442 = vld [vmem:[%s441] sm:$0x1]
    %v443 = vadd.f32 %v440, %v442
    %s444 = scalar_lea.vmem %s5, %s438
    %v445 = vld [vmem:[%s444] sm:$0x1]
    %v446 = vadd.f32 %v443, %v445
    %447 = vst [vmem:[#allocation2 + $0xa] sm:$0x1] %v446
    %s448 = sadd.s32 %s317, 11
    %s449 = sld [smem:[#allocation4 + %s448]]
    %s450 = sld [smem:[#allocation5 + %s448]]
    %s451 = scalar_lea.vmem [#allocation7], %s449
    %v452 = vld [vmem:[%s451] sm:$0x1]
    %s453 = scalar_lea.vmem [#allocation9], 11
    %v454 = vld [vmem:[%s453] sm:$0x1]
    %v455 = vadd.f32 %v452, %v454
    %s456 = scalar_lea.vmem %s5, %s450
    %v457 = vld [vmem:[%s456] sm:$0x1]
    %v458 = vadd.f32 %v455, %v457
    %459 = vst [vmem:[#allocation2 + $0xb] sm:$0x1] %v458
    %s460 = sadd.s32 %s317, 12
    %s461 = sld [smem:[#allocation4 + %s460]]
    %s462 = sld [smem:[#allocation5 + %s460]]
    %s463 = scalar_lea.vmem [#allocation7], %s461
    %v464 = vld [vmem:[%s463] sm:$0x1]
    %s465 = scalar_lea.vmem [#allocation9], 12
    %v466 = vld [vmem:[%s465] sm:$0x1]
    %v467 = vadd.f32 %v464, %v466
    %s468 = scalar_lea.vmem %s5, %s462
    %v469 = vld [vmem:[%s468] sm:$0x1]
    %v470 = vadd.f32 %v467, %v469
    %471 = vst [vmem:[#allocation2 + $0xc] sm:$0x1] %v470
    %s472 = sadd.s32 %s317, 13
    %s473 = sld [smem:[#allocation4 + %s472]]
    %s474 = sld [smem:[#allocation5 + %s472]]
    %s475 = scalar_lea.vmem [#allocation7], %s473
    %v476 = vld [vmem:[%s475] sm:$0x1]
    %s477 = scalar_lea.vmem [#allocation9], 13
    %v478 = vld [vmem:[%s477] sm:$0x1]
    %v479 = vadd.f32 %v476, %v478
    %s480 = scalar_lea.vmem %s5, %s474
    %v481 = vld [vmem:[%s480] sm:$0x1]
    %v482 = vadd.f32 %v479, %v481
    %483 = vst [vmem:[#allocation2 + $0xd] sm:$0x1] %v482
    %s484 = sadd.s32 %s317, 14
    %s485 = sld [smem:[#allocation4 + %s484]]
    %s486 = sld [smem:[#allocation5 + %s484]]
    %s487 = scalar_lea.vmem [#allocation7], %s485
    %v488 = vld [vmem:[%s487] sm:$0x1]
    %s489 = scalar_lea.vmem [#allocation9], 14
    %v490 = vld [vmem:[%s489] sm:$0x1]
    %v491 = vadd.f32 %v488, %v490
    %s492 = scalar_lea.vmem %s5, %s486
    %v493 = vld [vmem:[%s492] sm:$0x1]
    %v494 = vadd.f32 %v491, %v493
    %495 = vst [vmem:[#allocation2 + $0xe] sm:$0x1] %v494
    %s496 = sadd.s32 %s317, 15
    %s497 = sld [smem:[#allocation4 + %s496]]
    %s498 = sld [smem:[#allocation5 + %s496]]
    %s499 = scalar_lea.vmem [#allocation7], %s497
    %v500 = vld [vmem:[%s499] sm:$0x1]
    %s501 = scalar_lea.vmem [#allocation9], 15
    %v502 = vld [vmem:[%s501] sm:$0x1]
    %v503 = vadd.f32 %v500, %v502
    %s504 = scalar_lea.vmem %s5, %s498
    %v505 = vld [vmem:[%s504] sm:$0x1]
    %v506 = vadd.f32 %v503, %v505
    %507 = vst [vmem:[#allocation2 + $0xf] sm:$0x1] %v506
    %s508 = sadd.s32 %s316, 1
    %s509 = smul.u32 %s508, 128
    %s510 = sld [smem:[#allocation4 + %s509]]
    %s511 = sld [smem:[#allocation5 + %s509]]
    %s512 = scalar_lea.vmem [#allocation7], %s510
    %v513 = vld [vmem:[%s512] sm:$0x1]
    %v514 = vld [vmem:[#allocation9] sm:$0x1]
    %v515 = vadd.f32 %v513, %v514
    %s516 = scalar_lea.vmem %s5, %s511
    %v517 = vld [vmem:[%s516] sm:$0x1]
    %v518 = vadd.f32 %v515, %v517
    %519 = vst [vmem:[#allocation2 + $0x10] sm:$0x1] %v518
    %s520 = sadd.s32 %s509, 1
    %s521 = sld [smem:[#allocation4 + %s520]]
    %s522 = sld [smem:[#allocation5 + %s520]]
    %s523 = scalar_lea.vmem [#allocation7], %s521
    %v524 = vld [vmem:[%s523] sm:$0x1]
    %v525 = vld [vmem:[%s333] sm:$0x1]
    %v526 = vadd.f32 %v524, %v525
    %s527 = scalar_lea.vmem %s5, %s522
    %v528 = vld [vmem:[%s527] sm:$0x1]
    %v529 = vadd.f32 %v526, %v528
    %530 = vst [vmem:[#allocation2 + $0x11] sm:$0x1] %v529
    %s531 = sadd.s32 %s509, 2
    %s532 = sld [smem:[#allocation4 + %s531]]
    %s533 = sld [smem:[#allocation5 + %s531]]
    %s534 = scalar_lea.vmem [#allocation7], %s532
    %v535 = vld [vmem:[%s534] sm:$0x1]
    %v536 = vld [vmem:[%s345] sm:$0x1]
    %v537 = vadd.f32 %v535, %v536
    %s538 = scalar_lea.vmem %s5, %s533
    %v539 = vld [vmem:[%s538] sm:$0x1]
    %v540 = vadd.f32 %v537, %v539
    %541 = vst [vmem:[#allocation2 + $0x12] sm:$0x1] %v540
    %s542 = sadd.s32 %s509, 3
    %s543 = sld [smem:[#allocation4 + %s542]]
    %s544 = sld [smem:[#allocation5 + %s542]]
    %s545 = scalar_lea.vmem [#allocation7], %s543
    %v546 = vld [vmem:[%s545] sm:$0x1]
    %v547 = vld [vmem:[%s357] sm:$0x1]
    %v548 = vadd.f32 %v546, %v547
    %s549 = scalar_lea.vmem %s5, %s544
    %v550 = vld [vmem:[%s549] sm:$0x1]
    %v551 = vadd.f32 %v548, %v550
    %552 = vst [vmem:[#allocation2 + $0x13] sm:$0x1] %v551
    %s553 = sadd.s32 %s509, 4
    %s554 = sld [smem:[#allocation4 + %s553]]
    %s555 = sld [smem:[#allocation5 + %s553]]
    %s556 = scalar_lea.vmem [#allocation7], %s554
    %v557 = vld [vmem:[%s556] sm:$0x1]
    %v558 = vld [vmem:[%s369] sm:$0x1]
    %v559 = vadd.f32 %v557, %v558
    %s560 = scalar_lea.vmem %s5, %s555
    %v561 = vld [vmem:[%s560] sm:$0x1]
    %v562 = vadd.f32 %v559, %v561
    %563 = vst [vmem:[#allocation2 + $0x14] sm:$0x1] %v562
    %s564 = sadd.s32 %s509, 5
    %s565 = sld [smem:[#allocation4 + %s564]]
    %s566 = sld [smem:[#allocation5 + %s564]]
    %s567 = scalar_lea.vmem [#allocation7], %s565
    %v568 = vld [vmem:[%s567] sm:$0x1]
    %v569 = vld [vmem:[%s381] sm:$0x1]
    %v570 = vadd.f32 %v568, %v569
    %s571 = scalar_lea.vmem %s5, %s566
    %v572 = vld [vmem:[%s571] sm:$0x1]
    %v573 = vadd.f32 %v570, %v572
    %574 = vst [vmem:[#allocation2 + $0x15] sm:$0x1] %v573
    %s575 = sadd.s32 %s509, 6
    %s576 = sld [smem:[#allocation4 + %s575]]
    %s577 = sld [smem:[#allocation5 + %s575]]
    %s578 = scalar_lea.vmem [#allocation7], %s576
    %v579 = vld [vmem:[%s578] sm:$0x1]
    %v580 = vld [vmem:[%s393] sm:$0x1]
    %v581 = vadd.f32 %v579, %v580
    %s582 = scalar_lea.vmem %s5, %s577
    %v583 = vld [vmem:[%s582] sm:$0x1]
    %v584 = vadd.f32 %v581, %v583
    %585 = vst [vmem:[#allocation2 + $0x16] sm:$0x1] %v584
    %s586 = sadd.s32 %s509, 7
    %s587 = sld [smem:[#allocation4 + %s586]]
    %s588 = sld [smem:[#allocation5 + %s586]]
    %s589 = scalar_lea.vmem [#allocation7], %s587
    %v590 = vld [vmem:[%s589] sm:$0x1]
    %v591 = vld [vmem:[%s405] sm:$0x1]
    %v592 = vadd.f32 %v590, %v591
    %s593 = scalar_lea.vmem %s5, %s588
    %v594 = vld [vmem:[%s593] sm:$0x1]
    %v595 = vadd.f32 %v592, %v594
    %596 = vst [vmem:[#allocation2 + $0x17] sm:$0x1] %v595
    %s597 = sadd.s32 %s509, 8
    %s598 = sld [smem:[#allocation4 + %s597]]
    %s599 = sld [smem:[#allocation5 + %s597]]
    %s600 = scalar_lea.vmem [#allocation7], %s598
    %v601 = vld [vmem:[%s600] sm:$0x1]
    %v602 = vld [vmem:[%s417] sm:$0x1]
    %v603 = vadd.f32 %v601, %v602
    %s604 = scalar_lea.vmem %s5, %s599
    %v605 = vld [vmem:[%s604] sm:$0x1]
    %v606 = vadd.f32 %v603, %v605
    %607 = vst [vmem:[#allocation2 + $0x18] sm:$0x1] %v606
    %s608 = sadd.s32 %s509, 9
    %s609 = sld [smem:[#allocation4 + %s608]]
    %s610 = sld [smem:[#allocation5 + %s608]]
    %s611 = scalar_lea.vmem [#allocation7], %s609
    %v612 = vld [vmem:[%s611] sm:$0x1]
    %v613 = vld [vmem:[%s429] sm:$0x1]
    %v614 = vadd.f32 %v612, %v613
    %s615 = scalar_lea.vmem %s5, %s610
    %v616 = vld [vmem:[%s615] sm:$0x1]
    %v617 = vadd.f32 %v614, %v616
    %618 = vst [vmem:[#allocation2 + $0x19] sm:$0x1] %v617
    %s619 = sadd.s32 %s509, 10
    %s620 = sld [smem:[#allocation4 + %s619]]
    %s621 = sld [smem:[#allocation5 + %s619]]
    %s622 = scalar_lea.vmem [#allocation7], %s620
    %v623 = vld [vmem:[%s622] sm:$0x1]
    %v624 = vld [vmem:[%s441] sm:$0x1]
    %v625 = vadd.f32 %v623, %v624
    %s626 = scalar_lea.vmem %s5, %s621
    %v627 = vld [vmem:[%s626] sm:$0x1]
    %v628 = vadd.f32 %v625, %v627
    %629 = vst [vmem:[#allocation2 + $0x1a] sm:$0x1] %v628
    %s630 = sadd.s32 %s509, 11
    %s631 = sld [smem:[#allocation4 + %s630]]
    %s632 = sld [smem:[#allocation5 + %s630]]
    %s633 = scalar_lea.vmem [#allocation7], %s631
    %v634 = vld [vmem:[%s633] sm:$0x1]
    %v635 = vld [vmem:[%s453] sm:$0x1]
    %v636 = vadd.f32 %v634, %v635
    %s637 = scalar_lea.vmem %s5, %s632
    %v638 = vld [vmem:[%s637] sm:$0x1]
    %v639 = vadd.f32 %v636, %v638
    %640 = vst [vmem:[#allocation2 + $0x1b] sm:$0x1] %v639
    %s641 = sadd.s32 %s509, 12
    %s642 = sld [smem:[#allocation4 + %s641]]
    %s643 = sld [smem:[#allocation5 + %s641]]
    %s644 = scalar_lea.vmem [#allocation7], %s642
    %v645 = vld [vmem:[%s644] sm:$0x1]
    %v646 = vld [vmem:[%s465] sm:$0x1]
    %v647 = vadd.f32 %v645, %v646
    %s648 = scalar_lea.vmem %s5, %s643
    %v649 = vld [vmem:[%s648] sm:$0x1]
    %v650 = vadd.f32 %v647, %v649
    %651 = vst [vmem:[#allocation2 + $0x1c] sm:$0x1] %v650
    %s652 = sadd.s32 %s509, 13
    %s653 = sld [smem:[#allocation4 + %s652]]
    %s654 = sld [smem:[#allocation5 + %s652]]
    %s655 = scalar_lea.vmem [#allocation7], %s653
    %v656 = vld [vmem:[%s655] sm:$0x1]
    %v657 = vld [vmem:[%s477] sm:$0x1]
    %v658 = vadd.f32 %v656, %v657
    %s659 = scalar_lea.vmem %s5, %s654
    %v660 = vld [vmem:[%s659] sm:$0x1]
    %v661 = vadd.f32 %v658, %v660
    %662 = vst [vmem:[#allocation2 + $0x1d] sm:$0x1] %v661
    %s663 = sadd.s32 %s509, 14
    %s664 = sld [smem:[#allocation4 + %s663]]
    %s665 = sld [smem:[#allocation5 + %s663]]
    %s666 = scalar_lea.vmem [#allocation7], %s664
    %v667 = vld [vmem:[%s666] sm:$0x1]
    %v668 = vld [vmem:[%s489] sm:$0x1]
    %v669 = vadd.f32 %v667, %v668
    %s670 = scalar_lea.vmem %s5, %s665
    %v671 = vld [vmem:[%s670] sm:$0x1]
    %v672 = vadd.f32 %v669, %v671
    %673 = vst [vmem:[#allocation2 + $0x1e] sm:$0x1] %v672
    %s674 = sadd.s32 %s509, 15
    %s675 = sld [smem:[#allocation4 + %s674]]
    %s676 = sld [smem:[#allocation5 + %s674]]
    %s677 = scalar_lea.vmem [#allocation7], %s675
    %v678 = vld [vmem:[%s677] sm:$0x1]
    %v679 = vld [vmem:[%s501] sm:$0x1]
    %v680 = vadd.f32 %v678, %v679
    %s681 = scalar_lea.vmem %s5, %s676
    %v682 = vld [vmem:[%s681] sm:$0x1]
    %v683 = vadd.f32 %v680, %v682
    %684 = vst [vmem:[#allocation2 + $0x1f] sm:$0x1] %v683
    %v685 = vld [vmem:[#allocation2] sm:$0xff]
    %v686 = vld [vmem:[#allocation2 + $0x8] sm:$0xff]
    %v687 = vld [vmem:[#allocation2 + $0x10] sm:$0xff]
    %v688 = vld [vmem:[#allocation2 + $0x18] sm:$0xff]
    %v689 = vld [vmem:[#allocation11] sm:$0x1]
    %v690 = vld [vmem:[#allocation12] sm:$0x1]
    %691 = vadd.xlane.f32.xlu0 %v685
    %v692 = vpop.xlane.xlu0 %691
    %693 = vadd.xlane.f32.xlu0 %v686
    %v694 = vpop.xlane.xlu0 %693
    %695 = vadd.xlane.f32.xlu0 %v687
    %v696 = vpop.xlane.xlu0 %695
    %697 = vadd.xlane.f32.xlu0 %v688
    %v698 = vpop.xlane.xlu0 %697
    %v699 = vrcp.pop 128.0
    %v700 = vmul.f32 128.0, %v699
    %v701 = vsub.f32 1.0, %v700
    %v702 = vmul.f32 %v699, %v701
    %v703 = vadd.f32 %v699, %v702
    %vm704 = vweird.f32 %v699
    %v705 = vsel %vm704, %v699, %v703
    %v706 = vmul.f32 %v692, %v705
    %v707 = vmul.f32 %v694, %v705
    %v708 = vmul.f32 %v696, %v705
    %v709 = vmul.f32 %v698, %v705
    %v710 = vsub.f32 %v685, %v706
    %v711 = vsub.f32 %v686, %v707
    %v712 = vsub.f32 %v687, %v708
    %v713 = vsub.f32 %v688, %v709
    %v714 = vmul.f32 %v710, %v710
    %v715 = vmul.f32 %v711, %v711
    %v716 = vmul.f32 %v712, %v712
    %v717 = vmul.f32 %v713, %v713
    %718 = vadd.xlane.f32.xlu0 %v714
    %v719 = vpop.xlane.xlu0 %718
    %720 = vadd.xlane.f32.xlu0 %v715
    %v721 = vpop.xlane.xlu0 %720
    %722 = vadd.xlane.f32.xlu0 %v716
    %v723 = vpop.xlane.xlu0 %722
    %724 = vadd.xlane.f32.xlu0 %v717
    %v725 = vpop.xlane.xlu0 %724
    %v726 = vmul.f32 %v719, %v705
    %v727 = vmul.f32 %v721, %v705
    %v728 = vmul.f32 %v723, %v705
    %v729 = vmul.f32 %v725, %v705
    %v730 = vadd.f32 %v726, 1e-12
    %v731 = vadd.f32 %v727, 1e-12
    %v732 = vadd.f32 %v728, 1e-12
    %v733 = vadd.f32 %v729, 1e-12
    %v734 = vrsqrt.pop %v730
    %v735 = vmul.f32 %v734, %v730
    %v736 = vmul.f32 %v735, %v734
    %v737 = vmul.f32 0.5, %v736
    %v738 = vsub.f32 1.5, %v737
    %v739 = vmul.f32 %v734, %v738
    %vm740 = vweird.f32 %v730
    %vm741 = vweird.f32 %v734
    %vm742 = vmor %vm740, %vm741
    %v743 = vsel %vm742, %v734, %v739
    %v744 = vrsqrt.pop %v731
    %v745 = vmul.f32 %v744, %v731
    %v746 = vmul.f32 %v745, %v744
    %v747 = vmul.f32 0.5, %v746
    %v748 = vsub.f32 1.5, %v747
    %v749 = vmul.f32 %v744, %v748
    %vm750 = vweird.f32 %v731
    %vm751 = vweird.f32 %v744
    %vm752 = vmor %vm750, %vm751
    %v753 = vsel %vm752, %v744, %v749
    %v754 = vrsqrt.pop %v732
    %v755 = vmul.f32 %v754, %v732
    %v756 = vmul.f32 %v755, %v754
    %v757 = vmul.f32 0.5, %v756
    %v758 = vsub.f32 1.5, %v757
    %v759 = vmul.f32 %v754, %v758
    %vm760 = vweird.f32 %v732
    %vm761 = vweird.f32 %v754
    %vm762 = vmor %vm760, %vm761
    %v763 = vsel %vm762, %v754, %v759
    %v764 = vrsqrt.pop %v733
    %v765 = vmul.f32 %v764, %v733
    %v766 = vmul.f32 %v765, %v764
    %v767 = vmul.f32 0.5, %v766
    %v768 = vsub.f32 1.5, %v767
    %v769 = vmul.f32 %v764, %v768
    %vm770 = vweird.f32 %v733
    %vm771 = vweird.f32 %v764
    %vm772 = vmor %vm770, %vm771
    %v773 = vsel %vm772, %v764, %v769
    %v774 = vmul.f32 %v710, %v743
    %v775 = vmul.f32 %v711, %v753
    %v776 = vmul.f32 %v712, %v763
    %v777 = vmul.f32 %v713, %v773
    %v779 = vperm.slane %v689, 0
    %v781 = vmul.f32 %v774, %v779
    %v782 = vmul.f32 %v775, %v779
    %v783 = vmul.f32 %v776, %v779
    %v784 = vmul.f32 %v777, %v779
    %v786 = vperm.slane %v690, 0
    %v788 = vadd.f32 %v781, %v786
    %v789 = vadd.f32 %v782, %v786
    %v790 = vadd.f32 %v783, %v786
    %v791 = vadd.f32 %v784, %v786
    %v792 = vld [vmem:[%s2] sm:$0x1]
    %v793 = vld [vmem:[%s2 + $0x1] sm:$0x1]
    %v794 = vcvt.s32.f32 %v792
    %v795 = vcvt.s32.f32 %v793
    %v796 = vsub.f32 1.0, %v794
    %v797 = vsub.f32 1.0, %v795
    %v798 = vmul.f32 %v796, -1e+09
    %v799 = vmul.f32 %v797, -1e+09
    %v800 = vpack.c.bf16 %v789, %v788
    %v801 = vpack.c.bf16 %v791, %v790
    %v802 = vld [vmem:[#allocation14] sm:$0xff]
    %v803 = vld [vmem:[#allocation14 + $0x8] sm:$0xf]
    %v804 = vld [vmem:[#allocation14 + $0xc] sm:$0xff]
    %v805 = vld [vmem:[#allocation14 + $0x14] sm:$0xf]
    %v806 = vld [vmem:[#allocation14 + $0x18] sm:$0xff]
    %v807 = vld [vmem:[#allocation14 + $0x20] sm:$0xf]
    %v808 = vld [vmem:[#allocation14 + $0x24] sm:$0xff]
    %v809 = vld [vmem:[#allocation14 + $0x2c] sm:$0xf]
    %v810 = vld [vmem:[#allocation14 + $0x30] sm:$0xff]
    %v811 = vld [vmem:[#allocation14 + $0x38] sm:$0xf]
    %v812 = vld [vmem:[#allocation14 + $0x3c] sm:$0xff]
    %v813 = vld [vmem:[#allocation14 + $0x44] sm:$0xf]
    %v814 = vld [vmem:[#allocation14 + $0x48] sm:$0xff]
    %v815 = vld [vmem:[#allocation14 + $0x50] sm:$0xf]
    %v816 = vld [vmem:[#allocation14 + $0x54] sm:$0xff]
    %v817 = vld [vmem:[#allocation14 + $0x5c] sm:$0xf]
    %v818 = vld [vmem:[#allocation14 + $0x60] sm:$0xff]
    %v819 = vld [vmem:[#allocation14 + $0x68] sm:$0xf]
    %v820 = vld [vmem:[#allocation14 + $0x6c] sm:$0xff]
    %v821 = vld [vmem:[#allocation14 + $0x74] sm:$0xf]
    %v822 = vld [vmem:[#allocation14 + $0x78] sm:$0xff]
    %v823 = vld [vmem:[#allocation14 + $0x80] sm:$0xf]
    %v824 = vld [vmem:[#allocation14 + $0x84] sm:$0xff]
    %v825 = vld [vmem:[#allocation14 + $0x8c] sm:$0xf]
    %v826 = vld [vmem:[#allocation14 + $0x90] sm:$0xff]
    %v827 = vld [vmem:[#allocation14 + $0x98] sm:$0xf]
    %v828 = vld [vmem:[#allocation14 + $0x9c] sm:$0xff]
    %v829 = vld [vmem:[#allocation14 + $0xa4] sm:$0xf]
    %v830 = vld [vmem:[#allocation14 + $0xa8] sm:$0xff]
    %v831 = vld [vmem:[#allocation14 + $0xb0] sm:$0xf]
    %v832 = vld [vmem:[#allocation14 + $0xb4] sm:$0xff]
    %v833 = vld [vmem:[#allocation14 + $0xbc] sm:$0xf]
    %v834 = vld [vmem:[#allocation15] sm:$0x7]
    %v836 = vperm.slane %v834, 0
    %v837 = vperm.slane %v834, 1
    %v838 = vperm.slane %v834, 2
    %v874 = vunpack.c.l.b16 %v802
    %v875 = vunpack.c.h.b16 %v802
    %v876 = vunpack.c.l.b16 %v803
    %v877 = vunpack.c.l.b16 %v804
    %v878 = vunpack.c.h.b16 %v804
    %v879 = vunpack.c.l.b16 %v805
    %v880 = vunpack.c.l.b16 %v806
    %v881 = vunpack.c.h.b16 %v806
    %v882 = vunpack.c.l.b16 %v807
    %v883 = vunpack.c.l.b16 %v808
    %v884 = vunpack.c.h.b16 %v808
    %v885 = vunpack.c.l.b16 %v809
    %v886 = vunpack.c.l.b16 %v810
    %v887 = vunpack.c.h.b16 %v810
    %v888 = vunpack.c.l.b16 %v811
    %v889 = vunpack.c.l.b16 %v812
    %v890 = vunpack.c.h.b16 %v812
    %v891 = vunpack.c.l.b16 %v813
    %v892 = vunpack.c.l.b16 %v814
    %v893 = vunpack.c.h.b16 %v814
    %v894 = vunpack.c.l.b16 %v815
    %v895 = vunpack.c.l.b16 %v816
    %v896 = vunpack.c.h.b16 %v816
    %v897 = vunpack.c.l.b16 %v817
    %v898 = vunpack.c.l.b16 %v818
    %v899 = vunpack.c.h.b16 %v818
    %v900 = vunpack.c.l.b16 %v819
    %v901 = vunpack.c.l.b16 %v820
    %v902 = vunpack.c.h.b16 %v820
    %v903 = vunpack.c.l.b16 %v821
    %v904 = vunpack.c.l.b16 %v822
    %v905 = vunpack.c.h.b16 %v822
    %v906 = vunpack.c.l.b16 %v823
    %v907 = vunpack.c.l.b16 %v824
    %v908 = vunpack.c.h.b16 %v824
    %v909 = vunpack.c.l.b16 %v825
    %v910 = vunpack.c.l.b16 %v826
    %v911 = vunpack.c.h.b16 %v826
    %v912 = vunpack.c.l.b16 %v827
    %v913 = vunpack.c.l.b16 %v828
    %v914 = vunpack.c.h.b16 %v828
    %v915 = vunpack.c.l.b16 %v829
    %v916 = vunpack.c.l.b16 %v830
    %v917 = vunpack.c.h.b16 %v830
    %v918 = vunpack.c.l.b16 %v831
    %v919 = vunpack.c.l.b16 %v832
    %v920 = vunpack.c.h.b16 %v832
    %v921 = vunpack.c.l.b16 %v833
    %v922 = vpack.c.b16 %v877, %v874
    %v923 = vpack.c.b16 %v878, %v875
    %v924 = vpack.c.b16 %v879, %v876
    %v925 = vpack.c.b16 %v883, %v880
    %v926 = vpack.c.b16 %v884, %v881
    %v927 = vpack.c.b16 %v885, %v882
    %v928 = vpack.c.b16 %v889, %v886
    %v929 = vpack.c.b16 %v890, %v887
    %v930 = vpack.c.b16 %v891, %v888
    %v931 = vpack.c.b16 %v895, %v892
    %v932 = vpack.c.b16 %v896, %v893
    %v933 = vpack.c.b16 %v897, %v894
    %v934 = vpack.c.b16 %v901, %v898
    %v935 = vpack.c.b16 %v902, %v899
    %v936 = vpack.c.b16 %v903, %v900
    %v937 = vpack.c.b16 %v907, %v904
    %v938 = vpack.c.b16 %v908, %v905
    %v939 = vpack.c.b16 %v909, %v906
    %v940 = vpack.c.b16 %v913, %v910
    %v941 = vpack.c.b16 %v914, %v911
    %v942 = vpack.c.b16 %v915, %v912
    %v943 = vpack.c.b16 %v919, %v916
    %v944 = vpack.c.b16 %v920, %v917
    %v945 = vpack.c.b16 %v921, %v918
    %970 = vmatpush.bf16.msra.mxu0 %v943
    %971 = vmatpush.bf16.msra.mxu0 %v940
    %972 = vmatpush.bf16.msra.mxu0 %v937
    %973 = vmatpush.bf16.msra.mxu0 %v934
    %974 = vmatpush.bf16.msra.mxu0 %v931
    %975 = vmatpush.bf16.msra.mxu0 %v928
    %976 = vmatpush.bf16.msra.mxu0 %v925
    %977 = vmatpush.bf16.msra.mxu0 %v922
    %978 = vmatmul.bf16.gmra.mxu0 %v800
    %v979 = vpop.f32.mrf.mxu0
    %v980 = vadd.f32 %v836, %v979
    %v981 = vpop.f32.mrf.mxu0
    %v982 = vadd.f32 %v836, %v981
    %983 = vmatmul.bf16.gmra.mxu0 %v801
    %v984 = vpop.f32.mrf.mxu0
    %v985 = vadd.f32 %v836, %v984
    %v986 = vpop.f32.mrf.mxu0
    %v987 = vadd.f32 %v836, %v986
    %988 = vdwg.mxu0
    %989 = vmatpush.bf16.msra.mxu0 %v944
    %990 = vmatpush.bf16.msra.mxu0 %v941
    %991 = vmatpush.bf16.msra.mxu0 %v938
    %992 = vmatpush.bf16.msra.mxu0 %v935
    %993 = vmatpush.bf16.msra.mxu0 %v932
    %994 = vmatpush.bf16.msra.mxu0 %v929
    %995 = vmatpush.bf16.msra.mxu0 %v926
    %996 = vmatpush.bf16.msra.mxu0 %v923
    %997 = vmatmul.bf16.gmra.mxu0 %v800
    %v998 = vpop.f32.mrf.mxu0
    %v999 = vadd.f32 %v837, %v998
    %v1000 = vpop.f32.mrf.mxu0
    %v1001 = vadd.f32 %v837, %v1000
    %1002 = vmatmul.bf16.gmra.mxu0 %v801
    %v1003 = vpop.f32.mrf.mxu0
    %v1004 = vadd.f32 %v837, %v1003
    %v1005 = vpop.f32.mrf.mxu0
    %v1006 = vadd.f32 %v837, %v1005
    %1007 = vdwg.mxu0
    %1008 = vmatpush.bf16.msra.mxu0 %v945
    %1009 = vmatpush.bf16.msra.mxu0 %v942
    %1010 = vmatpush.bf16.msra.mxu0 %v939
    %1011 = vmatpush.bf16.msra.mxu0 %v936
    %1012 = vmatpush.bf16.msra.mxu0 %v933
    %1013 = vmatpush.bf16.msra.mxu0 %v930
    %1014 = vmatpush.bf16.msra.mxu0 %v927
    %1015 = vmatpush.bf16.msra.mxu0 %v924
    %1016 = vmatmul.bf16.gmra.mxu0 %v800
    %v1017 = vpop.f32.mrf.mxu0
    %v1018 = vadd.f32 %v838, %v1017
    %v1019 = vpop.f32.mrf.mxu0
    %v1020 = vadd.f32 %v838, %v1019
    %1021 = vmatmul.bf16.gmra.mxu0 %v801
    %v1022 = vpop.f32.mrf.mxu0
    %v1023 = vadd.f32 %v838, %v1022
    %v1024 = vpop.f32.mrf.mxu0
    %v1025 = vadd.f32 %v838, %v1024
    %1026 = vdwg.mxu0
    %v1027 = vpack.c.bf16 %v999, %v980
    %v1028 = vpack.c.bf16 %v1018, %v1018
    %v1029 = vpack.c.bf16 %v1001, %v982
    %v1030 = vpack.c.bf16 %v1020, %v1020
    %v1031 = vpack.c.bf16 %v1004, %v985
    %v1032 = vpack.c.bf16 %v1023, %v1023
    %v1033 = vpack.c.bf16 %v1006, %v987
    %v1034 = vpack.c.bf16 %v1025, %v1025
    %v1037 = vunpack.c.l.b16 %v1027
    %v1038 = vunpack.c.l.b16 %v1029
    %v1039 = vpack.c.b16 %v1038, %v1037
    %v1040 = vunpack.c.h.b16 %v1027
    %v1041 = vunpack.c.h.b16 %v1029
    %v1042 = vpack.c.b16 %v1041, %v1040
    %vm1043 = vcmask 523264
    %v1045 = vsel %vm1043, %v1039, 0
    %v1048 = vsel %vm1043, %v1042, 0
    %1050 = vmatpush.bf16.xpose.msra.mxu0 0
    %1051 = vmatpush.bf16.xpose.msra.mxu0 0
    %1052 = vmatpush.bf16.xpose.msra.mxu0 0
    %1053 = vmatpush.bf16.xpose.msra.mxu0 0
    %1054 = vmatpush.bf16.xpose.msra.mxu0 0
    %1055 = vmatpush.bf16.xpose.msra.mxu0 0
    %1056 = vmatpush.bf16.xpose.msra.mxu0 0
    %1057 = vmatpush.bf16.xpose.msra.mxu0 %v1048
    %1058 = vmatmul.bf16.gmra.mxu0 %v1045
    %v1059 = vpop.f32.mrf.mxu0
    %v1060 = vadd.f32 0.0, %v1059
    %v1061 = vpop.f32.mrf.mxu0
    %v1062 = vadd.f32 0.0, %v1061
    %1063 = vdwg.mxu0
    %v1064 = vmul.f32 %v1060, 0.125
    %v1065 = vmul.f32 %v1062, 0.125
    %v1067 = vperm.slane %v798, 0
    %v1069 = vadd.f32 %v1064, %v1067
    %v1070 = vadd.f32 %v1065, %v1067
    %vm1071 = vcmask 130048
    %v1072 = vsel %vm1071, %v1069, -inf
    %1073 = vmax.xlane.f32.xlu0 %v1072
    %v1074 = vpop.xlane.xlu0 %1073
    %v1075 = vsel %vm1071, %v1070, -inf
    %1076 = vmax.xlane.f32.xlu0 %v1075
    %v1077 = vpop.xlane.xlu0 %1076
    %v1078 = vsub.f32 %v1069, %v1074
    %v1079 = vsub.f32 %v1070, %v1077
    %v1080 = vmul.f32 %v1078, 1.442695
    %v1081 = vpow.pop %v1080
    %v1082 = vmul.f32 %v1079, 1.442695
    %v1083 = vpow.pop %v1082
    %v1084 = vsel %vm1071, %v1081, 0.0
    %1085 = vadd.xlane.f32.xlu0 %v1084
    %v1086 = vpop.xlane.xlu0 %1085
    %v1087 = vsel %vm1071, %v1083, 0.0
    %1088 = vadd.xlane.f32.xlu0 %v1087
    %v1089 = vpop.xlane.xlu0 %1088
    %v1090 = vrcp.pop %v1086
    %v1091 = vrcp.pop %v1089
    %v1092 = vmul.f32 %v1081, %v1090
    %v1093 = vmul.f32 %v1083, %v1091
    %v1094 = vpack.c.bf16 %v1093, %v1092
    %v1097 = vunpack.c.l.b16 %v1028
    %v1098 = vunpack.c.l.b16 %v1030
    %v1099 = vpack.c.b16 %v1098, %v1097
    %v1102 = vsel %vm1071, %v1094, 0
    %1104 = vmatpush.bf16.msra.mxu0 0
    %1105 = vmatpush.bf16.msra.mxu0 0
    %1106 = vmatpush.bf16.msra.mxu0 0
    %1107 = vmatpush.bf16.msra.mxu0 0
    %1108 = vmatpush.bf16.msra.mxu0 0
    %1109 = vmatpush.bf16.msra.mxu0 0
    %1110 = vmatpush.bf16.msra.mxu0 0
    %1111 = vmatpush.bf16.msra.mxu0 %v1099
    %1112 = vmatmul.bf16.gmra.mxu0 %v1102
    %v1113 = vpop.f32.mrf.mxu0
    %v1114 = vadd.f32 0.0, %v1113
    %v1115 = vpop.f32.mrf.mxu0
    %v1116 = vadd.f32 0.0, %v1115
    %1117 = vdwg.mxu0
    %v1118 = vpack.c.bf16 %v1116, %v1114
    %v1119 = vld [vmem:[#allocation17] sm:$0xf]
    %v1120 = vld [vmem:[#allocation17 + $0x4] sm:$0xf]
    %v1121 = vld [vmem:[#allocation17 + $0x8] sm:$0xf]
    %v1122 = vld [vmem:[#allocation17 + $0xc] sm:$0xf]
    %v1123 = vld [vmem:[#allocation17 + $0x10] sm:$0xf]
    %v1124 = vld [vmem:[#allocation17 + $0x14] sm:$0xf]
    %v1125 = vld [vmem:[#allocation17 + $0x18] sm:$0xf]
    %v1126 = vld [vmem:[#allocation17 + $0x1c] sm:$0xf]
    %1127 = vrot.lane.b32.xlu0 %v1039, 64
    %v1128 = vpop.permute.xlu0 %1127
    %1129 = vrot.lane.b32.xlu0 %v1042, 64
    %v1130 = vpop.permute.xlu0 %1129
    %v1132 = vsel %vm1043, %v1128, 0
    %v1135 = vsel %vm1043, %v1130, 0
    %1137 = vmatpush.bf16.xpose.msra.mxu0 0
    %1138 = vmatpush.bf16.xpose.msra.mxu0 0
    %1139 = vmatpush.bf16.xpose.msra.mxu0 0
    %1140 = vmatpush.bf16.xpose.msra.mxu0 0
    %1141 = vmatpush.bf16.xpose.msra.mxu0 0
    %1142 = vmatpush.bf16.xpose.msra.mxu0 0
    %1143 = vmatpush.bf16.xpose.msra.mxu0 0
    %1144 = vmatpush.bf16.xpose.msra.mxu0 %v1135
    %1145 = vmatmul.bf16.gmra.mxu0 %v1132
    %v1146 = vpop.f32.mrf.mxu0
    %v1147 = vadd.f32 0.0, %v1146
    %v1148 = vpop.f32.mrf.mxu0
    %v1149 = vadd.f32 0.0, %v1148
    %1150 = vdwg.mxu0
    %v1151 = vmul.f32 %v1147, 0.125
    %v1152 = vmul.f32 %v1149, 0.125
    %v1153 = vadd.f32 %v1151, %v1067
    %v1154 = vadd.f32 %v1152, %v1067
    %v1155 = vsel %vm1071, %v1153, -inf
    %1156 = vmax.xlane.f32.xlu0 %v1155
    %v1157 = vpop.xlane.xlu0 %1156
    %v1158 = vsel %vm1071, %v1154, -inf
    %1159 = vmax.xlane.f32.xlu0 %v1158
    %v1160 = vpop.xlane.xlu0 %1159
    %v1161 = vsub.f32 %v1153, %v1157
    %v1162 = vsub.f32 %v1154, %v1160
    %v1163 = vmul.f32 %v1161, 1.442695
    %v1164 = vpow.pop %v1163
    %v1165 = vmul.f32 %v1162, 1.442695
    %v1166 = vpow.pop %v1165
    %v1167 = vsel %vm1071, %v1164, 0.0
    %1168 = vadd.xlane.f32.xlu0 %v1167
    %v1169 = vpop.xlane.xlu0 %1168
    %v1170 = vsel %vm1071, %v1166, 0.0
    %1171 = vadd.xlane.f32.xlu0 %v1170
    %v1172 = vpop.xlane.xlu0 %1171
    %v1173 = vrcp.pop %v1169
    %v1174 = vrcp.pop %v1172
    %v1175 = vmul.f32 %v1164, %v1173
    %v1176 = vmul.f32 %v1166, %v1174
    %v1177 = vpack.c.bf16 %v1176, %v1175
    %1178 = vrot.lane.b32.xlu0 %v1099, 64
    %v1179 = vpop.permute.xlu0 %1178
    %v1182 = vsel %vm1071, %v1177, 0
    %1184 = vmatpush.bf16.msra.mxu0 0
    %1185 = vmatpush.bf16.msra.mxu0 0
    %1186 = vmatpush.bf16.msra.mxu0 0
    %1187 = vmatpush.bf16.msra.mxu0 0
    %1188 = vmatpush.bf16.msra.mxu0 0
    %1189 = vmatpush.bf16.msra.mxu0 0
    %1190 = vmatpush.bf16.msra.mxu0 0
    %1191 = vmatpush.bf16.msra.mxu0 %v1179
    %1192 = vmatmul.bf16.gmra.mxu0 %v1182
    %v1193 = vpop.f32.mrf.mxu0
    %v1194 = vadd.f32 0.0, %v1193
    %v1195 = vpop.f32.mrf.mxu0
    %v1196 = vadd.f32 0.0, %v1195
    %1197 = vdwg.mxu0
    %v1198 = vpack.c.bf16 %v1196, %v1194
    %v1199 = vld [vmem:[#allocation17 + $0x20] sm:$0xf]
    %v1200 = vld [vmem:[#allocation17 + $0x24] sm:$0xf]
    %v1201 = vld [vmem:[#allocation17 + $0x28] sm:$0xf]
    %v1202 = vld [vmem:[#allocation17 + $0x2c] sm:$0xf]
    %v1203 = vld [vmem:[#allocation17 + $0x30] sm:$0xf]
    %v1204 = vld [vmem:[#allocation17 + $0x34] sm:$0xf]
    %v1205 = vld [vmem:[#allocation17 + $0x38] sm:$0xf]
    %v1206 = vld [vmem:[#allocation17 + $0x3c] sm:$0xf]
    %v1215 = vunpack.c.l.b16 %v1199
    %v1216 = vunpack.c.l.b16 %v1200
    %v1217 = vunpack.c.l.b16 %v1201
    %v1218 = vunpack.c.l.b16 %v1202
    %v1219 = vunpack.c.l.b16 %v1203
    %v1220 = vunpack.c.l.b16 %v1204
    %v1221 = vunpack.c.l.b16 %v1205
    %v1222 = vunpack.c.l.b16 %v1206
    %v1223 = vpack.c.b16 %v1216, %v1215
    %v1224 = vpack.c.b16 %v1218, %v1217
    %v1225 = vpack.c.b16 %v1220, %v1219
    %v1226 = vpack.c.b16 %v1222, %v1221
    %v1232 = vsel %vm1043, %v1198, 0
    %1234 = vmatpush.bf16.msra.mxu0 0
    %1235 = vmatpush.bf16.msra.mxu0 0
    %1236 = vmatpush.bf16.msra.mxu0 0
    %1237 = vmatpush.bf16.msra.mxu0 0
    %1238 = vmatpush.bf16.msra.mxu0 %v1226
    %1239 = vmatpush.bf16.msra.mxu0 %v1225
    %1240 = vmatpush.bf16.msra.mxu0 %v1224
    %1241 = vmatpush.bf16.msra.mxu0 %v1223
    %1242 = vmatmul.bf16.gmra.mxu0 %v1232
    %v1243 = vpop.f32.mrf.mxu0
    %v1244 = vadd.f32 0.0, %v1243
    %v1245 = vpop.f32.mrf.mxu0
    %v1246 = vadd.f32 0.0, %v1245
    %1247 = vdwg.mxu0
    %v1256 = vunpack.c.l.b16 %v1119
    %v1257 = vunpack.c.l.b16 %v1120
    %v1258 = vunpack.c.l.b16 %v1121
    %v1259 = vunpack.c.l.b16 %v1122
    %v1260 = vunpack.c.l.b16 %v1123
    %v1261 = vunpack.c.l.b16 %v1124
    %v1262 = vunpack.c.l.b16 %v1125
    %v1263 = vunpack.c.l.b16 %v1126
    %v1264 = vpack.c.b16 %v1257, %v1256
    %v1265 = vpack.c.b16 %v1259, %v1258
    %v1266 = vpack.c.b16 %v1261, %v1260
    %v1267 = vpack.c.b16 %v1263, %v1262
    %v1273 = vsel %vm1043, %v1118, 0
    %1275 = vmatpush.bf16.msra.mxu0 0
    %1276 = vmatpush.bf16.msra.mxu0 0
    %1277 = vmatpush.bf16.msra.mxu0 0
    %1278 = vmatpush.bf16.msra.mxu0 0
    %1279 = vmatpush.bf16.msra.mxu0 %v1267
    %1280 = vmatpush.bf16.msra.mxu0 %v1266
    %1281 = vmatpush.bf16.msra.mxu0 %v1265
    %1282 = vmatpush.bf16.msra.mxu0 %v1264
    %1283 = vmatmul.bf16.gmra.mxu0 %v1273
    %v1284 = vpop.f32.mrf.mxu0
    %v1285 = vadd.f32 %v1244, %v1284
    %v1286 = vpop.f32.mrf.mxu0
    %v1287 = vadd.f32 %v1246, %v1286
    %1288 = vdwg.mxu0
    %1289 = vst [vmem:[#allocation2] sm:$0xff] %v1285
    %1290 = vst [vmem:[#allocation2 + $0x8] sm:$0xff] %v1287
    %v1293 = vunpack.c.l.b16 %v1031
    %v1294 = vunpack.c.l.b16 %v1033
    %v1295 = vpack.c.b16 %v1294, %v1293
    %v1296 = vunpack.c.h.b16 %v1031
    %v1297 = vunpack.c.h.b16 %v1033
    %v1298 = vpack.c.b16 %v1297, %v1296
    %v1300 = vsel %vm1043, %v1295, 0
    %v1303 = vsel %vm1043, %v1298, 0
    %1305 = vmatpush.bf16.xpose.msra.mxu0 0
    %1306 = vmatpush.bf16.xpose.msra.mxu0 0
    %1307 = vmatpush.bf16.xpose.msra.mxu0 0
    %1308 = vmatpush.bf16.xpose.msra.mxu0 0
    %1309 = vmatpush.bf16.xpose.msra.mxu0 0
    %1310 = vmatpush.bf16.xpose.msra.mxu0 0
    %1311 = vmatpush.bf16.xpose.msra.mxu0 0
    %1312 = vmatpush.bf16.xpose.msra.mxu0 %v1303
    %1313 = vmatmul.bf16.gmra.mxu0 %v1300
    %v1314 = vpop.f32.mrf.mxu0
    %v1315 = vadd.f32 0.0, %v1314
    %v1316 = vpop.f32.mrf.mxu0
    %v1317 = vadd.f32 0.0, %v1316
    %1318 = vdwg.mxu0
    %v1319 = vmul.f32 %v1315, 0.125
    %v1320 = vmul.f32 %v1317, 0.125
    %v1322 = vperm.slane %v799, 0
    %v1324 = vadd.f32 %v1319, %v1322
    %v1325 = vadd.f32 %v1320, %v1322
    %v1326 = vsel %vm1071, %v1324, -inf
    %1327 = vmax.xlane.f32.xlu0 %v1326
    %v1328 = vpop.xlane.xlu0 %1327
    %v1329 = vsel %vm1071, %v1325, -inf
    %1330 = vmax.xlane.f32.xlu0 %v1329
    %v1331 = vpop.xlane.xlu0 %1330
    %v1332 = vsub.f32 %v1324, %v1328
    %v1333 = vsub.f32 %v1325, %v1331
    %v1334 = vmul.f32 %v1332, 1.442695
    %v1335 = vpow.pop %v1334
    %v1336 = vmul.f32 %v1333, 1.442695
    %v1337 = vpow.pop %v1336
    %v1338 = vsel %vm1071, %v1335, 0.0
    %1339 = vadd.xlane.f32.xlu0 %v1338
    %v1340 = vpop.xlane.xlu0 %1339
    %v1341 = vsel %vm1071, %v1337, 0.0
    %1342 = vadd.xlane.f32.xlu0 %v1341
    %v1343 = vpop.xlane.xlu0 %1342
    %v1344 = vrcp.pop %v1340
    %v1345 = vrcp.pop %v1343
    %v1346 = vmul.f32 %v1335, %v1344
    %v1347 = vmul.f32 %v1337, %v1345
    %v1348 = vpack.c.bf16 %v1347, %v1346
    %v1351 = vunpack.c.l.b16 %v1032
    %v1352 = vunpack.c.l.b16 %v1034
    %v1353 = vpack.c.b16 %v1352, %v1351
    %v1356 = vsel %vm1071, %v1348, 0
    %1358 = vmatpush.bf16.msra.mxu0 0
    %1359 = vmatpush.bf16.msra.mxu0 0
    %1360 = vmatpush.bf16.msra.mxu0 0
    %1361 = vmatpush.bf16.msra.mxu0 0
    %1362 = vmatpush.bf16.msra.mxu0 0
    %1363 = vmatpush.bf16.msra.mxu0 0
    %1364 = vmatpush.bf16.msra.mxu0 0
    %1365 = vmatpush.bf16.msra.mxu0 %v1353
    %1366 = vmatmul.bf16.gmra.mxu0 %v1356
    %v1367 = vpop.f32.mrf.mxu0
    %v1368 = vadd.f32 0.0, %v1367
    %v1369 = vpop.f32.mrf.mxu0
    %v1370 = vadd.f32 0.0, %v1369
    %1371 = vdwg.mxu0
    %v1372 = vpack.c.bf16 %v1370, %v1368
    %v1373 = vld [vmem:[#allocation17] sm:$0xf]
    %v1374 = vld [vmem:[#allocation17 + $0x4] sm:$0xf]
    %v1375 = vld [vmem:[#allocation17 + $0x8] sm:$0xf]
    %v1376 = vld [vmem:[#allocation17 + $0xc] sm:$0xf]
    %v1377 = vld [vmem:[#allocation17 + $0x10] sm:$0xf]
    %v1378 = vld [vmem:[#allocation17 + $0x14] sm:$0xf]
    %v1379 = vld [vmem:[#allocation17 + $0x18] sm:$0xf]
    %v1380 = vld [vmem:[#allocation17 + $0x1c] sm:$0xf]
    %1381 = vrot.lane.b32.xlu0 %v1295, 64
    %v1382 = vpop.permute.xlu0 %1381
    %1383 = vrot.lane.b32.xlu0 %v1298, 64
    %v1384 = vpop.permute.xlu0 %1383
    %v1386 = vsel %vm1043, %v1382, 0
    %v1389 = vsel %vm1043, %v1384, 0
    %1391 = vmatpush.bf16.xpose.msra.mxu0 0
    %1392 = vmatpush.bf16.xpose.msra.mxu0 0
    %1393 = vmatpush.bf16.xpose.msra.mxu0 0
    %1394 = vmatpush.bf16.xpose.msra.mxu0 0
    %1395 = vmatpush.bf16.xpose.msra.mxu0 0
    %1396 = vmatpush.bf16.xpose.msra.mxu0 0
    %1397 = vmatpush.bf16.xpose.msra.mxu0 0
    %1398 = vmatpush.bf16.xpose.msra.mxu0 %v1389
    %1399 = vmatmul.bf16.gmra.mxu0 %v1386
    %v1400 = vpop.f32.mrf.mxu0
    %v1401 = vadd.f32 0.0, %v1400
    %v1402 = vpop.f32.mrf.mxu0
    %v1403 = vadd.f32 0.0, %v1402
    %1404 = vdwg.mxu0
    %v1405 = vmul.f32 %v1401, 0.125
    %v1406 = vmul.f32 %v1403, 0.125
    %v1407 = vadd.f32 %v1405, %v1322
    %v1408 = vadd.f32 %v1406, %v1322
    %v1409 = vsel %vm1071, %v1407, -inf
    %1410 = vmax.xlane.f32.xlu0 %v1409
    %v1411 = vpop.xlane.xlu0 %1410
    %v1412 = vsel %vm1071, %v1408, -inf
    %1413 = vmax.xlane.f32.xlu0 %v1412
    %v1414 = vpop.xlane.xlu0 %1413
    %v1415 = vsub.f32 %v1407, %v1411
    %v1416 = vsub.f32 %v1408, %v1414
    %v1417 = vmul.f32 %v1415, 1.442695
    %v1418 = vpow.pop %v1417
    %v1419 = vmul.f32 %v1416, 1.442695
    %v1420 = vpow.pop %v1419
    %v1421 = vsel %vm1071, %v1418, 0.0
    %1422 = vadd.xlane.f32.xlu0 %v1421
    %v1423 = vpop.xlane.xlu0 %1422
    %v1424 = vsel %vm1071, %v1420, 0.0
    %1425 = vadd.xlane.f32.xlu0 %v1424
    %v1426 = vpop.xlane.xlu0 %1425
    %v1427 = vrcp.pop %v1423
    %v1428 = vrcp.pop %v1426
    %v1429 = vmul.f32 %v1418, %v1427
    %v1430 = vmul.f32 %v1420, %v1428
    %v1431 = vpack.c.bf16 %v1430, %v1429
    %1432 = vrot.lane.b32.xlu0 %v1353, 64
    %v1433 = vpop.permute.xlu0 %1432
    %v1436 = vsel %vm1071, %v1431, 0
    %1438 = vmatpush.bf16.msra.mxu0 0
    %1439 = vmatpush.bf16.msra.mxu0 0
    %1440 = vmatpush.bf16.msra.mxu0 0
    %1441 = vmatpush.bf16.msra.mxu0 0
    %1442 = vmatpush.bf16.msra.mxu0 0
    %1443 = vmatpush.bf16.msra.mxu0 0
    %1444 = vmatpush.bf16.msra.mxu0 0
    %1445 = vmatpush.bf16.msra.mxu0 %v1433
    %1446 = vmatmul.bf16.gmra.mxu0 %v1436
    %v1447 = vpop.f32.mrf.mxu0
    %v1448 = vadd.f32 0.0, %v1447
    %v1449 = vpop.f32.mrf.mxu0
    %v1450 = vadd.f32 0.0, %v1449
    %1451 = vdwg.mxu0
    %v1452 = vpack.c.bf16 %v1450, %v1448
    %v1453 = vld [vmem:[#allocation17 + $0x20] sm:$0xf]
    %v1454 = vld [vmem:[#allocation17 + $0x24] sm:$0xf]
    %v1455 = vld [vmem:[#allocation17 + $0x28] sm:$0xf]
    %v1456 = vld [vmem:[#allocation17 + $0x2c] sm:$0xf]
    %v1457 = vld [vmem:[#allocation17 + $0x30] sm:$0xf]
    %v1458 = vld [vmem:[#allocation17 + $0x34] sm:$0xf]
    %v1459 = vld [vmem:[#allocation17 + $0x38] sm:$0xf]
    %v1460 = vld [vmem:[#allocation17 + $0x3c] sm:$0xf]
    %v1469 = vunpack.c.l.b16 %v1453
    %v1470 = vunpack.c.l.b16 %v1454
    %v1471 = vunpack.c.l.b16 %v1455
    %v1472 = vunpack.c.l.b16 %v1456
    %v1473 = vunpack.c.l.b16 %v1457
    %v1474 = vunpack.c.l.b16 %v1458
    %v1475 = vunpack.c.l.b16 %v1459
    %v1476 = vunpack.c.l.b16 %v1460
    %v1477 = vpack.c.b16 %v1470, %v1469
    %v1478 = vpack.c.b16 %v1472, %v1471
    %v1479 = vpack.c.b16 %v1474, %v1473
    %v1480 = vpack.c.b16 %v1476, %v1475
    %v1486 = vsel %vm1043, %v1452, 0
    %1488 = vmatpush.bf16.msra.mxu0 0
    %1489 = vmatpush.bf16.msra.mxu0 0
    %1490 = vmatpush.bf16.msra.mxu0 0
    %1491 = vmatpush.bf16.msra.mxu0 0
    %1492 = vmatpush.bf16.msra.mxu0 %v1480
    %1493 = vmatpush.bf16.msra.mxu0 %v1479
    %1494 = vmatpush.bf16.msra.mxu0 %v1478
    %1495 = vmatpush.bf16.msra.mxu0 %v1477
    %1496 = vmatmul.bf16.gmra.mxu0 %v1486
    %v1497 = vpop.f32.mrf.mxu0
    %v1498 = vadd.f32 0.0, %v1497
    %v1499 = vpop.f32.mrf.mxu0
    %v1500 = vadd.f32 0.0, %v1499
    %1501 = vdwg.mxu0
    %v1510 = vunpack.c.l.b16 %v1373
    %v1511 = vunpack.c.l.b16 %v1374
    %v1512 = vunpack.c.l.b16 %v1375
    %v1513 = vunpack.c.l.b16 %v1376
    %v1514 = vunpack.c.l.b16 %v1377
    %v1515 = vunpack.c.l.b16 %v1378
    %v1516 = vunpack.c.l.b16 %v1379
    %v1517 = vunpack.c.l.b16 %v1380
    %v1518 = vpack.c.b16 %v1511, %v1510
    %v1519 = vpack.c.b16 %v1513, %v1512
    %v1520 = vpack.c.b16 %v1515, %v1514
    %v1521 = vpack.c.b16 %v1517, %v1516
    %v1527 = vsel %vm1043, %v1372, 0
    %1529 = vmatpush.bf16.msra.mxu0 0
    %1530 = vmatpush.bf16.msra.mxu0 0
    %1531 = vmatpush.bf16.msra.mxu0 0
    %1532 = vmatpush.bf16.msra.mxu0 0
    %1533 = vmatpush.bf16.msra.mxu0 %v1521
    %1534 = vmatpush.bf16.msra.mxu0 %v1520
    %1535 = vmatpush.bf16.msra.mxu0 %v1519
    %1536 = vmatpush.bf16.msra.mxu0 %v1518
    %1537 = vmatmul.bf16.gmra.mxu0 %v1527
    %v1538 = vpop.f32.mrf.mxu0
    %v1539 = vadd.f32 %v1498, %v1538
    %v1540 = vpop.f32.mrf.mxu0
    %v1541 = vadd.f32 %v1500, %v1540
    %1542 = vdwg.mxu0
    %1543 = vst [vmem:[#allocation2 + $0x10] sm:$0xff] %v1539
    %1544 = vst [vmem:[#allocation2 + $0x18] sm:$0xff] %v1541
    %v1545 = vld [vmem:[#allocation2] sm:$0xff]
    %v1546 = vld [vmem:[#allocation2 + $0x8] sm:$0xff]
    %v1547 = vld [vmem:[#allocation2 + $0x10] sm:$0xff]
    %v1548 = vld [vmem:[#allocation2 + $0x18] sm:$0xff]
    %v1549 = vld [vmem:[#allocation18] sm:$0x1]
    %v1551 = vperm.slane %v1549, 0
    %v1553 = vadd.f32 %v1545, %v1551
    %v1554 = vadd.f32 %v1546, %v1551
    %v1555 = vadd.f32 %v1547, %v1551
    %v1556 = vadd.f32 %v1548, %v1551
    %v1557 = vadd.f32 %v1553, %v788
    %v1558 = vadd.f32 %v1554, %v789
    %v1559 = vadd.f32 %v1555, %v790
    %v1560 = vadd.f32 %v1556, %v791
    %v1561 = vld [vmem:[%s16] sm:$0x1]
    %v1562 = vld [vmem:[#allocation26] sm:$0x1]
    %1563 = vadd.xlane.f32.xlu0 %v1557
    %v1564 = vpop.xlane.xlu0 %1563
    %1565 = vadd.xlane.f32.xlu0 %v1558
    %v1566 = vpop.xlane.xlu0 %1565
    %1567 = vadd.xlane.f32.xlu0 %v1559
    %v1568 = vpop.xlane.xlu0 %1567
    %1569 = vadd.xlane.f32.xlu0 %v1560
    %v1570 = vpop.xlane.xlu0 %1569
    %v1571 = vmul.f32 %v1564, %v705
    %v1572 = vmul.f32 %v1566, %v705
    %v1573 = vmul.f32 %v1568, %v705
    %v1574 = vmul.f32 %v1570, %v705
    %v1575 = vsub.f32 %v1557, %v1571
    %v1576 = vsub.f32 %v1558, %v1572
    %v1577 = vsub.f32 %v1559, %v1573
    %v1578 = vsub.f32 %v1560, %v1574
    %v1579 = vmul.f32 %v1575, %v1575
    %v1580 = vmul.f32 %v1576, %v1576
    %v1581 = vmul.f32 %v1577, %v1577
    %v1582 = vmul.f32 %v1578, %v1578
    %1583 = vadd.xlane.f32.xlu0 %v1579
    %v1584 = vpop.xlane.xlu0 %1583
    %1585 = vadd.xlane.f32.xlu0 %v1580
    %v1586 = vpop.xlane.xlu0 %1585
    %1587 = vadd.xlane.f32.xlu0 %v1581
    %v1588 = vpop.xlane.xlu0 %1587
    %1589 = vadd.xlane.f32.xlu0 %v1582
    %v1590 = vpop.xlane.xlu0 %1589
    %v1591 = vmul.f32 %v1584, %v705
    %v1592 = vmul.f32 %v1586, %v705
    %v1593 = vmul.f32 %v1588, %v705
    %v1594 = vmul.f32 %v1590, %v705
    %v1595 = vadd.f32 %v1591, 1e-12
    %v1596 = vadd.f32 %v1592, 1e-12
    %v1597 = vadd.f32 %v1593, 1e-12
    %v1598 = vadd.f32 %v1594, 1e-12
    %v1599 = vrsqrt.pop %v1595
    %v1600 = vmul.f32 %v1599, %v1595
    %v1601 = vmul.f32 %v1600, %v1599
    %v1602 = vmul.f32 0.5, %v1601
    %v1603 = vsub.f32 1.5, %v1602
    %v1604 = vmul.f32 %v1599, %v1603
    %vm1605 = vweird.f32 %v1595
    %vm1606 = vweird.f32 %v1599
    %vm1607 = vmor %vm1605, %vm1606
    %v1608 = vsel %vm1607, %v1599, %v1604
    %v1609 = vrsqrt.pop %v1596
    %v1610 = vmul.f32 %v1609, %v1596
    %v1611 = vmul.f32 %v1610, %v1609
    %v1612 = vmul.f32 0.5, %v1611
    %v1613 = vsub.f32 1.5, %v1612
    %v1614 = vmul.f32 %v1609, %v1613
    %vm1615 = vweird.f32 %v1596
    %vm1616 = vweird.f32 %v1609
    %vm1617 = vmor %vm1615, %vm1616
    %v1618 = vsel %vm1617, %v1609, %v1614
    %v1619 = vrsqrt.pop %v1597
    %v1620 = vmul.f32 %v1619, %v1597
    %v1621 = vmul.f32 %v1620, %v1619
    %v1622 = vmul.f32 0.5, %v1621
    %v1623 = vsub.f32 1.5, %v1622
    %v1624 = vmul.f32 %v1619, %v1623
    %vm1625 = vweird.f32 %v1597
    %vm1626 = vweird.f32 %v1619
    %vm1627 = vmor %vm1625, %vm1626
    %v1628 = vsel %vm1627, %v1619, %v1624
    %v1629 = vrsqrt.pop %v1598
    %v1630 = vmul.f32 %v1629, %v1598
    %v1631 = vmul.f32 %v1630, %v1629
    %v1632 = vmul.f32 0.5, %v1631
    %v1633 = vsub.f32 1.5, %v1632
    %v1634 = vmul.f32 %v1629, %v1633
    %vm1635 = vweird.f32 %v1598
    %vm1636 = vweird.f32 %v1629
    %vm1637 = vmor %vm1635, %vm1636
    %v1638 = vsel %vm1637, %v1629, %v1634
    %v1639 = vmul.f32 %v1575, %v1608
    %v1640 = vmul.f32 %v1576, %v1618
    %v1641 = vmul.f32 %v1577, %v1628
    %v1642 = vmul.f32 %v1578, %v1638
    %v1644 = vperm.slane %v1561, 0
    %v1646 = vmul.f32 %v1639, %v1644
    %v1647 = vmul.f32 %v1640, %v1644
    %v1648 = vmul.f32 %v1641, %v1644
    %v1649 = vmul.f32 %v1642, %v1644
    %v1651 = vperm.slane %v1562, 0
    %v1653 = vadd.f32 %v1646, %v1651
    %v1654 = vadd.f32 %v1647, %v1651
    %v1655 = vadd.f32 %v1648, %v1651
    %v1656 = vadd.f32 %v1649, %v1651
    %v1657 = vpack.c.bf16 %v1654, %v1653
    %v1658 = vpack.c.bf16 %v1656, %v1655
    %v1659 = vld [vmem:[#allocation20] sm:$0xff]
    %v1660 = vld [vmem:[#allocation20 + $0x8] sm:$0xff]
    %v1661 = vld [vmem:[#allocation20 + $0x10] sm:$0xff]
    %v1662 = vld [vmem:[#allocation20 + $0x18] sm:$0xff]
    %v1663 = vld [vmem:[#allocation20 + $0x20] sm:$0xff]
    %v1664 = vld [vmem:[#allocation20 + $0x28] sm:$0xff]
    %v1665 = vld [vmem:[#allocation20 + $0x30] sm:$0xff]
    %v1666 = vld [vmem:[#allocation20 + $0x38] sm:$0xff]
    %v1667 = vld [vmem:[#allocation20 + $0x40] sm:$0xff]
    %v1668 = vld [vmem:[#allocation20 + $0x48] sm:$0xff]
    %v1669 = vld [vmem:[#allocation20 + $0x50] sm:$0xff]
    %v1670 = vld [vmem:[#allocation20 + $0x58] sm:$0xff]
    %v1671 = vld [vmem:[#allocation20 + $0x60] sm:$0xff]
    %v1672 = vld [vmem:[#allocation20 + $0x68] sm:$0xff]
    %v1673 = vld [vmem:[#allocation20 + $0x70] sm:$0xff]
    %v1674 = vld [vmem:[#allocation20 + $0x78] sm:$0xff]
    %v1675 = vld [vmem:[#allocation21] sm:$0x3]
    %v1677 = vperm.slane %v1675, 0
    %v1678 = vperm.slane %v1675, 1
    %v1697 = vunpack.c.l.b16 %v1659
    %v1698 = vunpack.c.h.b16 %v1659
    %v1699 = vunpack.c.l.b16 %v1660
    %v1700 = vunpack.c.h.b16 %v1660
    %v1701 = vunpack.c.l.b16 %v1661
    %v1702 = vunpack.c.h.b16 %v1661
    %v1703 = vunpack.c.l.b16 %v1662
    %v1704 = vunpack.c.h.b16 %v1662
    %v1705 = vunpack.c.l.b16 %v1663
    %v1706 = vunpack.c.h.b16 %v1663
    %v1707 = vunpack.c.l.b16 %v1664
    %v1708 = vunpack.c.h.b16 %v1664
    %v1709 = vunpack.c.l.b16 %v1665
    %v1710 = vunpack.c.h.b16 %v1665
    %v1711 = vunpack.c.l.b16 %v1666
    %v1712 = vunpack.c.h.b16 %v1666
    %v1713 = vunpack.c.l.b16 %v1667
    %v1714 = vunpack.c.h.b16 %v1667
    %v1715 = vunpack.c.l.b16 %v1668
    %v1716 = vunpack.c.h.b16 %v1668
    %v1717 = vunpack.c.l.b16 %v1669
    %v1718 = vunpack.c.h.b16 %v1669
    %v1719 = vunpack.c.l.b16 %v1670
    %v1720 = vunpack.c.h.b16 %v1670
    %v1721 = vunpack.c.l.b16 %v1671
    %v1722 = vunpack.c.h.b16 %v1671
    %v1723 = vunpack.c.l.b16 %v1672
    %v1724 = vunpack.c.h.b16 %v1672
    %v1725 = vunpack.c.l.b16 %v1673
    %v1726 = vunpack.c.h.b16 %v1673
    %v1727 = vunpack.c.l.b16 %v1674
    %v1728 = vunpack.c.h.b16 %v1674
    %v1729 = vpack.c.b16 %v1699, %v1697
    %v1730 = vpack.c.b16 %v1700, %v1698
    %v1731 = vpack.c.b16 %v1703, %v1701
    %v1732 = vpack.c.b16 %v1704, %v1702
    %v1733 = vpack.c.b16 %v1707, %v1705
    %v1734 = vpack.c.b16 %v1708, %v1706
    %v1735 = vpack.c.b16 %v1711, %v1709
    %v1736 = vpack.c.b16 %v1712, %v1710
    %v1737 = vpack.c.b16 %v1715, %v1713
    %v1738 = vpack.c.b16 %v1716, %v1714
    %v1739 = vpack.c.b16 %v1719, %v1717
    %v1740 = vpack.c.b16 %v1720, %v1718
    %v1741 = vpack.c.b16 %v1723, %v1721
    %v1742 = vpack.c.b16 %v1724, %v1722
    %v1743 = vpack.c.b16 %v1727, %v1725
    %v1744 = vpack.c.b16 %v1728, %v1726
    %1761 = vmatpush.bf16.msra.mxu0 %v1743
    %1762 = vmatpush.bf16.msra.mxu0 %v1741
    %1763 = vmatpush.bf16.msra.mxu0 %v1739
    %1764 = vmatpush.bf16.msra.mxu0 %v1737
    %1765 = vmatpush.bf16.msra.mxu0 %v1735
    %1766 = vmatpush.bf16.msra.mxu0 %v1733
    %1767 = vmatpush.bf16.msra.mxu0 %v1731
    %1768 = vmatpush.bf16.msra.mxu0 %v1729
    %1769 = vmatmul.bf16.gmra.mxu0 %v1657
    %v1770 = vpop.f32.mrf.mxu0
    %v1771 = vadd.f32 %v1677, %v1770
    %v1772 = vpop.f32.mrf.mxu0
    %v1773 = vadd.f32 %v1677, %v1772
    %1774 = vmatmul.bf16.gmra.mxu0 %v1658
    %v1775 = vpop.f32.mrf.mxu0
    %v1776 = vadd.f32 %v1677, %v1775
    %v1777 = vpop.f32.mrf.mxu0
    %v1778 = vadd.f32 %v1677, %v1777
    %1779 = vdwg.mxu0
    %1780 = vmatpush.bf16.msra.mxu0 %v1744
    %1781 = vmatpush.bf16.msra.mxu0 %v1742
    %1782 = vmatpush.bf16.msra.mxu0 %v1740
    %1783 = vmatpush.bf16.msra.mxu0 %v1738
    %1784 = vmatpush.bf16.msra.mxu0 %v1736
    %1785 = vmatpush.bf16.msra.mxu0 %v1734
    %1786 = vmatpush.bf16.msra.mxu0 %v1732
    %1787 = vmatpush.bf16.msra.mxu0 %v1730
    %1788 = vmatmul.bf16.gmra.mxu0 %v1657
    %v1789 = vpop.f32.mrf.mxu0
    %v1790 = vadd.f32 %v1678, %v1789
    %v1791 = vpop.f32.mrf.mxu0
    %v1792 = vadd.f32 %v1678, %v1791
    %1793 = vmatmul.bf16.gmra.mxu0 %v1658
    %v1794 = vpop.f32.mrf.mxu0
    %v1795 = vadd.f32 %v1678, %v1794
    %v1796 = vpop.f32.mrf.mxu0
    %v1797 = vadd.f32 %v1678, %v1796
    %1798 = vdwg.mxu0
    %v1799 = vmul.f32 %v1771, %v1771
    %v1800 = vmul.f32 %v1790, %v1790
    %v1801 = vmul.f32 %v1773, %v1773
    %v1802 = vmul.f32 %v1792, %v1792
    %v1803 = vmul.f32 %v1776, %v1776
    %v1804 = vmul.f32 %v1795, %v1795
    %v1805 = vmul.f32 %v1778, %v1778
    %v1806 = vmul.f32 %v1797, %v1797
    %v1807 = vmul.f32 %v1771, %v1799
    %v1808 = vmul.f32 %v1790, %v1800
    %v1809 = vmul.f32 %v1773, %v1801
    %v1810 = vmul.f32 %v1792, %v1802
    %v1811 = vmul.f32 %v1776, %v1803
    %v1812 = vmul.f32 %v1795, %v1804
    %v1813 = vmul.f32 %v1778, %v1805
    %v1814 = vmul.f32 %v1797, %v1806
    %v1815 = vmul.f32 %v1807, 0.044715
    %v1816 = vmul.f32 %v1808, 0.044715
    %v1817 = vmul.f32 %v1809, 0.044715
    %v1818 = vmul.f32 %v1810, 0.044715
    %v1819 = vmul.f32 %v1811, 0.044715
    %v1820 = vmul.f32 %v1812, 0.044715
    %v1821 = vmul.f32 %v1813, 0.044715
    %v1822 = vmul.f32 %v1814, 0.044715
    %v1823 = vadd.f32 %v1771, %v1815
    %v1824 = vadd.f32 %v1790, %v1816
    %v1825 = vadd.f32 %v1773, %v1817
    %v1826 = vadd.f32 %v1792, %v1818
    %v1827 = vadd.f32 %v1776, %v1819
    %v1828 = vadd.f32 %v1795, %v1820
    %v1829 = vadd.f32 %v1778, %v1821
    %v1830 = vadd.f32 %v1797, %v1822
    %v1831 = vmul.f32 %v1823, 0.7978846
    %v1832 = vmul.f32 %v1824, 0.7978846
    %v1833 = vmul.f32 %v1825, 0.7978846
    %v1834 = vmul.f32 %v1826, 0.7978846
    %v1835 = vmul.f32 %v1827, 0.7978846
    %v1836 = vmul.f32 %v1828, 0.7978846
    %v1837 = vmul.f32 %v1829, 0.7978846
    %v1838 = vmul.f32 %v1830, 0.7978846
    %v1839 = vtanh.pop %v1831
    %v1840 = vtanh.pop %v1832
    %v1841 = vtanh.pop %v1833
    %v1842 = vtanh.pop %v1834
    %v1843 = vtanh.pop %v1835
    %v1844 = vtanh.pop %v1836
    %v1845 = vtanh.pop %v1837
    %v1846 = vtanh.pop %v1838
    %v1847 = vadd.f32 %v1839, 1.0
    %v1848 = vadd.f32 %v1840, 1.0
    %v1849 = vadd.f32 %v1841, 1.0
    %v1850 = vadd.f32 %v1842, 1.0
    %v1851 = vadd.f32 %v1843, 1.0
    %v1852 = vadd.f32 %v1844, 1.0
    %v1853 = vadd.f32 %v1845, 1.0
    %v1854 = vadd.f32 %v1846, 1.0
    %v1855 = vmul.f32 %v1847, 0.5
    %v1856 = vmul.f32 %v1848, 0.5
    %v1857 = vmul.f32 %v1849, 0.5
    %v1858 = vmul.f32 %v1850, 0.5
    %v1859 = vmul.f32 %v1851, 0.5
    %v1860 = vmul.f32 %v1852, 0.5
    %v1861 = vmul.f32 %v1853, 0.5
    %v1862 = vmul.f32 %v1854, 0.5
    %v1863 = vmul.f32 %v1771, %v1855
    %v1864 = vmul.f32 %v1790, %v1856
    %v1865 = vmul.f32 %v1773, %v1857
    %v1866 = vmul.f32 %v1792, %v1858
    %v1867 = vmul.f32 %v1776, %v1859
    %v1868 = vmul.f32 %v1795, %v1860
    %v1869 = vmul.f32 %v1778, %v1861
    %v1870 = vmul.f32 %v1797, %v1862
    %v1871 = vpack.c.bf16 %v1865, %v1863
    %v1872 = vpack.c.bf16 %v1866, %v1864
    %v1873 = vpack.c.bf16 %v1869, %v1867
    %v1874 = vpack.c.bf16 %v1870, %v1868
    %v1875 = vld [vmem:[#allocation23] sm:$0xf]
    %v1876 = vld [vmem:[#allocation23 + $0x4] sm:$0xf]
    %v1877 = vld [vmem:[#allocation23 + $0x8] sm:$0xf]
    %v1878 = vld [vmem:[#allocation23 + $0xc] sm:$0xf]
    %v1879 = vld [vmem:[#allocation23 + $0x10] sm:$0xf]
    %v1880 = vld [vmem:[#allocation23 + $0x14] sm:$0xf]
    %v1881 = vld [vmem:[#allocation23 + $0x18] sm:$0xf]
    %v1882 = vld [vmem:[#allocation23 + $0x1c] sm:$0xf]
    %v1883 = vld [vmem:[#allocation23 + $0x20] sm:$0xf]
    %v1884 = vld [vmem:[#allocation23 + $0x24] sm:$0xf]
    %v1885 = vld [vmem:[#allocation23 + $0x28] sm:$0xf]
    %v1886 = vld [vmem:[#allocation23 + $0x2c] sm:$0xf]
    %v1887 = vld [vmem:[#allocation23 + $0x30] sm:$0xf]
    %v1888 = vld [vmem:[#allocation23 + $0x34] sm:$0xf]
    %v1889 = vld [vmem:[#allocation23 + $0x38] sm:$0xf]
    %v1890 = vld [vmem:[#allocation23 + $0x3c] sm:$0xf]
    %v1891 = vld [vmem:[#allocation23 + $0x40] sm:$0xf]
    %v1892 = vld [vmem:[#allocation23 + $0x44] sm:$0xf]
    %v1893 = vld [vmem:[#allocation23 + $0x48] sm:$0xf]
    %v1894 = vld [vmem:[#allocation23 + $0x4c] sm:$0xf]
    %v1895 = vld [vmem:[#allocation23 + $0x50] sm:$0xf]
    %v1896 = vld [vmem:[#allocation23 + $0x54] sm:$0xf]
    %v1897 = vld [vmem:[#allocation23 + $0x58] sm:$0xf]
    %v1898 = vld [vmem:[#allocation23 + $0x5c] sm:$0xf]
    %v1899 = vld [vmem:[#allocation23 + $0x60] sm:$0xf]
    %v1900 = vld [vmem:[#allocation23 + $0x64] sm:$0xf]
    %v1901 = vld [vmem:[#allocation23 + $0x68] sm:$0xf]
    %v1902 = vld [vmem:[#allocation23 + $0x6c] sm:$0xf]
    %v1903 = vld [vmem:[#allocation23 + $0x70] sm:$0xf]
    %v1904 = vld [vmem:[#allocation23 + $0x74] sm:$0xf]
    %v1905 = vld [vmem:[#allocation23 + $0x78] sm:$0xf]
    %v1906 = vld [vmem:[#allocation23 + $0x7c] sm:$0xf]
    %v1907 = vld [vmem:[#allocation24] sm:$0x1]
    %v1909 = vperm.slane %v1907, 0
    %v1943 = vunpack.c.l.b16 %v1875
    %v1944 = vunpack.c.l.b16 %v1876
    %v1945 = vunpack.c.l.b16 %v1877
    %v1946 = vunpack.c.l.b16 %v1878
    %v1947 = vunpack.c.l.b16 %v1879
    %v1948 = vunpack.c.l.b16 %v1880
    %v1949 = vunpack.c.l.b16 %v1881
    %v1950 = vunpack.c.l.b16 %v1882
    %v1951 = vunpack.c.l.b16 %v1883
    %v1952 = vunpack.c.l.b16 %v1884
    %v1953 = vunpack.c.l.b16 %v1885
    %v1954 = vunpack.c.l.b16 %v1886
    %v1955 = vunpack.c.l.b16 %v1887
    %v1956 = vunpack.c.l.b16 %v1888
    %v1957 = vunpack.c.l.b16 %v1889
    %v1958 = vunpack.c.l.b16 %v1890
    %v1959 = vunpack.c.l.b16 %v1891
    %v1960 = vunpack.c.l.b16 %v1892
    %v1961 = vunpack.c.l.b16 %v1893
    %v1962 = vunpack.c.l.b16 %v1894
    %v1963 = vunpack.c.l.b16 %v1895
    %v1964 = vunpack.c.l.b16 %v1896
    %v1965 = vunpack.c.l.b16 %v1897
    %v1966 = vunpack.c.l.b16 %v1898
    %v1967 = vunpack.c.l.b16 %v1899
    %v1968 = vunpack.c.l.b16 %v1900
    %v1969 = vunpack.c.l.b16 %v1901
    %v1970 = vunpack.c.l.b16 %v1902
    %v1971 = vunpack.c.l.b16 %v1903
    %v1972 = vunpack.c.l.b16 %v1904
    %v1973 = vunpack.c.l.b16 %v1905
    %v1974 = vunpack.c.l.b16 %v1906
    %v1975 = vpack.c.b16 %v1944, %v1943
    %v1976 = vpack.c.b16 %v1946, %v1945
    %v1977 = vpack.c.b16 %v1948, %v1947
    %v1978 = vpack.c.b16 %v1950, %v1949
    %v1979 = vpack.c.b16 %v1952, %v1951
    %v1980 = vpack.c.b16 %v1954, %v1953
    %v1981 = vpack.c.b16 %v1956, %v1955
    %v1982 = vpack.c.b16 %v1958, %v1957
    %v1983 = vpack.c.b16 %v1960, %v1959
    %v1984 = vpack.c.b16 %v1962, %v1961
    %v1985 = vpack.c.b16 %v1964, %v1963
    %v1986 = vpack.c.b16 %v1966, %v1965
    %v1987 = vpack.c.b16 %v1968, %v1967
    %v1988 = vpack.c.b16 %v1970, %v1969
    %v1989 = vpack.c.b16 %v1972, %v1971
    %v1990 = vpack.c.b16 %v1974, %v1973
    %2007 = vmatpush.bf16.msra.mxu0 %v1982
    %2008 = vmatpush.bf16.msra.mxu0 %v1981
    %2009 = vmatpush.bf16.msra.mxu0 %v1980
    %2010 = vmatpush.bf16.msra.mxu0 %v1979
    %2011 = vmatpush.bf16.msra.mxu0 %v1978
    %2012 = vmatpush.bf16.msra.mxu0 %v1977
    %2013 = vmatpush.bf16.msra.mxu0 %v1976
    %2014 = vmatpush.bf16.msra.mxu0 %v1975
    %2015 = vmatmul.bf16.gmra.mxu0 %v1871
    %v2016 = vpop.f32.mrf.mxu0
    %v2017 = vadd.f32 %v1909, %v2016
    %v2018 = vpop.f32.mrf.mxu0
    %v2019 = vadd.f32 %v1909, %v2018
    %2020 = vmatmul.bf16.gmra.mxu0 %v1873
    %v2021 = vpop.f32.mrf.mxu0
    %v2022 = vadd.f32 %v1909, %v2021
    %v2023 = vpop.f32.mrf.mxu0
    %v2024 = vadd.f32 %v1909, %v2023
    %2025 = vdwg.mxu0
    %2026 = vmatpush.bf16.msra.mxu0 %v1990
    %2027 = vmatpush.bf16.msra.mxu0 %v1989
    %2028 = vmatpush.bf16.msra.mxu0 %v1988
    %2029 = vmatpush.bf16.msra.mxu0 %v1987
    %2030 = vmatpush.bf16.msra.mxu0 %v1986
    %2031 = vmatpush.bf16.msra.mxu0 %v1985
    %2032 = vmatpush.bf16.msra.mxu0 %v1984
    %2033 = vmatpush.bf16.msra.mxu0 %v1983
    %2034 = vmatmul.bf16.gmra.mxu0 %v1872
    %v2035 = vpop.f32.mrf.mxu0
    %v2036 = vadd.f32 %v2017, %v2035
    %v2037 = vpop.f32.mrf.mxu0
    %v2038 = vadd.f32 %v2019, %v2037
    %2039 = vmatmul.bf16.gmra.mxu0 %v1874
    %v2040 = vpop.f32.mrf.mxu0
    %v2041 = vadd.f32 %v2022, %v2040
    %v2042 = vpop.f32.mrf.mxu0
    %v2043 = vadd.f32 %v2024, %v2042
    %2044 = vdwg.mxu0
    %v2045 = vadd.f32 %v2036, %v1653
    %v2046 = vadd.f32 %v2038, %v1654
    %v2047 = vadd.f32 %v2041, %v1655
    %v2048 = vadd.f32 %v2043, %v1656
    %v2049 = vld [vmem:[%s18] sm:$0x1]
    %v2050 = vld [vmem:[#allocation27] sm:$0x1]
    %2051 = vadd.xlane.f32.xlu0 %v2045
    %v2052 = vpop.xlane.xlu0 %2051
    %2053 = vadd.xlane.f32.xlu0 %v2046
    %v2054 = vpop.xlane.xlu0 %2053
    %2055 = vadd.xlane.f32.xlu0 %v2047
    %v2056 = vpop.xlane.xlu0 %2055
    %2057 = vadd.xlane.f32.xlu0 %v2048
    %v2058 = vpop.xlane.xlu0 %2057
    %v2059 = vmul.f32 %v2052, %v705
    %v2060 = vmul.f32 %v2054, %v705
    %v2061 = vmul.f32 %v2056, %v705
    %v2062 = vmul.f32 %v2058, %v705
    %v2063 = vsub.f32 %v2045, %v2059
    %v2064 = vsub.f32 %v2046, %v2060
    %v2065 = vsub.f32 %v2047, %v2061
    %v2066 = vsub.f32 %v2048, %v2062
    %v2067 = vmul.f32 %v2063, %v2063
    %v2068 = vmul.f32 %v2064, %v2064
    %v2069 = vmul.f32 %v2065, %v2065
    %v2070 = vmul.f32 %v2066, %v2066
    %2071 = vadd.xlane.f32.xlu0 %v2067
    %v2072 = vpop.xlane.xlu0 %2071
    %2073 = vadd.xlane.f32.xlu0 %v2068
    %v2074 = vpop.xlane.xlu0 %2073
    %2075 = vadd.xlane.f32.xlu0 %v2069
    %v2076 = vpop.xlane.xlu0 %2075
    %2077 = vadd.xlane.f32.xlu0 %v2070
    %v2078 = vpop.xlane.xlu0 %2077
    %v2079 = vmul.f32 %v2072, %v705
    %v2080 = vmul.f32 %v2074, %v705
    %v2081 = vmul.f32 %v2076, %v705
    %v2082 = vmul.f32 %v2078, %v705
    %v2083 = vadd.f32 %v2079, 1e-12
    %v2084 = vadd.f32 %v2080, 1e-12
    %v2085 = vadd.f32 %v2081, 1e-12
    %v2086 = vadd.f32 %v2082, 1e-12
    %v2087 = vrsqrt.pop %v2083
    %v2088 = vmul.f32 %v2087, %v2083
    %v2089 = vmul.f32 %v2088, %v2087
    %v2090 = vmul.f32 0.5, %v2089
    %v2091 = vsub.f32 1.5, %v2090
    %v2092 = vmul.f32 %v2087, %v2091
    %vm2093 = vweird.f32 %v2083
    %vm2094 = vweird.f32 %v2087
    %vm2095 = vmor %vm2093, %vm2094
    %v2096 = vsel %vm2095, %v2087, %v2092
    %v2097 = vrsqrt.pop %v2084
    %v2098 = vmul.f32 %v2097, %v2084
    %v2099 = vmul.f32 %v2098, %v2097
    %v2100 = vmul.f32 0.5, %v2099
    %v2101 = vsub.f32 1.5, %v2100
    %v2102 = vmul.f32 %v2097, %v2101
    %vm2103 = vweird.f32 %v2084
    %vm2104 = vweird.f32 %v2097
    %vm2105 = vmor %vm2103, %vm2104
    %v2106 = vsel %vm2105, %v2097, %v2102
    %v2107 = vrsqrt.pop %v2085
    %v2108 = vmul.f32 %v2107, %v2085
    %v2109 = vmul.f32 %v2108, %v2107
    %v2110 = vmul.f32 0.5, %v2109
    %v2111 = vsub.f32 1.5, %v2110
    %v2112 = vmul.f32 %v2107, %v2111
    %vm2113 = vweird.f32 %v2085
    %vm2114 = vweird.f32 %v2107
    %vm2115 = vmor %vm2113, %vm2114
    %v2116 = vsel %vm2115, %v2107, %v2112
    %v2117 = vrsqrt.pop %v2086
    %v2118 = vmul.f32 %v2117, %v2086
    %v2119 = vmul.f32 %v2118, %v2117
    %v2120 = vmul.f32 0.5, %v2119
    %v2121 = vsub.f32 1.5, %v2120
    %v2122 = vmul.f32 %v2117, %v2121
    %vm2123 = vweird.f32 %v2086
    %vm2124 = vweird.f32 %v2117
    %vm2125 = vmor %vm2123, %vm2124
    %v2126 = vsel %vm2125, %v2117, %v2122
    %v2127 = vmul.f32 %v2063, %v2096
    %v2128 = vmul.f32 %v2064, %v2106
    %v2129 = vmul.f32 %v2065, %v2116
    %v2130 = vmul.f32 %v2066, %v2126
    %v2132 = vperm.slane %v2049, 0
    %v2134 = vmul.f32 %v2127, %v2132
    %v2135 = vmul.f32 %v2128, %v2132
    %v2136 = vmul.f32 %v2129, %v2132
    %v2137 = vmul.f32 %v2130, %v2132
    %v2139 = vperm.slane %v2050, 0
    %v2141 = vadd.f32 %v2134, %v2139
    %v2142 = vadd.f32 %v2135, %v2139
    %v2143 = vadd.f32 %v2136, %v2139
    %v2144 = vadd.f32 %v2137, %v2139
    %v2145 = vpack.c.bf16 %v2142, %v2141
    %v2146 = vpack.c.bf16 %v2144, %v2143
    %s2147 = scalar_lea.vmem [#allocation14], 192
    %v2148 = vld [vmem:[%s2147] sm:$0xff]
    %v2149 = vld [vmem:[%s2147 + $0x8] sm:$0xf]
    %v2150 = vld [vmem:[%s2147 + $0xc] sm:$0xff]
    %v2151 = vld [vmem:[%s2147 + $0x14] sm:$0xf]
    %v2152 = vld [vmem:[%s2147 + $0x18] sm:$0xff]
    %v2153 = vld [vmem:[%s2147 + $0x20] sm:$0xf]
    %v2154 = vld [vmem:[%s2147 + $0x24] sm:$0xff]
    %v2155 = vld [vmem:[%s2147 + $0x2c] sm:$0xf]
    %v2156 = vld [vmem:[%s2147 + $0x30] sm:$0xff]
    %v2157 = vld [vmem:[%s2147 + $0x38] sm:$0xf]
    %v2158 = vld [vmem:[%s2147 + $0x3c] sm:$0xff]
    %v2159 = vld [vmem:[%s2147 + $0x44] sm:$0xf]
    %v2160 = vld [vmem:[%s2147 + $0x48] sm:$0xff]
    %v2161 = vld [vmem:[%s2147 + $0x50] sm:$0xf]
    %v2162 = vld [vmem:[%s2147 + $0x54] sm:$0xff]
    %v2163 = vld [vmem:[%s2147 + $0x5c] sm:$0xf]
    %v2164 = vld [vmem:[%s2147 + $0x60] sm:$0xff]
    %v2165 = vld [vmem:[%s2147 + $0x68] sm:$0xf]
    %v2166 = vld [vmem:[%s2147 + $0x6c] sm:$0xff]
    %v2167 = vld [vmem:[%s2147 + $0x74] sm:$0xf]
    %v2168 = vld [vmem:[%s2147 + $0x78] sm:$0xff]
    %v2169 = vld [vmem:[%s2147 + $0x80] sm:$0xf]
    %v2170 = vld [vmem:[%s2147 + $0x84] sm:$0xff]
    %v2171 = vld [vmem:[%s2147 + $0x8c] sm:$0xf]
    %v2172 = vld [vmem:[%s2147 + $0x90] sm:$0xff]
    %v2173 = vld [vmem:[%s2147 + $0x98] sm:$0xf]
    %v2174 = vld [vmem:[%s2147 + $0x9c] sm:$0xff]
    %v2175 = vld [vmem:[%s2147 + $0xa4] sm:$0xf]
    %v2176 = vld [vmem:[%s2147 + $0xa8] sm:$0xff]
    %v2177 = vld [vmem:[%s2147 + $0xb0] sm:$0xf]
    %v2178 = vld [vmem:[%s2147 + $0xb4] sm:$0xff]
    %v2179 = vld [vmem:[%s2147 + $0xbc] sm:$0xf]
    %s2180 = scalar_lea.vmem [#allocation15], 3
    %v2181 = vld [vmem:[%s2180] sm:$0x7]
    %v2183 = vperm.slane %v2181, 0
    %v2184 = vperm.slane %v2181, 1
    %v2185 = vperm.slane %v2181, 2
    %v2221 = vunpack.c.l.b16 %v2148
    %v2222 = vunpack.c.h.b16 %v2148
    %v2223 = vunpack.c.l.b16 %v2149
    %v2224 = vunpack.c.l.b16 %v2150
    %v2225 = vunpack.c.h.b16 %v2150
    %v2226 = vunpack.c.l.b16 %v2151
    %v2227 = vunpack.c.l.b16 %v2152
    %v2228 = vunpack.c.h.b16 %v2152
    %v2229 = vunpack.c.l.b16 %v2153
    %v2230 = vunpack.c.l.b16 %v2154
    %v2231 = vunpack.c.h.b16 %v2154
    %v2232 = vunpack.c.l.b16 %v2155
    %v2233 = vunpack.c.l.b16 %v2156
    %v2234 = vunpack.c.h.b16 %v2156
    %v2235 = vunpack.c.l.b16 %v2157
    %v2236 = vunpack.c.l.b16 %v2158
    %v2237 = vunpack.c.h.b16 %v2158
    %v2238 = vunpack.c.l.b16 %v2159
    %v2239 = vunpack.c.l.b16 %v2160
    %v2240 = vunpack.c.h.b16 %v2160
    %v2241 = vunpack.c.l.b16 %v2161
    %v2242 = vunpack.c.l.b16 %v2162
    %v2243 = vunpack.c.h.b16 %v2162
    %v2244 = vunpack.c.l.b16 %v2163
    %v2245 = vunpack.c.l.b16 %v2164
    %v2246 = vunpack.c.h.b16 %v2164
    %v2247 = vunpack.c.l.b16 %v2165
    %v2248 = vunpack.c.l.b16 %v2166
    %v2249 = vunpack.c.h.b16 %v2166
    %v2250 = vunpack.c.l.b16 %v2167
    %v2251 = vunpack.c.l.b16 %v2168
    %v2252 = vunpack.c.h.b16 %v2168
    %v2253 = vunpack.c.l.b16 %v2169
    %v2254 = vunpack.c.l.b16 %v2170
    %v2255 = vunpack.c.h.b16 %v2170
    %v2256 = vunpack.c.l.b16 %v2171
    %v2257 = vunpack.c.l.b16 %v2172
    %v2258 = vunpack.c.h.b16 %v2172
    %v2259 = vunpack.c.l.b16 %v2173
    %v2260 = vunpack.c.l.b16 %v2174
    %v2261 = vunpack.c.h.b16 %v2174
    %v2262 = vunpack.c.l.b16 %v2175
    %v2263 = vunpack.c.l.b16 %v2176
    %v2264 = vunpack.c.h.b16 %v2176
    %v2265 = vunpack.c.l.b16 %v2177
    %v2266 = vunpack.c.l.b16 %v2178
    %v2267 = vunpack.c.h.b16 %v2178
    %v2268 = vunpack.c.l.b16 %v2179
    %v2269 = vpack.c.b16 %v2224, %v2221
    %v2270 = vpack.c.b16 %v2225, %v2222
    %v2271 = vpack.c.b16 %v2226, %v2223
    %v2272 = vpack.c.b16 %v2230, %v2227
    %v2273 = vpack.c.b16 %v2231, %v2228
    %v2274 = vpack.c.b16 %v2232, %v2229
    %v2275 = vpack.c.b16 %v2236, %v2233
    %v2276 = vpack.c.b16 %v2237, %v2234
    %v2277 = vpack.c.b16 %v2238, %v2235
    %v2278 = vpack.c.b16 %v2242, %v2239
    %v2279 = vpack.c.b16 %v2243, %v2240
    %v2280 = vpack.c.b16 %v2244, %v2241
    %v2281 = vpack.c.b16 %v2248, %v2245
    %v2282 = vpack.c.b16 %v2249, %v2246
    %v2283 = vpack.c.b16 %v2250, %v2247
    %v2284 = vpack.c.b16 %v2254, %v2251
    %v2285 = vpack.c.b16 %v2255, %v2252
    %v2286 = vpack.c.b16 %v2256, %v2253
    %v2287 = vpack.c.b16 %v2260, %v2257
    %v2288 = vpack.c.b16 %v2261, %v2258
    %v2289 = vpack.c.b16 %v2262, %v2259
    %v2290 = vpack.c.b16 %v2266, %v2263
    %v2291 = vpack.c.b16 %v2267, %v2264
    %v2292 = vpack.c.b16 %v2268, %v2265
    %2317 = vmatpush.bf16.msra.mxu0 %v2290
    %2318 = vmatpush.bf16.msra.mxu0 %v2287
    %2319 = vmatpush.bf16.msra.mxu0 %v2284
    %2320 = vmatpush.bf16.msra.mxu0 %v2281
    %2321 = vmatpush.bf16.msra.mxu0 %v2278
    %2322 = vmatpush.bf16.msra.mxu0 %v2275
    %2323 = vmatpush.bf16.msra.mxu0 %v2272
    %2324 = vmatpush.bf16.msra.mxu0 %v2269
    %2325 = vmatmul.bf16.gmra.mxu0 %v2145
    %v2326 = vpop.f32.mrf.mxu0
    %v2327 = vadd.f32 %v2183, %v2326
    %v2328 = vpop.f32.mrf.mxu0
    %v2329 = vadd.f32 %v2183, %v2328
    %2330 = vmatmul.bf16.gmra.mxu0 %v2146
    %v2331 = vpop.f32.mrf.mxu0
    %v2332 = vadd.f32 %v2183, %v2331
    %v2333 = vpop.f32.mrf.mxu0
    %v2334 = vadd.f32 %v2183, %v2333
    %2335 = vdwg.mxu0
    %2336 = vmatpush.bf16.msra.mxu0 %v2291
    %2337 = vmatpush.bf16.msra.mxu0 %v2288
    %2338 = vmatpush.bf16.msra.mxu0 %v2285
    %2339 = vmatpush.bf16.msra.mxu0 %v2282
    %2340 = vmatpush.bf16.msra.mxu0 %v2279
    %2341 = vmatpush.bf16.msra.mxu0 %v2276
    %2342 = vmatpush.bf16.msra.mxu0 %v2273
    %2343 = vmatpush.bf16.msra.mxu0 %v2270
    %2344 = vmatmul.bf16.gmra.mxu0 %v2145
    %v2345 = vpop.f32.mrf.mxu0
    %v2346 = vadd.f32 %v2184, %v2345
    %v2347 = vpop.f32.mrf.mxu0
    %v2348 = vadd.f32 %v2184, %v2347
    %2349 = vmatmul.bf16.gmra.mxu0 %v2146
    %v2350 = vpop.f32.mrf.mxu0
    %v2351 = vadd.f32 %v2184, %v2350
    %v2352 = vpop.f32.mrf.mxu0
    %v2353 = vadd.f32 %v2184, %v2352
    %2354 = vdwg.mxu0
    %2355 = vmatpush.bf16.msra.mxu0 %v2292
    %2356 = vmatpush.bf16.msra.mxu0 %v2289
    %2357 = vmatpush.bf16.msra.mxu0 %v2286
    %2358 = vmatpush.bf16.msra.mxu0 %v2283
    %2359 = vmatpush.bf16.msra.mxu0 %v2280
    %2360 = vmatpush.bf16.msra.mxu0 %v2277
    %2361 = vmatpush.bf16.msra.mxu0 %v2274
    %2362 = vmatpush.bf16.msra.mxu0 %v2271
    %2363 = vmatmul.bf16.gmra.mxu0 %v2145
    %v2364 = vpop.f32.mrf.mxu0
    %v2365 = vadd.f32 %v2185, %v2364
    %v2366 = vpop.f32.mrf.mxu0
    %v2367 = vadd.f32 %v2185, %v2366
    %2368 = vmatmul.bf16.gmra.mxu0 %v2146
    %v2369 = vpop.f32.mrf.mxu0
    %v2370 = vadd.f32 %v2185, %v2369
    %v2371 = vpop.f32.mrf.mxu0
    %v2372 = vadd.f32 %v2185, %v2371
    %2373 = vdwg.mxu0
    %v2374 = vpack.c.bf16 %v2346, %v2327
    %v2375 = vpack.c.bf16 %v2365, %v2365
    %v2376 = vpack.c.bf16 %v2348, %v2329
    %v2377 = vpack.c.bf16 %v2367, %v2367
    %v2378 = vpack.c.bf16 %v2351, %v2332
    %v2379 = vpack.c.bf16 %v2370, %v2370
    %v2380 = vpack.c.bf16 %v2353, %v2334
    %v2381 = vpack.c.bf16 %v2372, %v2372
    %v2384 = vunpack.c.l.b16 %v2374
    %v2385 = vunpack.c.l.b16 %v2376
    %v2386 = vpack.c.b16 %v2385, %v2384
    %v2387 = vunpack.c.h.b16 %v2374
    %v2388 = vunpack.c.h.b16 %v2376
    %v2389 = vpack.c.b16 %v2388, %v2387
    %v2391 = vsel %vm1043, %v2386, 0
    %v2394 = vsel %vm1043, %v2389, 0
    %2396 = vmatpush.bf16.xpose.msra.mxu0 0
    %2397 = vmatpush.bf16.xpose.msra.mxu0 0
    %2398 = vmatpush.bf16.xpose.msra.mxu0 0
    %2399 = vmatpush.bf16.xpose.msra.mxu0 0
    %2400 = vmatpush.bf16.xpose.msra.mxu0 0
    %2401 = vmatpush.bf16.xpose.msra.mxu0 0
    %2402 = vmatpush.bf16.xpose.msra.mxu0 0
    %2403 = vmatpush.bf16.xpose.msra.mxu0 %v2394
    %2404 = vmatmul.bf16.gmra.mxu0 %v2391
    %v2405 = vpop.f32.mrf.mxu0
    %v2406 = vadd.f32 0.0, %v2405
    %v2407 = vpop.f32.mrf.mxu0
    %v2408 = vadd.f32 0.0, %v2407
    %2409 = vdwg.mxu0
    %v2410 = vmul.f32 %v2406, 0.125
    %v2411 = vmul.f32 %v2408, 0.125
    %v2412 = vadd.f32 %v2410, %v1067
    %v2413 = vadd.f32 %v2411, %v1067
    %v2414 = vsel %vm1071, %v2412, -inf
    %2415 = vmax.xlane.f32.xlu0 %v2414
    %v2416 = vpop.xlane.xlu0 %2415
    %v2417 = vsel %vm1071, %v2413, -inf
    %2418 = vmax.xlane.f32.xlu0 %v2417
    %v2419 = vpop.xlane.xlu0 %2418
    %v2420 = vsub.f32 %v2412, %v2416
    %v2421 = vsub.f32 %v2413, %v2419
    %v2422 = vmul.f32 %v2420, 1.442695
    %v2423 = vpow.pop %v2422
    %v2424 = vmul.f32 %v2421, 1.442695
    %v2425 = vpow.pop %v2424
    %v2426 = vsel %vm1071, %v2423, 0.0
    %2427 = vadd.xlane.f32.xlu0 %v2426
    %v2428 = vpop.xlane.xlu0 %2427
    %v2429 = vsel %vm1071, %v2425, 0.0
    %2430 = vadd.xlane.f32.xlu0 %v2429
    %v2431 = vpop.xlane.xlu0 %2430
    %v2432 = vrcp.pop %v2428
    %v2433 = vrcp.pop %v2431
    %v2434 = vmul.f32 %v2423, %v2432
    %v2435 = vmul.f32 %v2425, %v2433
    %v2436 = vpack.c.bf16 %v2435, %v2434
    %v2439 = vunpack.c.l.b16 %v2375
    %v2440 = vunpack.c.l.b16 %v2377
    %v2441 = vpack.c.b16 %v2440, %v2439
    %v2444 = vsel %vm1071, %v2436, 0
    %2446 = vmatpush.bf16.msra.mxu0 0
    %2447 = vmatpush.bf16.msra.mxu0 0
    %2448 = vmatpush.bf16.msra.mxu0 0
    %2449 = vmatpush.bf16.msra.mxu0 0
    %2450 = vmatpush.bf16.msra.mxu0 0
    %2451 = vmatpush.bf16.msra.mxu0 0
    %2452 = vmatpush.bf16.msra.mxu0 0
    %2453 = vmatpush.bf16.msra.mxu0 %v2441
    %2454 = vmatmul.bf16.gmra.mxu0 %v2444
    %v2455 = vpop.f32.mrf.mxu0
    %v2456 = vadd.f32 0.0, %v2455
    %v2457 = vpop.f32.mrf.mxu0
    %v2458 = vadd.f32 0.0, %v2457
    %2459 = vdwg.mxu0
    %v2460 = vpack.c.bf16 %v2458, %v2456
    %s2461 = scalar_lea.vmem [#allocation17], 64
    %v2462 = vld [vmem:[%s2461] sm:$0xf]
    %v2463 = vld [vmem:[%s2461 + $0x4] sm:$0xf]
    %v2464 = vld [vmem:[%s2461 + $0x8] sm:$0xf]
    %v2465 = vld [vmem:[%s2461 + $0xc] sm:$0xf]
    %v2466 = vld [vmem:[%s2461 + $0x10] sm:$0xf]
    %v2467 = vld [vmem:[%s2461 + $0x14] sm:$0xf]
    %v2468 = vld [vmem:[%s2461 + $0x18] sm:$0xf]
    %v2469 = vld [vmem:[%s2461 + $0x1c] sm:$0xf]
    %2470 = vrot.lane.b32.xlu0 %v2386, 64
    %v2471 = vpop.permute.xlu0 %2470
    %2472 = vrot.lane.b32.xlu0 %v2389, 64
    %v2473 = vpop.permute.xlu0 %2472
    %v2475 = vsel %vm1043, %v2471, 0
    %v2478 = vsel %vm1043, %v2473, 0
    %2480 = vmatpush.bf16.xpose.msra.mxu0 0
    %2481 = vmatpush.bf16.xpose.msra.mxu0 0
    %2482 = vmatpush.bf16.xpose.msra.mxu0 0
    %2483 = vmatpush.bf16.xpose.msra.mxu0 0
    %2484 = vmatpush.bf16.xpose.msra.mxu0 0
    %2485 = vmatpush.bf16.xpose.msra.mxu0 0
    %2486 = vmatpush.bf16.xpose.msra.mxu0 0
    %2487 = vmatpush.bf16.xpose.msra.mxu0 %v2478
    %2488 = vmatmul.bf16.gmra.mxu0 %v2475
    %v2489 = vpop.f32.mrf.mxu0
    %v2490 = vadd.f32 0.0, %v2489
    %v2491 = vpop.f32.mrf.mxu0
    %v2492 = vadd.f32 0.0, %v2491
    %2493 = vdwg.mxu0
    %v2494 = vmul.f32 %v2490, 0.125
    %v2495 = vmul.f32 %v2492, 0.125
    %v2496 = vadd.f32 %v2494, %v1067
    %v2497 = vadd.f32 %v2495, %v1067
    %v2498 = vsel %vm1071, %v2496, -inf
    %2499 = vmax.xlane.f32.xlu0 %v2498
    %v2500 = vpop.xlane.xlu0 %2499
    %v2501 = vsel %vm1071, %v2497, -inf
    %2502 = vmax.xlane.f32.xlu0 %v2501
    %v2503 = vpop.xlane.xlu0 %2502
    %v2504 = vsub.f32 %v2496, %v2500
    %v2505 = vsub.f32 %v2497, %v2503
    %v2506 = vmul.f32 %v2504, 1.442695
    %v2507 = vpow.pop %v2506
    %v2508 = vmul.f32 %v2505, 1.442695
    %v2509 = vpow.pop %v2508
    %v2510 = vsel %vm1071, %v2507, 0.0
    %2511 = vadd.xlane.f32.xlu0 %v2510
    %v2512 = vpop.xlane.xlu0 %2511
    %v2513 = vsel %vm1071, %v2509, 0.0
    %2514 = vadd.xlane.f32.xlu0 %v2513
    %v2515 = vpop.xlane.xlu0 %2514
    %v2516 = vrcp.pop %v2512
    %v2517 = vrcp.pop %v2515
    %v2518 = vmul.f32 %v2507, %v2516
    %v2519 = vmul.f32 %v2509, %v2517
    %v2520 = vpack.c.bf16 %v2519, %v2518
    %2521 = vrot.lane.b32.xlu0 %v2441, 64
    %v2522 = vpop.permute.xlu0 %2521
    %v2525 = vsel %vm1071, %v2520, 0
    %2527 = vmatpush.bf16.msra.mxu0 0
    %2528 = vmatpush.bf16.msra.mxu0 0
    %2529 = vmatpush.bf16.msra.mxu0 0
    %2530 = vmatpush.bf16.msra.mxu0 0
    %2531 = vmatpush.bf16.msra.mxu0 0
    %2532 = vmatpush.bf16.msra.mxu0 0
    %2533 = vmatpush.bf16.msra.mxu0 0
    %2534 = vmatpush.bf16.msra.mxu0 %v2522
    %2535 = vmatmul.bf16.gmra.mxu0 %v2525
    %v2536 = vpop.f32.mrf.mxu0
    %v2537 = vadd.f32 0.0, %v2536
    %v2538 = vpop.f32.mrf.mxu0
    %v2539 = vadd.f32 0.0, %v2538
    %2540 = vdwg.mxu0
    %v2541 = vpack.c.bf16 %v2539, %v2537
    %v2542 = vld [vmem:[%s2461 + $0x20] sm:$0xf]
    %v2543 = vld [vmem:[%s2461 + $0x24] sm:$0xf]
    %v2544 = vld [vmem:[%s2461 + $0x28] sm:$0xf]
    %v2545 = vld [vmem:[%s2461 + $0x2c] sm:$0xf]
    %v2546 = vld [vmem:[%s2461 + $0x30] sm:$0xf]
    %v2547 = vld [vmem:[%s2461 + $0x34] sm:$0xf]
    %v2548 = vld [vmem:[%s2461 + $0x38] sm:$0xf]
    %v2549 = vld [vmem:[%s2461 + $0x3c] sm:$0xf]
    %v2558 = vunpack.c.l.b16 %v2542
    %v2559 = vunpack.c.l.b16 %v2543
    %v2560 = vunpack.c.l.b16 %v2544
    %v2561 = vunpack.c.l.b16 %v2545
    %v2562 = vunpack.c.l.b16 %v2546
    %v2563 = vunpack.c.l.b16 %v2547
    %v2564 = vunpack.c.l.b16 %v2548
    %v2565 = vunpack.c.l.b16 %v2549
    %v2566 = vpack.c.b16 %v2559, %v2558
    %v2567 = vpack.c.b16 %v2561, %v2560
    %v2568 = vpack.c.b16 %v2563, %v2562
    %v2569 = vpack.c.b16 %v2565, %v2564
    %v2575 = vsel %vm1043, %v2541, 0
    %2577 = vmatpush.bf16.msra.mxu0 0
    %2578 = vmatpush.bf16.msra.mxu0 0
    %2579 = vmatpush.bf16.msra.mxu0 0
    %2580 = vmatpush.bf16.msra.mxu0 0
    %2581 = vmatpush.bf16.msra.mxu0 %v2569
    %2582 = vmatpush.bf16.msra.mxu0 %v2568
    %2583 = vmatpush.bf16.msra.mxu0 %v2567
    %2584 = vmatpush.bf16.msra.mxu0 %v2566
    %2585 = vmatmul.bf16.gmra.mxu0 %v2575
    %v2586 = vpop.f32.mrf.mxu0
    %v2587 = vadd.f32 0.0, %v2586
    %v2588 = vpop.f32.mrf.mxu0
    %v2589 = vadd.f32 0.0, %v2588
    %2590 = vdwg.mxu0
    %v2599 = vunpack.c.l.b16 %v2462
    %v2600 = vunpack.c.l.b16 %v2463
    %v2601 = vunpack.c.l.b16 %v2464
    %v2602 = vunpack.c.l.b16 %v2465
    %v2603 = vunpack.c.l.b16 %v2466
    %v2604 = vunpack.c.l.b16 %v2467
    %v2605 = vunpack.c.l.b16 %v2468
    %v2606 = vunpack.c.l.b16 %v2469
    %v2607 = vpack.c.b16 %v2600, %v2599
    %v2608 = vpack.c.b16 %v2602, %v2601
    %v2609 = vpack.c.b16 %v2604, %v2603
    %v2610 = vpack.c.b16 %v2606, %v2605
    %v2616 = vsel %vm1043, %v2460, 0
    %2618 = vmatpush.bf16.msra.mxu0 0
    %2619 = vmatpush.bf16.msra.mxu0 0
    %2620 = vmatpush.bf16.msra.mxu0 0
    %2621 = vmatpush.bf16.msra.mxu0 0
    %2622 = vmatpush.bf16.msra.mxu0 %v2610
    %2623 = vmatpush.bf16.msra.mxu0 %v2609
    %2624 = vmatpush.bf16.msra.mxu0 %v2608
    %2625 = vmatpush.bf16.msra.mxu0 %v2607
    %2626 = vmatmul.bf16.gmra.mxu0 %v2616
    %v2627 = vpop.f32.mrf.mxu0
    %v2628 = vadd.f32 %v2587, %v2627
    %v2629 = vpop.f32.mrf.mxu0
    %v2630 = vadd.f32 %v2589, %v2629
    %2631 = vdwg.mxu0
    %2632 = vst [vmem:[#allocation2] sm:$0xff] %v2628
    %2633 = vst [vmem:[#allocation2 + $0x8] sm:$0xff] %v2630
    %v2636 = vunpack.c.l.b16 %v2378
    %v2637 = vunpack.c.l.b16 %v2380
    %v2638 = vpack.c.b16 %v2637, %v2636
    %v2639 = vunpack.c.h.b16 %v2378
    %v2640 = vunpack.c.h.b16 %v2380
    %v2641 = vpack.c.b16 %v2640, %v2639
    %v2643 = vsel %vm1043, %v2638, 0
    %v2646 = vsel %vm1043, %v2641, 0
    %2648 = vmatpush.bf16.xpose.msra.mxu0 0
    %2649 = vmatpush.bf16.xpose.msra.mxu0 0
    %2650 = vmatpush.bf16.xpose.msra.mxu0 0
    %2651 = vmatpush.bf16.xpose.msra.mxu0 0
    %2652 = vmatpush.bf16.xpose.msra.mxu0 0
    %2653 = vmatpush.bf16.xpose.msra.mxu0 0
    %2654 = vmatpush.bf16.xpose.msra.mxu0 0
    %2655 = vmatpush.bf16.xpose.msra.mxu0 %v2646
    %2656 = vmatmul.bf16.gmra.mxu0 %v2643
    %v2657 = vpop.f32.mrf.mxu0
    %v2658 = vadd.f32 0.0, %v2657
    %v2659 = vpop.f32.mrf.mxu0
    %v2660 = vadd.f32 0.0, %v2659
    %2661 = vdwg.mxu0
    %v2662 = vmul.f32 %v2658, 0.125
    %v2663 = vmul.f32 %v2660, 0.125
    %v2664 = vadd.f32 %v2662, %v1322
    %v2665 = vadd.f32 %v2663, %v1322
    %v2666 = vsel %vm1071, %v2664, -inf
    %2667 = vmax.xlane.f32.xlu0 %v2666
    %v2668 = vpop.xlane.xlu0 %2667
    %v2669 = vsel %vm1071, %v2665, -inf
    %2670 = vmax.xlane.f32.xlu0 %v2669
    %v2671 = vpop.xlane.xlu0 %2670
    %v2672 = vsub.f32 %v2664, %v2668
    %v2673 = vsub.f32 %v2665, %v2671
    %v2674 = vmul.f32 %v2672, 1.442695
    %v2675 = vpow.pop %v2674
    %v2676 = vmul.f32 %v2673, 1.442695
    %v2677 = vpow.pop %v2676
    %v2678 = vsel %vm1071, %v2675, 0.0
    %2679 = vadd.xlane.f32.xlu0 %v2678
    %v2680 = vpop.xlane.xlu0 %2679
    %v2681 = vsel %vm1071, %v2677, 0.0
    %2682 = vadd.xlane.f32.xlu0 %v2681
    %v2683 = vpop.xlane.xlu0 %2682
    %v2684 = vrcp.pop %v2680
    %v2685 = vrcp.pop %v2683
    %v2686 = vmul.f32 %v2675, %v2684
    %v2687 = vmul.f32 %v2677, %v2685
    %v2688 = vpack.c.bf16 %v2687, %v2686
    %v2691 = vunpack.c.l.b16 %v2379
    %v2692 = vunpack.c.l.b16 %v2381
    %v2693 = vpack.c.b16 %v2692, %v2691
    %v2696 = vsel %vm1071, %v2688, 0
    %2698 = vmatpush.bf16.msra.mxu0 0
    %2699 = vmatpush.bf16.msra.mxu0 0
    %2700 = vmatpush.bf16.msra.mxu0 0
    %2701 = vmatpush.bf16.msra.mxu0 0
    %2702 = vmatpush.bf16.msra.mxu0 0
    %2703 = vmatpush.bf16.msra.mxu0 0
    %2704 = vmatpush.bf16.msra.mxu0 0
    %2705 = vmatpush.bf16.msra.mxu0 %v2693
    %2706 = vmatmul.bf16.gmra.mxu0 %v2696
    %v2707 = vpop.f32.mrf.mxu0
    %v2708 = vadd.f32 0.0, %v2707
    %v2709 = vpop.f32.mrf.mxu0
    %v2710 = vadd.f32 0.0, %v2709
    %2711 = vdwg.mxu0
    %v2712 = vpack.c.bf16 %v2710, %v2708
    %v2713 = vld [vmem:[%s2461] sm:$0xf]
    %v2714 = vld [vmem:[%s2461 + $0x4] sm:$0xf]
    %v2715 = vld [vmem:[%s2461 + $0x8] sm:$0xf]
    %v2716 = vld [vmem:[%s2461 + $0xc] sm:$0xf]
    %v2717 = vld [vmem:[%s2461 + $0x10] sm:$0xf]
    %v2718 = vld [vmem:[%s2461 + $0x14] sm:$0xf]
    %v2719 = vld [vmem:[%s2461 + $0x18] sm:$0xf]
    %v2720 = vld [vmem:[%s2461 + $0x1c] sm:$0xf]
    %2721 = vrot.lane.b32.xlu0 %v2638, 64
    %v2722 = vpop.permute.xlu0 %2721
    %2723 = vrot.lane.b32.xlu0 %v2641, 64
    %v2724 = vpop.permute.xlu0 %2723
    %v2726 = vsel %vm1043, %v2722, 0
    %v2729 = vsel %vm1043, %v2724, 0
    %2731 = vmatpush.bf16.xpose.msra.mxu0 0
    %2732 = vmatpush.bf16.xpose.msra.mxu0 0
    %2733 = vmatpush.bf16.xpose.msra.mxu0 0
    %2734 = vmatpush.bf16.xpose.msra.mxu0 0
    %2735 = vmatpush.bf16.xpose.msra.mxu0 0
    %2736 = vmatpush.bf16.xpose.msra.mxu0 0
    %2737 = vmatpush.bf16.xpose.msra.mxu0 0
    %2738 = vmatpush.bf16.xpose.msra.mxu0 %v2729
    %2739 = vmatmul.bf16.gmra.mxu0 %v2726
    %v2740 = vpop.f32.mrf.mxu0
    %v2741 = vadd.f32 0.0, %v2740
    %v2742 = vpop.f32.mrf.mxu0
    %v2743 = vadd.f32 0.0, %v2742
    %2744 = vdwg.mxu0
    %v2745 = vmul.f32 %v2741, 0.125
    %v2746 = vmul.f32 %v2743, 0.125
    %v2747 = vadd.f32 %v2745, %v1322
    %v2748 = vadd.f32 %v2746, %v1322
    %v2749 = vsel %vm1071, %v2747, -inf
    %2750 = vmax.xlane.f32.xlu0 %v2749
    %v2751 = vpop.xlane.xlu0 %2750
    %v2752 = vsel %vm1071, %v2748, -inf
    %2753 = vmax.xlane.f32.xlu0 %v2752
    %v2754 = vpop.xlane.xlu0 %2753
    %v2755 = vsub.f32 %v2747, %v2751
    %v2756 = vsub.f32 %v2748, %v2754
    %v2757 = vmul.f32 %v2755, 1.442695
    %v2758 = vpow.pop %v2757
    %v2759 = vmul.f32 %v2756, 1.442695
    %v2760 = vpow.pop %v2759
    %v2761 = vsel %vm1071, %v2758, 0.0
    %2762 = vadd.xlane.f32.xlu0 %v2761
    %v2763 = vpop.xlane.xlu0 %2762
    %v2764 = vsel %vm1071, %v2760, 0.0
    %2765 = vadd.xlane.f32.xlu0 %v2764
    %v2766 = vpop.xlane.xlu0 %2765
    %v2767 = vrcp.pop %v2763
    %v2768 = vrcp.pop %v2766
    %v2769 = vmul.f32 %v2758, %v2767
    %v2770 = vmul.f32 %v2760, %v2768
    %v2771 = vpack.c.bf16 %v2770, %v2769
    %2772 = vrot.lane.b32.xlu0 %v2693, 64
    %v2773 = vpop.permute.xlu0 %2772
    %v2776 = vsel %vm1071, %v2771, 0
    %2778 = vmatpush.bf16.msra.mxu0 0
    %2779 = vmatpush.bf16.msra.mxu0 0
    %2780 = vmatpush.bf16.msra.mxu0 0
    %2781 = vmatpush.bf16.msra.mxu0 0
    %2782 = vmatpush.bf16.msra.mxu0 0
    %2783 = vmatpush.bf16.msra.mxu0 0
    %2784 = vmatpush.bf16.msra.mxu0 0
    %2785 = vmatpush.bf16.msra.mxu0 %v2773
    %2786 = vmatmul.bf16.gmra.mxu0 %v2776
    %v2787 = vpop.f32.mrf.mxu0
    %v2788 = vadd.f32 0.0, %v2787
    %v2789 = vpop.f32.mrf.mxu0
    %v2790 = vadd.f32 0.0, %v2789
    %2791 = vdwg.mxu0
    %v2792 = vpack.c.bf16 %v2790, %v2788
    %v2793 = vld [vmem:[%s2461 + $0x20] sm:$0xf]
    %v2794 = vld [vmem:[%s2461 + $0x24] sm:$0xf]
    %v2795 = vld [vmem:[%s2461 + $0x28] sm:$0xf]
    %v2796 = vld [vmem:[%s2461 + $0x2c] sm:$0xf]
    %v2797 = vld [vmem:[%s2461 + $0x30] sm:$0xf]
    %v2798 = vld [vmem:[%s2461 + $0x34] sm:$0xf]
    %v2799 = vld [vmem:[%s2461 + $0x38] sm:$0xf]
    %v2800 = vld [vmem:[%s2461 + $0x3c] sm:$0xf]
    %v2809 = vunpack.c.l.b16 %v2793
    %v2810 = vunpack.c.l.b16 %v2794
    %v2811 = vunpack.c.l.b16 %v2795
    %v2812 = vunpack.c.l.b16 %v2796
    %v2813 = vunpack.c.l.b16 %v2797
    %v2814 = vunpack.c.l.b16 %v2798
    %v2815 = vunpack.c.l.b16 %v2799
    %v2816 = vunpack.c.l.b16 %v2800
    %v2817 = vpack.c.b16 %v2810, %v2809
    %v2818 = vpack.c.b16 %v2812, %v2811
    %v2819 = vpack.c.b16 %v2814, %v2813
    %v2820 = vpack.c.b16 %v2816, %v2815
    %v2826 = vsel %vm1043, %v2792, 0
    %2828 = vmatpush.bf16.msra.mxu0 0
    %2829 = vmatpush.bf16.msra.mxu0 0
    %2830 = vmatpush.bf16.msra.mxu0 0
    %2831 = vmatpush.bf16.msra.mxu0 0
    %2832 = vmatpush.bf16.msra.mxu0 %v2820
    %2833 = vmatpush.bf16.msra.mxu0 %v2819
    %2834 = vmatpush.bf16.msra.mxu0 %v2818
    %2835 = vmatpush.bf16.msra.mxu0 %v2817
    %2836 = vmatmul.bf16.gmra.mxu0 %v2826
    %v2837 = vpop.f32.mrf.mxu0
    %v2838 = vadd.f32 0.0, %v2837
    %v2839 = vpop.f32.mrf.mxu0
    %v2840 = vadd.f32 0.0, %v2839
    %2841 = vdwg.mxu0
    %v2850 = vunpack.c.l.b16 %v2713
    %v2851 = vunpack.c.l.b16 %v2714
    %v2852 = vunpack.c.l.b16 %v2715
    %v2853 = vunpack.c.l.b16 %v2716
    %v2854 = vunpack.c.l.b16 %v2717
    %v2855 = vunpack.c.l.b16 %v2718
    %v2856 = vunpack.c.l.b16 %v2719
    %v2857 = vunpack.c.l.b16 %v2720
    %v2858 = vpack.c.b16 %v2851, %v2850
    %v2859 = vpack.c.b16 %v2853, %v2852
    %v2860 = vpack.c.b16 %v2855, %v2854
    %v2861 = vpack.c.b16 %v2857, %v2856
    %v2867 = vsel %vm1043, %v2712, 0
    %2869 = vmatpush.bf16.msra.mxu0 0
    %2870 = vmatpush.bf16.msra.mxu0 0
    %2871 = vmatpush.bf16.msra.mxu0 0
    %2872 = vmatpush.bf16.msra.mxu0 0
    %2873 = vmatpush.bf16.msra.mxu0 %v2861
    %2874 = vmatpush.bf16.msra.mxu0 %v2860
    %2875 = vmatpush.bf16.msra.mxu0 %v2859
    %2876 = vmatpush.bf16.msra.mxu0 %v2858
    %2877 = vmatmul.bf16.gmra.mxu0 %v2867
    %v2878 = vpop.f32.mrf.mxu0
    %v2879 = vadd.f32 %v2838, %v2878
    %v2880 = vpop.f32.mrf.mxu0
    %v2881 = vadd.f32 %v2840, %v2880
    %2882 = vdwg.mxu0
    %2883 = vst [vmem:[#allocation2 + $0x10] sm:$0xff] %v2879
    %2884 = vst [vmem:[#allocation2 + $0x18] sm:$0xff] %v2881
    %v2885 = vld [vmem:[#allocation2] sm:$0xff]
    %v2886 = vld [vmem:[#allocation2 + $0x8] sm:$0xff]
    %v2887 = vld [vmem:[#allocation2 + $0x10] sm:$0xff]
    %v2888 = vld [vmem:[#allocation2 + $0x18] sm:$0xff]
    %s2889 = scalar_lea.vmem [#allocation18], 1
    %v2890 = vld [vmem:[%s2889] sm:$0x1]
    %v2892 = vperm.slane %v2890, 0
    %v2894 = vadd.f32 %v2885, %v2892
    %v2895 = vadd.f32 %v2886, %v2892
    %v2896 = vadd.f32 %v2887, %v2892
    %v2897 = vadd.f32 %v2888, %v2892
    %v2898 = vadd.f32 %v2894, %v2141
    %v2899 = vadd.f32 %v2895, %v2142
    %v2900 = vadd.f32 %v2896, %v2143
    %v2901 = vadd.f32 %v2897, %v2144
    %s2902 = scalar_lea.vmem %s16, 1
    %v2903 = vld [vmem:[%s2902] sm:$0x1]
    %s2904 = scalar_lea.vmem [#allocation26], 1
    %v2905 = vld [vmem:[%s2904] sm:$0x1]
    %2906 = vadd.xlane.f32.xlu0 %v2898
    %v2907 = vpop.xlane.xlu0 %2906
    %2908 = vadd.xlane.f32.xlu0 %v2899
    %v2909 = vpop.xlane.xlu0 %2908
    %2910 = vadd.xlane.f32.xlu0 %v2900
    %v2911 = vpop.xlane.xlu0 %2910
    %2912 = vadd.xlane.f32.xlu0 %v2901
    %v2913 = vpop.xlane.xlu0 %2912
    %v2914 = vmul.f32 %v2907, %v705
    %v2915 = vmul.f32 %v2909, %v705
    %v2916 = vmul.f32 %v2911, %v705
    %v2917 = vmul.f32 %v2913, %v705
    %v2918 = vsub.f32 %v2898, %v2914
    %v2919 = vsub.f32 %v2899, %v2915
    %v2920 = vsub.f32 %v2900, %v2916
    %v2921 = vsub.f32 %v2901, %v2917
    %v2922 = vmul.f32 %v2918, %v2918
    %v2923 = vmul.f32 %v2919, %v2919
    %v2924 = vmul.f32 %v2920, %v2920
    %v2925 = vmul.f32 %v2921, %v2921
    %2926 = vadd.xlane.f32.xlu0 %v2922
    %v2927 = vpop.xlane.xlu0 %2926
    %2928 = vadd.xlane.f32.xlu0 %v2923
    %v2929 = vpop.xlane.xlu0 %2928
    %2930 = vadd.xlane.f32.xlu0 %v2924
    %v2931 = vpop.xlane.xlu0 %2930
    %2932 = vadd.xlane.f32.xlu0 %v2925
    %v2933 = vpop.xlane.xlu0 %2932
    %v2934 = vmul.f32 %v2927, %v705
    %v2935 = vmul.f32 %v2929, %v705
    %v2936 = vmul.f32 %v2931, %v705
    %v2937 = vmul.f32 %v2933, %v705
    %v2938 = vadd.f32 %v2934, 1e-12
    %v2939 = vadd.f32 %v2935, 1e-12
    %v2940 = vadd.f32 %v2936, 1e-12
    %v2941 = vadd.f32 %v2937, 1e-12
    %v2942 = vrsqrt.pop %v2938
    %v2943 = vmul.f32 %v2942, %v2938
    %v2944 = vmul.f32 %v2943, %v2942
    %v2945 = vmul.f32 0.5, %v2944
    %v2946 = vsub.f32 1.5, %v2945
    %v2947 = vmul.f32 %v2942, %v2946
    %vm2948 = vweird.f32 %v2938
    %vm2949 = vweird.f32 %v2942
    %vm2950 = vmor %vm2948, %vm2949
    %v2951 = vsel %vm2950, %v2942, %v2947
    %v2952 = vrsqrt.pop %v2939
    %v2953 = vmul.f32 %v2952, %v2939
    %v2954 = vmul.f32 %v2953, %v2952
    %v2955 = vmul.f32 0.5, %v2954
    %v2956 = vsub.f32 1.5, %v2955
    %v2957 = vmul.f32 %v2952, %v2956
    %vm2958 = vweird.f32 %v2939
    %vm2959 = vweird.f32 %v2952
    %vm2960 = vmor %vm2958, %vm2959
    %v2961 = vsel %vm2960, %v2952, %v2957
    %v2962 = vrsqrt.pop %v2940
    %v2963 = vmul.f32 %v2962, %v2940
    %v2964 = vmul.f32 %v2963, %v2962
    %v2965 = vmul.f32 0.5, %v2964
    %v2966 = vsub.f32 1.5, %v2965
    %v2967 = vmul.f32 %v2962, %v2966
    %vm2968 = vweird.f32 %v2940
    %vm2969 = vweird.f32 %v2962
    %vm2970 = vmor %vm2968, %vm2969
    %v2971 = vsel %vm2970, %v2962, %v2967
    %v2972 = vrsqrt.pop %v2941
    %v2973 = vmul.f32 %v2972, %v2941
    %v2974 = vmul.f32 %v2973, %v2972
    %v2975 = vmul.f32 0.5, %v2974
    %v2976 = vsub.f32 1.5, %v2975
    %v2977 = vmul.f32 %v2972, %v2976
    %vm2978 = vweird.f32 %v2941
    %vm2979 = vweird.f32 %v2972
    %vm2980 = vmor %vm2978, %vm2979
    %v2981 = vsel %vm2980, %v2972, %v2977
    %v2982 = vmul.f32 %v2918, %v2951
    %v2983 = vmul.f32 %v2919, %v2961
    %v2984 = vmul.f32 %v2920, %v2971
    %v2985 = vmul.f32 %v2921, %v2981
    %v2987 = vperm.slane %v2903, 0
    %v2989 = vmul.f32 %v2982, %v2987
    %v2990 = vmul.f32 %v2983, %v2987
    %v2991 = vmul.f32 %v2984, %v2987
    %v2992 = vmul.f32 %v2985, %v2987
    %v2994 = vperm.slane %v2905, 0
    %v2996 = vadd.f32 %v2989, %v2994
    %v2997 = vadd.f32 %v2990, %v2994
    %v2998 = vadd.f32 %v2991, %v2994
    %v2999 = vadd.f32 %v2992, %v2994
    %v3000 = vpack.c.bf16 %v2997, %v2996
    %v3001 = vpack.c.bf16 %v2999, %v2998
    %s3002 = scalar_lea.vmem [#allocation20], 128
    %v3003 = vld [vmem:[%s3002] sm:$0xff]
    %v3004 = vld [vmem:[%s3002 + $0x8] sm:$0xff]
    %v3005 = vld [vmem:[%s3002 + $0x10] sm:$0xff]
    %v3006 = vld [vmem:[%s3002 + $0x18] sm:$0xff]
    %v3007 = vld [vmem:[%s3002 + $0x20] sm:$0xff]
    %v3008 = vld [vmem:[%s3002 + $0x28] sm:$0xff]
    %v3009 = vld [vmem:[%s3002 + $0x30] sm:$0xff]
    %v3010 = vld [vmem:[%s3002 + $0x38] sm:$0xff]
    %v3011 = vld [vmem:[%s3002 + $0x40] sm:$0xff]
    %v3012 = vld [vmem:[%s3002 + $0x48] sm:$0xff]
    %v3013 = vld [vmem:[%s3002 + $0x50] sm:$0xff]
    %v3014 = vld [vmem:[%s3002 + $0x58] sm:$0xff]
    %v3015 = vld [vmem:[%s3002 + $0x60] sm:$0xff]
    %v3016 = vld [vmem:[%s3002 + $0x68] sm:$0xff]
    %v3017 = vld [vmem:[%s3002 + $0x70] sm:$0xff]
    %v3018 = vld [vmem:[%s3002 + $0x78] sm:$0xff]
    %s3019 = scalar_lea.vmem [#allocation21], 2
    %v3020 = vld [vmem:[%s3019] sm:$0x3]
    %v3022 = vperm.slane %v3020, 0
    %v3023 = vperm.slane %v3020, 1
    %v3042 = vunpack.c.l.b16 %v3003
    %v3043 = vunpack.c.h.b16 %v3003
    %v3044 = vunpack.c.l.b16 %v3004
    %v3045 = vunpack.c.h.b16 %v3004
    %v3046 = vunpack.c.l.b16 %v3005
    %v3047 = vunpack.c.h.b16 %v3005
    %v3048 = vunpack.c.l.b16 %v3006
    %v3049 = vunpack.c.h.b16 %v3006
    %v3050 = vunpack.c.l.b16 %v3007
    %v3051 = vunpack.c.h.b16 %v3007
    %v3052 = vunpack.c.l.b16 %v3008
    %v3053 = vunpack.c.h.b16 %v3008
    %v3054 = vunpack.c.l.b16 %v3009
    %v3055 = vunpack.c.h.b16 %v3009
    %v3056 = vunpack.c.l.b16 %v3010
    %v3057 = vunpack.c.h.b16 %v3010
    %v3058 = vunpack.c.l.b16 %v3011
    %v3059 = vunpack.c.h.b16 %v3011
    %v3060 = vunpack.c.l.b16 %v3012
    %v3061 = vunpack.c.h.b16 %v3012
    %v3062 = vunpack.c.l.b16 %v3013
    %v3063 = vunpack.c.h.b16 %v3013
    %v3064 = vunpack.c.l.b16 %v3014
    %v3065 = vunpack.c.h.b16 %v3014
    %v3066 = vunpack.c.l.b16 %v3015
    %v3067 = vunpack.c.h.b16 %v3015
    %v3068 = vunpack.c.l.b16 %v3016
    %v3069 = vunpack.c.h.b16 %v3016
    %v3070 = vunpack.c.l.b16 %v3017
    %v3071 = vunpack.c.h.b16 %v3017
    %v3072 = vunpack.c.l.b16 %v3018
    %v3073 = vunpack.c.h.b16 %v3018
    %v3074 = vpack.c.b16 %v3044, %v3042
    %v3075 = vpack.c.b16 %v3045, %v3043
    %v3076 = vpack.c.b16 %v3048, %v3046
    %v3077 = vpack.c.b16 %v3049, %v3047
    %v3078 = vpack.c.b16 %v3052, %v3050
    %v3079 = vpack.c.b16 %v3053, %v3051
    %v3080 = vpack.c.b16 %v3056, %v3054
    %v3081 = vpack.c.b16 %v3057, %v3055
    %v3082 = vpack.c.b16 %v3060, %v3058
    %v3083 = vpack.c.b16 %v3061, %v3059
    %v3084 = vpack.c.b16 %v3064, %v3062
    %v3085 = vpack.c.b16 %v3065, %v3063
    %v3086 = vpack.c.b16 %v3068, %v3066
    %v3087 = vpack.c.b16 %v3069, %v3067
    %v3088 = vpack.c.b16 %v3072, %v3070
    %v3089 = vpack.c.b16 %v3073, %v3071
    %3106 = vmatpush.bf16.msra.mxu0 %v3088
    %3107 = vmatpush.bf16.msra.mxu0 %v3086
    %3108 = vmatpush.bf16.msra.mxu0 %v3084
    %3109 = vmatpush.bf16.msra.mxu0 %v3082
    %3110 = vmatpush.bf16.msra.mxu0 %v3080
    %3111 = vmatpush.bf16.msra.mxu0 %v3078
    %3112 = vmatpush.bf16.msra.mxu0 %v3076
    %3113 = vmatpush.bf16.msra.mxu0 %v3074
    %3114 = vmatmul.bf16.gmra.mxu0 %v3000
    %v3115 = vpop.f32.mrf.mxu0
    %v3116 = vadd.f32 %v3022, %v3115
    %v3117 = vpop.f32.mrf.mxu0
    %v3118 = vadd.f32 %v3022, %v3117
    %3119 = vmatmul.bf16.gmra.mxu0 %v3001
    %v3120 = vpop.f32.mrf.mxu0
    %v3121 = vadd.f32 %v3022, %v3120
    %v3122 = vpop.f32.mrf.mxu0
    %v3123 = vadd.f32 %v3022, %v3122
    %3124 = vdwg.mxu0
    %3125 = vmatpush.bf16.msra.mxu0 %v3089
    %3126 = vmatpush.bf16.msra.mxu0 %v3087
    %3127 = vmatpush.bf16.msra.mxu0 %v3085
    %3128 = vmatpush.bf16.msra.mxu0 %v3083
    %3129 = vmatpush.bf16.msra.mxu0 %v3081
    %3130 = vmatpush.bf16.msra.mxu0 %v3079
    %3131 = vmatpush.bf16.msra.mxu0 %v3077
    %3132 = vmatpush.bf16.msra.mxu0 %v3075
    %3133 = vmatmul.bf16.gmra.mxu0 %v3000
    %v3134 = vpop.f32.mrf.mxu0
    %v3135 = vadd.f32 %v3023, %v3134
    %v3136 = vpop.f32.mrf.mxu0
    %v3137 = vadd.f32 %v3023, %v3136
    %3138 = vmatmul.bf16.gmra.mxu0 %v3001
    %v3139 = vpop.f32.mrf.mxu0
    %v3140 = vadd.f32 %v3023, %v3139
    %v3141 = vpop.f32.mrf.mxu0
    %v3142 = vadd.f32 %v3023, %v3141
    %3143 = vdwg.mxu0
    %v3144 = vmul.f32 %v3116, %v3116
    %v3145 = vmul.f32 %v3135, %v3135
    %v3146 = vmul.f32 %v3118, %v3118
    %v3147 = vmul.f32 %v3137, %v3137
    %v3148 = vmul.f32 %v3121, %v3121
    %v3149 = vmul.f32 %v3140, %v3140
    %v3150 = vmul.f32 %v3123, %v3123
    %v3151 = vmul.f32 %v3142, %v3142
    %v3152 = vmul.f32 %v3116, %v3144
    %v3153 = vmul.f32 %v3135, %v3145
    %v3154 = vmul.f32 %v3118, %v3146
    %v3155 = vmul.f32 %v3137, %v3147
    %v3156 = vmul.f32 %v3121, %v3148
    %v3157 = vmul.f32 %v3140, %v3149
    %v3158 = vmul.f32 %v3123, %v3150
    %v3159 = vmul.f32 %v3142, %v3151
    %v3160 = vmul.f32 %v3152, 0.044715
    %v3161 = vmul.f32 %v3153, 0.044715
    %v3162 = vmul.f32 %v3154, 0.044715
    %v3163 = vmul.f32 %v3155, 0.044715
    %v3164 = vmul.f32 %v3156, 0.044715
    %v3165 = vmul.f32 %v3157, 0.044715
    %v3166 = vmul.f32 %v3158, 0.044715
    %v3167 = vmul.f32 %v3159, 0.044715
    %v3168 = vadd.f32 %v3116, %v3160
    %v3169 = vadd.f32 %v3135, %v3161
    %v3170 = vadd.f32 %v3118, %v3162
    %v3171 = vadd.f32 %v3137, %v3163
    %v3172 = vadd.f32 %v3121, %v3164
    %v3173 = vadd.f32 %v3140, %v3165
    %v3174 = vadd.f32 %v3123, %v3166
    %v3175 = vadd.f32 %v3142, %v3167
    %v3176 = vmul.f32 %v3168, 0.7978846
    %v3177 = vmul.f32 %v3169, 0.7978846
    %v3178 = vmul.f32 %v3170, 0.7978846
    %v3179 = vmul.f32 %v3171, 0.7978846
    %v3180 = vmul.f32 %v3172, 0.7978846
    %v3181 = vmul.f32 %v3173, 0.7978846
    %v3182 = vmul.f32 %v3174, 0.7978846
    %v3183 = vmul.f32 %v3175, 0.7978846
    %v3184 = vtanh.pop %v3176
    %v3185 = vtanh.pop %v3177
    %v3186 = vtanh.pop %v3178
    %v3187 = vtanh.pop %v3179
    %v3188 = vtanh.pop %v3180
    %v3189 = vtanh.pop %v3181
    %v3190 = vtanh.pop %v3182
    %v3191 = vtanh.pop %v3183
    %v3192 = vadd.f32 %v3184, 1.0
    %v3193 = vadd.f32 %v3185, 1.0
    %v3194 = vadd.f32 %v3186, 1.0
    %v3195 = vadd.f32 %v3187, 1.0
    %v3196 = vadd.f32 %v3188, 1.0
    %v3197 = vadd.f32 %v3189, 1.0
    %v3198 = vadd.f32 %v3190, 1.0
    %v3199 = vadd.f32 %v3191, 1.0
    %v3200 = vmul.f32 %v3192, 0.5
    %v3201 = vmul.f32 %v3193, 0.5
    %v3202 = vmul.f32 %v3194, 0.5
    %v3203 = vmul.f32 %v3195, 0.5
    %v3204 = vmul.f32 %v3196, 0.5
    %v3205 = vmul.f32 %v3197, 0.5
    %v3206 = vmul.f32 %v3198, 0.5
    %v3207 = vmul.f32 %v3199, 0.5
    %v3208 = vmul.f32 %v3116, %v3200
    %v3209 = vmul.f32 %v3135, %v3201
    %v3210 = vmul.f32 %v3118, %v3202
    %v3211 = vmul.f32 %v3137, %v3203
    %v3212 = vmul.f32 %v3121, %v3204
    %v3213 = vmul.f32 %v3140, %v3205
    %v3214 = vmul.f32 %v3123, %v3206
    %v3215 = vmul.f32 %v3142, %v3207
    %v3216 = vpack.c.bf16 %v3210, %v3208
    %v3217 = vpack.c.bf16 %v3211, %v3209
    %v3218 = vpack.c.bf16 %v3214, %v3212
    %v3219 = vpack.c.bf16 %v3215, %v3213
    %s3220 = scalar_lea.vmem [#allocation23], 128
    %v3221 = vld [vmem:[%s3220] sm:$0xf]
    %v3222 = vld [vmem:[%s3220 + $0x4] sm:$0xf]
    %v3223 = vld [vmem:[%s3220 + $0x8] sm:$0xf]
    %v3224 = vld [vmem:[%s3220 + $0xc] sm:$0xf]
    %v3225 = vld [vmem:[%s3220 + $0x10] sm:$0xf]
    %v3226 = vld [vmem:[%s3220 + $0x14] sm:$0xf]
    %v3227 = vld [vmem:[%s3220 + $0x18] sm:$0xf]
    %v3228 = vld [vmem:[%s3220 + $0x1c] sm:$0xf]
    %v3229 = vld [vmem:[%s3220 + $0x20] sm:$0xf]
    %v3230 = vld [vmem:[%s3220 + $0x24] sm:$0xf]
    %v3231 = vld [vmem:[%s3220 + $0x28] sm:$0xf]
    %v3232 = vld [vmem:[%s3220 + $0x2c] sm:$0xf]
    %v3233 = vld [vmem:[%s3220 + $0x30] sm:$0xf]
    %v3234 = vld [vmem:[%s3220 + $0x34] sm:$0xf]
    %v3235 = vld [vmem:[%s3220 + $0x38] sm:$0xf]
    %v3236 = vld [vmem:[%s3220 + $0x3c] sm:$0xf]
    %v3237 = vld [vmem:[%s3220 + $0x40] sm:$0xf]
    %v3238 = vld [vmem:[%s3220 + $0x44] sm:$0xf]
    %v3239 = vld [vmem:[%s3220 + $0x48] sm:$0xf]
    %v3240 = vld [vmem:[%s3220 + $0x4c] sm:$0xf]
    %v3241 = vld [vmem:[%s3220 + $0x50] sm:$0xf]
    %v3242 = vld [vmem:[%s3220 + $0x54] sm:$0xf]
    %v3243 = vld [vmem:[%s3220 + $0x58] sm:$0xf]
    %v3244 = vld [vmem:[%s3220 + $0x5c] sm:$0xf]
    %v3245 = vld [vmem:[%s3220 + $0x60] sm:$0xf]
    %v3246 = vld [vmem:[%s3220 + $0x64] sm:$0xf]
    %v3247 = vld [vmem:[%s3220 + $0x68] sm:$0xf]
    %v3248 = vld [vmem:[%s3220 + $0x6c] sm:$0xf]
    %v3249 = vld [vmem:[%s3220 + $0x70] sm:$0xf]
    %v3250 = vld [vmem:[%s3220 + $0x74] sm:$0xf]
    %v3251 = vld [vmem:[%s3220 + $0x78] sm:$0xf]
    %v3252 = vld [vmem:[%s3220 + $0x7c] sm:$0xf]
    %s3253 = scalar_lea.vmem [#allocation24], 1
    %v3254 = vld [vmem:[%s3253] sm:$0x1]
    %v3256 = vperm.slane %v3254, 0
    %v3290 = vunpack.c.l.b16 %v3221
    %v3291 = vunpack.c.l.b16 %v3222
    %v3292 = vunpack.c.l.b16 %v3223
    %v3293 = vunpack.c.l.b16 %v3224
    %v3294 = vunpack.c.l.b16 %v3225
    %v3295 = vunpack.c.l.b16 %v3226
    %v3296 = vunpack.c.l.b16 %v3227
    %v3297 = vunpack.c.l.b16 %v3228
    %v3298 = vunpack.c.l.b16 %v3229
    %v3299 = vunpack.c.l.b16 %v3230
    %v3300 = vunpack.c.l.b16 %v3231
    %v3301 = vunpack.c.l.b16 %v3232
    %v3302 = vunpack.c.l.b16 %v3233
    %v3303 = vunpack.c.l.b16 %v3234
    %v3304 = vunpack.c.l.b16 %v3235
    %v3305 = vunpack.c.l.b16 %v3236
    %v3306 = vunpack.c.l.b16 %v3237
    %v3307 = vunpack.c.l.b16 %v3238
    %v3308 = vunpack.c.l.b16 %v3239
    %v3309 = vunpack.c.l.b16 %v3240
    %v3310 = vunpack.c.l.b16 %v3241
    %v3311 = vunpack.c.l.b16 %v3242
    %v3312 = vunpack.c.l.b16 %v3243
    %v3313 = vunpack.c.l.b16 %v3244
    %v3314 = vunpack.c.l.b16 %v3245
    %v3315 = vunpack.c.l.b16 %v3246
    %v3316 = vunpack.c.l.b16 %v3247
    %v3317 = vunpack.c.l.b16 %v3248
    %v3318 = vunpack.c.l.b16 %v3249
    %v3319 = vunpack.c.l.b16 %v3250
    %v3320 = vunpack.c.l.b16 %v3251
    %v3321 = vunpack.c.l.b16 %v3252
    %v3322 = vpack.c.b16 %v3291, %v3290
    %v3323 = vpack.c.b16 %v3293, %v3292
    %v3324 = vpack.c.b16 %v3295, %v3294
    %v3325 = vpack.c.b16 %v3297, %v3296
    %v3326 = vpack.c.b16 %v3299, %v3298
    %v3327 = vpack.c.b16 %v3301, %v3300
    %v3328 = vpack.c.b16 %v3303, %v3302
    %v3329 = vpack.c.b16 %v3305, %v3304
    %v3330 = vpack.c.b16 %v3307, %v3306
    %v3331 = vpack.c.b16 %v3309, %v3308
    %v3332 = vpack.c.b16 %v3311, %v3310
    %v3333 = vpack.c.b16 %v3313, %v3312
    %v3334 = vpack.c.b16 %v3315, %v3314
    %v3335 = vpack.c.b16 %v3317, %v3316
    %v3336 = vpack.c.b16 %v3319, %v3318
    %v3337 = vpack.c.b16 %v3321, %v3320
    %3354 = vmatpush.bf16.msra.mxu0 %v3329
    %3355 = vmatpush.bf16.msra.mxu0 %v3328
    %3356 = vmatpush.bf16.msra.mxu0 %v3327
    %3357 = vmatpush.bf16.msra.mxu0 %v3326
    %3358 = vmatpush.bf16.msra.mxu0 %v3325
    %3359 = vmatpush.bf16.msra.mxu0 %v3324
    %3360 = vmatpush.bf16.msra.mxu0 %v3323
    %3361 = vmatpush.bf16.msra.mxu0 %v3322
    %3362 = vmatmul.bf16.gmra.mxu0 %v3216
    %v3363 = vpop.f32.mrf.mxu0
    %v3364 = vadd.f32 %v3256, %v3363
    %v3365 = vpop.f32.mrf.mxu0
    %3366 = vmatmul.bf16.gmra.mxu0 %v3218
    %v3367 = vpop.f32.mrf.mxu0
    %v3368 = vadd.f32 %v3256, %v3367
    %v3369 = vpop.f32.mrf.mxu0
    %3370 = vdwg.mxu0
    %3371 = vmatpush.bf16.msra.mxu0 %v3337
    %3372 = vmatpush.bf16.msra.mxu0 %v3336
    %3373 = vmatpush.bf16.msra.mxu0 %v3335
    %3374 = vmatpush.bf16.msra.mxu0 %v3334
    %3375 = vmatpush.bf16.msra.mxu0 %v3333
    %3376 = vmatpush.bf16.msra.mxu0 %v3332
    %3377 = vmatpush.bf16.msra.mxu0 %v3331
    %3378 = vmatpush.bf16.msra.mxu0 %v3330
    %3379 = vmatmul.bf16.gmra.mxu0 %v3217
    %v3380 = vpop.f32.mrf.mxu0
    %v3381 = vadd.f32 %v3364, %v3380
    %v3382 = vpop.f32.mrf.mxu0
    %3383 = vmatmul.bf16.gmra.mxu0 %v3219
    %v3384 = vpop.f32.mrf.mxu0
    %v3385 = vadd.f32 %v3368, %v3384
    %v3386 = vpop.f32.mrf.mxu0
    %3387 = vdwg.mxu0
    %v3388 = vadd.f32 %v3381, %v2996
    %v3389 = vadd.f32 %v3385, %v2998
    %s3390 = scalar_lea.vmem %s18, 1
    %v3391 = vld [vmem:[%s3390] sm:$0x1]
    %s3392 = scalar_lea.vmem [#allocation27], 1
    %v3393 = vld [vmem:[%s3392] sm:$0x1]
    %3394 = vadd.xlane.f32.xlu0 %v3388
    %v3395 = vpop.xlane.xlu0 %3394
    %3396 = vadd.xlane.f32.xlu0 %v3389
    %v3397 = vpop.xlane.xlu0 %3396
    %v3398 = vmul.f32 %v3395, %v705
    %v3399 = vmul.f32 %v3397, %v705
    %v3400 = vsub.f32 %v3388, %v3398
    %v3401 = vsub.f32 %v3389, %v3399
    %v3402 = vmul.f32 %v3400, %v3400
    %v3403 = vmul.f32 %v3401, %v3401
    %3404 = vadd.xlane.f32.xlu0 %v3402
    %v3405 = vpop.xlane.xlu0 %3404
    %3406 = vadd.xlane.f32.xlu0 %v3403
    %v3407 = vpop.xlane.xlu0 %3406
    %v3408 = vmul.f32 %v3405, %v705
    %v3409 = vmul.f32 %v3407, %v705
    %v3410 = vadd.f32 %v3408, 1e-12
    %v3411 = vadd.f32 %v3409, 1e-12
    %v3412 = vrsqrt.pop %v3410
    %v3413 = vmul.f32 %v3412, %v3410
    %v3414 = vmul.f32 %v3413, %v3412
    %v3415 = vmul.f32 0.5, %v3414
    %v3416 = vsub.f32 1.5, %v3415
    %v3417 = vmul.f32 %v3412, %v3416
    %vm3418 = vweird.f32 %v3410
    %vm3419 = vweird.f32 %v3412
    %vm3420 = vmor %vm3418, %vm3419
    %v3421 = vsel %vm3420, %v3412, %v3417
    %v3422 = vrsqrt.pop %v3411
    %v3423 = vmul.f32 %v3422, %v3411
    %v3424 = vmul.f32 %v3423, %v3422
    %v3425 = vmul.f32 0.5, %v3424
    %v3426 = vsub.f32 1.5, %v3425
    %v3427 = vmul.f32 %v3422, %v3426
    %vm3428 = vweird.f32 %v3411
    %vm3429 = vweird.f32 %v3422
    %vm3430 = vmor %vm3428, %vm3429
    %v3431 = vsel %vm3430, %v3422, %v3427
    %v3432 = vmul.f32 %v3400, %v3421
    %v3433 = vmul.f32 %v3401, %v3431
    %v3435 = vperm.slane %v3391, 0
    %v3437 = vmul.f32 %v3432, %v3435
    %v3438 = vmul.f32 %v3433, %v3435
    %v3440 = vperm.slane %v3393, 0
    %v3442 = vadd.f32 %v3437, %v3440
    %v3443 = vadd.f32 %v3438, %v3440
    %v3445 = vrot.slane %v3443, 7
    %vm3447 = vcmask 1040384
    %v3448 = vsel %vm3447, %v3442, %v3445
    %v3449 = vpack.c.bf16 %v3448, %v3448
    %v3450 = vld [vmem:[%s20] sm:$0xf]
    %v3451 = vld [vmem:[%s20 + $0x4] sm:$0xf]
    %v3452 = vld [vmem:[%s20 + $0x8] sm:$0xf]
    %v3453 = vld [vmem:[%s20 + $0xc] sm:$0xf]
    %v3454 = vld [vmem:[%s20 + $0x10] sm:$0xf]
    %v3455 = vld [vmem:[%s20 + $0x14] sm:$0xf]
    %v3456 = vld [vmem:[%s20 + $0x18] sm:$0xf]
    %v3457 = vld [vmem:[%s20 + $0x1c] sm:$0xf]
    %v3458 = vld [vmem:[%s20 + $0x20] sm:$0xf]
    %v3459 = vld [vmem:[%s20 + $0x24] sm:$0xf]
    %v3460 = vld [vmem:[%s20 + $0x28] sm:$0xf]
    %v3461 = vld [vmem:[%s20 + $0x2c] sm:$0xf]
    %v3462 = vld [vmem:[%s20 + $0x30] sm:$0xf]
    %v3463 = vld [vmem:[%s20 + $0x34] sm:$0xf]
    %v3464 = vld [vmem:[%s20 + $0x38] sm:$0xf]
    %v3465 = vld [vmem:[%s20 + $0x3c] sm:$0xf]
    %v3466 = vld [vmem:[#allocation29] sm:$0x1]
    %v3468 = vperm.slane %v3466, 0
    %v3486 = vunpack.c.l.b16 %v3450
    %v3487 = vunpack.c.l.b16 %v3451
    %v3488 = vunpack.c.l.b16 %v3452
    %v3489 = vunpack.c.l.b16 %v3453
    %v3490 = vunpack.c.l.b16 %v3454
    %v3491 = vunpack.c.l.b16 %v3455
    %v3492 = vunpack.c.l.b16 %v3456
    %v3493 = vunpack.c.l.b16 %v3457
    %v3494 = vunpack.c.l.b16 %v3458
    %v3495 = vunpack.c.l.b16 %v3459
    %v3496 = vunpack.c.l.b16 %v3460
    %v3497 = vunpack.c.l.b16 %v3461
    %v3498 = vunpack.c.l.b16 %v3462
    %v3499 = vunpack.c.l.b16 %v3463
    %v3500 = vunpack.c.l.b16 %v3464
    %v3501 = vunpack.c.l.b16 %v3465
    %v3502 = vpack.c.b16 %v3487, %v3486
    %v3503 = vpack.c.b16 %v3489, %v3488
    %v3504 = vpack.c.b16 %v3491, %v3490
    %v3505 = vpack.c.b16 %v3493, %v3492
    %v3506 = vpack.c.b16 %v3495, %v3494
    %v3507 = vpack.c.b16 %v3497, %v3496
    %v3508 = vpack.c.b16 %v3499, %v3498
    %v3509 = vpack.c.b16 %v3501, %v3500
    %3518 = vmatpush.bf16.msra.mxu0 %v3509
    %3519 = vmatpush.bf16.msra.mxu0 %v3508
    %3520 = vmatpush.bf16.msra.mxu0 %v3507
    %3521 = vmatpush.bf16.msra.mxu0 %v3506
    %3522 = vmatpush.bf16.msra.mxu0 %v3505
    %3523 = vmatpush.bf16.msra.mxu0 %v3504
    %3524 = vmatpush.bf16.msra.mxu0 %v3503
    %3525 = vmatpush.bf16.msra.mxu0 %v3502
    %3526 = vmatmul.bf16.gmra.mxu0 %v3449
    %v3527 = vpop.f32.mrf.mxu0
    %v3528 = vadd.f32 %v3468, %v3527
    %v3529 = vpop.f32.mrf.mxu0
    %3530 = vdwg.mxu0
    %v3531 = vtanh.pop %v3528
    %v3532 = vpack.c.bf16 %v3531, %v3531
    %v3533 = vld [vmem:[%s22] sm:$0xf]
    %v3534 = vld [vmem:[%s22 + $0x4] sm:$0xf]
    %v3535 = vld [vmem:[%s22 + $0x8] sm:$0xf]
    %v3536 = vld [vmem:[%s22 + $0xc] sm:$0xf]
    %v3537 = vld [vmem:[%s22 + $0x10] sm:$0xf]
    %v3538 = vld [vmem:[%s22 + $0x14] sm:$0xf]
    %v3539 = vld [vmem:[%s22 + $0x18] sm:$0xf]
    %v3540 = vld [vmem:[%s22 + $0x1c] sm:$0xf]
    %v3541 = vld [vmem:[%s22 + $0x20] sm:$0xf]
    %v3542 = vld [vmem:[%s22 + $0x24] sm:$0xf]
    %v3543 = vld [vmem:[%s22 + $0x28] sm:$0xf]
    %v3544 = vld [vmem:[%s22 + $0x2c] sm:$0xf]
    %v3545 = vld [vmem:[%s22 + $0x30] sm:$0xf]
    %v3546 = vld [vmem:[%s22 + $0x34] sm:$0xf]
    %v3547 = vld [vmem:[%s22 + $0x38] sm:$0xf]
    %v3548 = vld [vmem:[%s22 + $0x3c] sm:$0xf]
    %v3549 = vld [vmem:[#allocation6] sm:$0x1]
    %v3551 = vperm.slane %v3549, 0
    %v3569 = vunpack.c.l.b16 %v3533
    %v3570 = vunpack.c.l.b16 %v3534
    %v3571 = vunpack.c.l.b16 %v3535
    %v3572 = vunpack.c.l.b16 %v3536
    %v3573 = vunpack.c.l.b16 %v3537
    %v3574 = vunpack.c.l.b16 %v3538
    %v3575 = vunpack.c.l.b16 %v3539
    %v3576 = vunpack.c.l.b16 %v3540
    %v3577 = vunpack.c.l.b16 %v3541
    %v3578 = vunpack.c.l.b16 %v3542
    %v3579 = vunpack.c.l.b16 %v3543
    %v3580 = vunpack.c.l.b16 %v3544
    %v3581 = vunpack.c.l.b16 %v3545
    %v3582 = vunpack.c.l.b16 %v3546
    %v3583 = vunpack.c.l.b16 %v3547
    %v3584 = vunpack.c.l.b16 %v3548
    %v3585 = vpack.c.b16 %v3570, %v3569
    %v3586 = vpack.c.b16 %v3572, %v3571
    %v3587 = vpack.c.b16 %v3574, %v3573
    %v3588 = vpack.c.b16 %v3576, %v3575
    %v3589 = vpack.c.b16 %v3578, %v3577
    %v3590 = vpack.c.b16 %v3580, %v3579
    %v3591 = vpack.c.b16 %v3582, %v3581
    %v3592 = vpack.c.b16 %v3584, %v3583
    %3601 = vmatpush.bf16.msra.mxu0 %v3592
    %3602 = vmatpush.bf16.msra.mxu0 %v3591
    %3603 = vmatpush.bf16.msra.mxu0 %v3590
    %3604 = vmatpush.bf16.msra.mxu0 %v3589
    %3605 = vmatpush.bf16.msra.mxu0 %v3588
    %3606 = vmatpush.bf16.msra.mxu0 %v3587
    %3607 = vmatpush.bf16.msra.mxu0 %v3586
    %3608 = vmatpush.bf16.msra.mxu0 %v3585
    %3609 = vmatmul.bf16.gmra.mxu0 %v3532
    %v3610 = vpop.f32.mrf.mxu0
    %v3611 = vadd.f32 %v3551, %v3610
    %v3612 = vpop.f32.mrf.mxu0
    %3613 = vdwg.mxu0
    %v3614 = vxor.u32 %v3611, 2147483648
    %v3615 = vmul.f32 %v3614, 1.442695
    %v3616 = vpow.pop %v3615
    %v3617 = vadd.f32 %v3616, 1.0
    %v3618 = vrcp.pop %v3617
    %v3619 = vmul.f32 %v3617, %v3618
    %v3620 = vsub.f32 1.0, %v3619
    %v3621 = vmul.f32 %v3618, %v3620
    %v3622 = vadd.f32 %v3618, %v3621
    %vm3623 = vweird.f32 %v3617
    %vm3624 = vweird.f32 %v3618
    %vm3625 = vmor %vm3623, %vm3624
    %v3626 = vsel %vm3625, %v3618, %v3622
    %v3627 = vand.u32 2147483647, %v3617
    %vm3628 = vcmp.eq.f32.partialorder %v3627, 8.507059e+37
    %v3629 = vand.u32 %v3617, 2147483648
    %v3630 = vor.u32 1.1754944e-38, %v3629
    %v3631 = vsel %vm3628, %v3630, %v3626
    %v3632 = vmul.f32 1.0, %v3631
    %vm3633 = vcmask 1024
    %3634 = vst.msk [vmem:[%s24] sm:$0x3] %vm3633, %v3632
    // Predicated region
    $region150: #{sentiment_cla_forward.1} parent=1 // pred_check
      _
    $region151: #{sentiment_cla_forward.1} parent=1 // pred_check_branch
      %3636 = sbr.rel (0) target = $region153
    $region152: #{sentiment_cla_forward.1} parent=1 // pred_region
      _
    $region153: #{sentiment_cla_forward.1} parent=1 // pred_fallthru
      _
    // Predicated region
    $region154: #{sentiment_cla_forward.1} parent=1 // pred_check
      _
    $region155: #{sentiment_cla_forward.1} parent=1 // pred_check_branch
      %3638 = sbr.rel (0) target = $region157
    $region156: #{sentiment_cla_forward.1} parent=1 // pred_region
      _
    $region157: #{sentiment_cla_forward.1} parent=1 // pred_fallthru
      _
    %3639 = vsyncpa [#allocation8], 1
    %3640 = vsyncpa [#allocation10], 1
    %3641 = vsyncpa [#allocation13], 1
    %3642 = vsyncpa [#allocation16], 1
    %3643 = vsyncpa [#allocation19], 1
    %3644 = vsyncpa [#allocation22], 1
    %3645 = vsyncpa [#allocation25], 1
    %3646 = vsyncpa [#allocation28], 1

</llo_original>
